<compile_context>
chip_gen: v6e
topology: v6e:2x2x1
jax: 0.10.0
libtpu: 0.0.40
codegen_flags: <defaults>
</compile_context>

<pallas_src>
import functools

import numpy as np
import jax
import jax.numpy as jnp
from jax import lax
from jax.experimental import pallas as pl
from jax.experimental.pallas import tpu as pltpu


# ----------------------------------------------------------------------------
# Exact Transformer-XL rel-shift of a (cs, total) score block, fully in VMEM.
# ----------------------------------------------------------------------------
def _rel_shift(praw, cs, total, use_roll):
    """torch: pad a zero column, flatten, drop the first `cs` scalars, reshape back.

    Equivalent: left-rotate row i of an *extended* row
        [0, praw[i, :], 0, praw[i+1, :cs-2], 0-pad]
    by (cs - i).  The extended width is padded to a multiple of 128 lanes and is
    >= total + cs, so no rotation ever wraps -> exact for masked AND unmasked use.
    """
    f32 = jnp.float32
    praw = praw.astype(f32)
    nxt_w = max(cs - 2, 0)
    cur = 1 + total + 1 + nxt_w
    W = ((cur + 127) // 128) * 128                       # lane-aligned rotate width

    parts = [jnp.zeros((cs, 1), f32), praw, jnp.zeros((cs, 1), f32)]
    if nxt_w > 0:
        # wrap-around values come from the NEXT query row of the zero-padded matrix
        nxt = jnp.concatenate([praw[1:, :nxt_w], jnp.zeros((1, nxt_w), f32)], axis=0)
        parts.append(nxt)
    if W > cur:
        parts.append(jnp.zeros((cs, W - cur), f32))
    ext = jnp.concatenate(parts, axis=-1)                # (cs, W)

    if use_roll:
        # np.roll semantics, per-row shift = (W - cs) + i  ==  -(cs - i) (mod W):
        # a single strided XLU rotate does all rows at once.
        shifted = pltpu.roll(ext, W - cs, axis=1, stride=1, stride_axis=0)
    else:
        # Portable fallback: log2(cs) static-rotate + select steps (VPU).
        amount = cs - lax.broadcasted_iota(jnp.int32, (cs, W), 0)   # in [1, cs]
        shifted = ext
        for bit in range(max(1, cs.bit_length())):
            s = 1 << bit
            rolled = jnp.concatenate([shifted[:, s:], shifted[:, :s]], axis=-1)
            shifted = jnp.where((amount & s) != 0, rolled, shifted)

    return shifted[:, :total]


# ----------------------------------------------------------------------------
# Fused kernel: one batch element per grid step, all heads inside.
# ----------------------------------------------------------------------------
def _mha_xl_kernel(cs, ps, H, d, scale, use_roll, exact, has_mask, *refs):
    if has_mask:
        (xc_ref, p_ref, wq_ref, wk_ref, wv_ref, wo_ref,
         u_ref, v_ref, bias_ref, out_ref) = refs
    else:
        (xc_ref, p_ref, wq_ref, wk_ref, wv_ref, wo_ref,
         u_ref, v_ref, out_ref) = refs
        bias_ref = None

    f32 = jnp.float32
    total = cs + ps
    cdt = xc_ref.dtype                      # MXU operand dtype (bf16 prod / f32 checks)

    xc = xc_ref[0]                          # (total, D)  = [memory; input_]
    x = xc[ps:ps + cs, :]                   # (cs, D)     current-sequence rows

    # Full-width projections: K = D contraction, N = H*d lanes (one matmul per tensor).
    q = jnp.dot(x, wq_ref[...], preferred_element_type=f32)      # (cs, Hd)
    k = jnp.dot(xc, wk_ref[...], preferred_element_type=f32)     # (total, Hd)
    vv = jnp.dot(xc, wv_ref[...], preferred_element_type=f32)    # (total, Hd)
    p = p_ref[...]                                               # (total, Hd), precomputed

    # u/v biases broadcast over the head-major lane dim (one VPU add for all heads).
    qu = (q + u_ref[...]).astype(cdt)
    qv = (q + v_ref[...]).astype(cdt)
    k = k.astype(cdt)
    vv = vv.astype(cdt)

    bias = bias_ref[...] if has_mask else None

    dn = (((1,), (1,)), ((), ()))           # contract the per-head feature dim of both
    av_parts = []
    for h in range(H):                      # per-head scores are inherently K=d matmuls
        sl = slice(h * d, (h + 1) * d)

        content = lax.dot_general(qu[:, sl], k[:, sl], dn,
                                  preferred_element_type=f32)        # (cs, total)
        praw = lax.dot_general(qv[:, sl], p[:, sl], dn,
                               preferred_element_type=f32)           # (cs, total)
        pos_attn = _rel_shift(praw, cs, total, use_roll)             # exact XL rel-shift

        logits = content + pos_attn
        if has_mask:
            logits = logits + bias          # -inf bias pre-scale == masked_fill(-inf)
        logits = logits * scale

        m = jnp.max(logits, axis=-1, keepdims=True)
        e = jnp.exp(logits - m)
        l = jnp.sum(e, axis=-1, keepdims=True)
        inv_l = pl.reciprocal(l, approx=not exact)                   # EUP slot in prod
        av = jnp.dot(e.astype(cdt), vv[:, sl],
                     preferred_element_type=f32) * inv_l             # (cs, d)
        av_parts.append(av.astype(cdt))

    av_all = jnp.concatenate(av_parts, axis=-1)                      # (cs, Hd)
    # Single output projection with full K = H*d contraction depth.
    out_ref[0, :, :] = jnp.dot(av_all, wo_ref[...], preferred_element_type=f32)


# ----------------------------------------------------------------------------
# Wrapper: layout / dtype plumbing + single fused pallas_call
# ----------------------------------------------------------------------------
def multi_head_attention_xl(input_, pos_embs, memory, u, v, params, mask=None,
                            compute_dtype=jnp.bfloat16, use_roll=True,
                            vmem_limit_bytes=48 * 1024 * 1024):
    """Pallas forward of MultiHeadAttentionXL (dropout = identity / eval mode).

    params (all column-major, i.e. y = x @ W):
      wq = linear_q.weight.T (D, H*d), wk / wv = the two halves of linear_kv.weight.T,
      wp = linear_p.weight.T (D, H*d), wo = lout.weight.T (H*d, D).
    """
    cs, bs, D = input_.shape
    ps = memory.shape[0]
    total = cs + ps
    H, d = u.shape
    Hd = H * d
    scale = 1.0 / (d ** 0.5)
    cdt = compute_dtype
    exact = jnp.dtype(cdt) == jnp.dtype(jnp.float32)

    wq = params['wq'].astype(cdt)                       # (D, Hd)
    wk = params['wk'].astype(cdt)
    wv = params['wv'].astype(cdt)
    wo = params['wo'].astype(cdt)                       # (Hd, D)

    # [memory; input_] once, batch-major; the kernel slices the current rows out of it
    # (avoids DMA-ing the current sequence twice).
    xc = jnp.transpose(jnp.concatenate([memory, input_], axis=0),
                       (1, 0, 2)).astype(cdt)           # (bs, total, D)

    # Positional projection is batch-invariant -> hoisted out of the kernel.
    p = jnp.einsum('sd,df->sf', pos_embs[:, 0, :].astype(jnp.float32),
                   params['wp'].astype(jnp.float32),
                   precision=lax.Precision.HIGHEST).astype(cdt)      # (total, Hd)

    u_row = u.reshape(1, Hd).astype(jnp.float32)
    v_row = v.reshape(1, Hd).astype(jnp.float32)

    operands = [xc, p, wq, wk, wv, wo, u_row, v_row]
    in_specs = [
        pl.BlockSpec((1, total, D), lambda b: (b, 0, 0)),   # [memory; input_] per batch
        pl.BlockSpec((total, Hd), lambda b: (0, 0)),        # pos projection (resident)
        pl.BlockSpec((D, Hd), lambda b: (0, 0)),            # Wq (resident)
        pl.BlockSpec((D, Hd), lambda b: (0, 0)),            # Wk
        pl.BlockSpec((D, Hd), lambda b: (0, 0)),            # Wv
        pl.BlockSpec((Hd, D), lambda b: (0, 0)),            # Wo
        pl.BlockSpec((1, Hd), lambda b: (0, 0)),            # u (head-major row)
        pl.BlockSpec((1, Hd), lambda b: (0, 0)),            # v (head-major row)
    ]

    has_mask = mask is not None
    if has_mask:
        m2 = mask[..., 0] if mask.ndim == 3 else mask
        # TODO(synk): mask is batch-invariant per the (cs, total, 1) module spec; a
        # per-batch mask would need a (bs, cs, total) bias block here.  For a purely
        # causal mask this bias could instead be generated in-kernel from iota.
        bias = jnp.where(m2, -jnp.inf, 0.0).astype(jnp.float32)      # (cs, total)
        operands.append(bias)
        in_specs.append(pl.BlockSpec((cs, total), lambda b: (0, 0)))

    kernel = functools.partial(_mha_xl_kernel, cs, ps, H, d, scale,
                               use_roll, exact, has_mask)
    out = pl.pallas_call(
        kernel,
        grid=(bs,),
        in_specs=in_specs,
        out_specs=pl.BlockSpec((1, cs, D), lambda b: (b, 0, 0)),
        out_shape=jax.ShapeDtypeStruct((bs, cs, D), jnp.float32),
        compiler_params=pltpu.CompilerParams(
            dimension_semantics=("parallel",),              # batch across TCs (megacore)
            vmem_limit_bytes=vmem_limit_bytes),             # v5e default is only 16 MiB
    )(*operands)

    # TODO(synk): dropa/dropo are identity here (eval mode); torch dropout RNG is not
    # reproducible in Pallas.
    # TODO(synk): for production cs/total add a query-tile grid axis (flash-style) so the
    # (cs, total) score blocks fit v7x's 64 MiB VMEM and both TCs get work at bs == 1.
    # TODO(synk): pad D to a multiple of 128 (and emit bf16) for lane-dense stores; the
    # tiny D=32 test below hits masked partial stores on the output.
    return jnp.transpose(out, (1, 0, 2))                    # (cs, bs, D)


# ----------------------------------------------------------------------------
# Pure-JAX reference mirroring the PyTorch forward (for validation)
# ----------------------------------------------------------------------------
def reference_forward(input_, pos_embs, memory, u, v, params, mask=None):
    cs, bs, D = input_.shape
    ps = memory.shape[0]
    total = cs + ps
    H, d = u.shape
    scale = 1.0 / (d ** 0.5)
    hp = lax.Precision.HIGHEST
    wq, wk, wv, wp, wo = (params['wq'], params['wk'], params['wv'],
                          params['wp'], params['wo'])

    xwm = jnp.concatenate([memory, input_], axis=0)                    # (total, bs, D)
    k = jnp.einsum('sbi,io->sbo', xwm, wk, precision=hp)
    vt = jnp.einsum('sbi,io->sbo', xwm, wv, precision=hp)
    q = jnp.einsum('sbi,io->sbo', input_, wq, precision=hp)
    qh = q.reshape(cs, bs, H, d)
    kh = k.reshape(total, bs, H, d)
    content = jnp.einsum('ibhd,jbhd->ijbh', qh + u, kh, precision=hp)
    p = jnp.einsum('sbi,io->sbo', pos_embs, wp, precision=hp)          # (total, 1, Hd)
    ph = p.reshape(total, H, d)
    posattn = jnp.einsum('ibhd,jhd->ijbh', qh + v, ph, precision=hp)
    # _rel_shift (exact view trick)
    zp = jnp.zeros((cs, 1, bs, H), posattn.dtype)
    padded = jnp.concatenate([zp, posattn], axis=1)                    # (cs, total+1, bs, H)
    posattn = padded.reshape(total + 1, cs, bs, H)[1:].reshape(cs, total, bs, H)
    attn = content + posattn
    if mask is not None:
        attn = jnp.where(mask[..., None], -jnp.inf, attn)
    attn = jax.nn.softmax(attn * scale, axis=1)
    awv = jnp.einsum('ijbh,jbhd->ibhd', attn, vt.reshape(total, bs, H, d),
                     precision=hp).reshape(cs, bs, H * d)
    return jnp.einsum('sbk,ko->sbo', awv, wo, precision=hp)


if __name__ == "__main__":
    key = jax.random.PRNGKey(0)
    cs, ps, bs = 8, 8, 2          # cur_seq, prev_seq, batch
    D, H, d = 32, 4, 8            # d_input, n_heads, d_inner
    total = cs + ps
    Hd = H * d

    keys = jax.random.split(key, 10)
    bound_in = 1.0 / (D ** 0.5)
    bound_out = 1.0 / (Hd ** 0.5)
    params = {
        'wq': jax.random.uniform(keys[0], (D, Hd), jnp.float32, -bound_in, bound_in),
        'wk': jax.random.uniform(keys[1], (D, Hd), jnp.float32, -bound_in, bound_in),
        'wv': jax.random.uniform(keys[2], (D, Hd), jnp.float32, -bound_in, bound_in),
        'wp': jax.random.uniform(keys[3], (D, Hd), jnp.float32, -bound_in, bound_in),
        'wo': jax.random.uniform(keys[4], (Hd, D), jnp.float32, -bound_out, bound_out),
    }
    u = 0.1 * jax.random.normal(keys[5], (H, d), jnp.float32)
    v = 0.1 * jax.random.normal(keys[6], (H, d), jnp.float32)

    input_ = jax.random.normal(keys[7], (cs, bs, D), jnp.float32)
    memory = jax.random.normal(keys[8], (ps, bs, D), jnp.float32)
    pos_embs = jax.random.normal(keys[9], (total, 1, D), jnp.float32)

    # causal Transformer-XL mask: query i cannot attend past key position ps + i
    ii = jnp.arange(cs)[:, None]
    jj = jnp.arange(total)[None, :]
    mask = (jj > (ii + ps))[:, :, None]                                # (cs, total, 1)

    ref_masked = reference_forward(input_, pos_embs, memory, u, v, params, mask=mask)
    ref_unmasked = reference_forward(input_, pos_embs, memory, u, v, params, mask=None)

    def _check_f32(use_roll):
        out_m = jax.block_until_ready(
            multi_head_attention_xl(input_, pos_embs, memory, u, v, params, mask=mask,
                                    compute_dtype=jnp.float32, use_roll=use_roll))
        assert out_m.shape == (cs, bs, D)
        np.testing.assert_allclose(np.asarray(out_m), np.asarray(ref_masked),
                                   rtol=1e-2, atol=5e-3)
        # no-mask run exercises the exact rel-shift wrap-around path
        out_u = jax.block_until_ready(
            multi_head_attention_xl(input_, pos_embs, memory, u, v, params, mask=None,
                                    compute_dtype=jnp.float32, use_roll=use_roll))
        np.testing.assert_allclose(np.asarray(out_u), np.asarray(ref_unmasked),
                                   rtol=1e-2, atol=5e-3)

    # Prefer the strided-XLU-rotate rel-shift; fall back to the portable shift+select
    # path if this jaxlib / chip rejects strided dynamic_rotate.
    use_roll = True
    try:
        _check_f32(use_roll=True)
    except Exception:
        use_roll = False
        _check_f32(use_roll=False)

    # Production path: bf16 MXU operands, approx reciprocal, under jit.
    mha_bf16 = jax.jit(functools.partial(multi_head_attention_xl,
                                         compute_dtype=jnp.bfloat16, use_roll=use_roll))
    out_bf16 = jax.block_until_ready(mha_bf16(input_, pos_embs, memory, u, v, params, mask))
    assert out_bf16.shape == (cs, bs, D)
    np.testing.assert_allclose(np.asarray(out_bf16), np.asarray(ref_masked),
                               rtol=5e-2, atol=5e-2)

    print("KERNEL_OK")
</pallas_src>

<mosaic_0001>
module attributes {stable_mosaic.version = 11 : i64} {
  func.func @_mha_xl_kernel(%arg0: i32, %arg1: memref<1x16x32xf32, #tpu.memory_space<vmem>>, %arg2: memref<16x32xf32, #tpu.memory_space<vmem>>, %arg3: memref<32x32xf32, #tpu.memory_space<vmem>>, %arg4: memref<32x32xf32, #tpu.memory_space<vmem>>, %arg5: memref<32x32xf32, #tpu.memory_space<vmem>>, %arg6: memref<32x32xf32, #tpu.memory_space<vmem>>, %arg7: memref<1x32xf32, #tpu.memory_space<vmem>>, %arg8: memref<1x32xf32, #tpu.memory_space<vmem>>, %arg9: memref<8x16xf32, #tpu.memory_space<vmem>>, %arg10: memref<1x8x32xf32, #tpu.memory_space<vmem>>) attributes {dimension_semantics = [#tpu.dimension_semantics<parallel>], iteration_bounds = array<i64: 2>, scalar_prefetch = 0 : i64, scratch_operands = 0 : i64, tpu.core_type = #tpu.core_type<tc>, window_params = [{transform_indices = @transform_0, window_bounds = array<i64: 1, 16, 32>}, {pipeline_mode = #tpu.pipeline_mode<synchronous>, transform_indices = @transform_1, window_bounds = array<i64: 16, 32>}, {pipeline_mode = #tpu.pipeline_mode<synchronous>, transform_indices = @transform_2, window_bounds = array<i64: 32, 32>}, {pipeline_mode = #tpu.pipeline_mode<synchronous>, transform_indices = @transform_3, window_bounds = array<i64: 32, 32>}, {pipeline_mode = #tpu.pipeline_mode<synchronous>, transform_indices = @transform_4, window_bounds = array<i64: 32, 32>}, {pipeline_mode = #tpu.pipeline_mode<synchronous>, transform_indices = @transform_5, window_bounds = array<i64: 32, 32>}, {pipeline_mode = #tpu.pipeline_mode<synchronous>, transform_indices = @transform_6, window_bounds = array<i64: 1, 32>}, {pipeline_mode = #tpu.pipeline_mode<synchronous>, transform_indices = @transform_7, window_bounds = array<i64: 1, 32>}, {pipeline_mode = #tpu.pipeline_mode<synchronous>, transform_indices = @transform_8, window_bounds = array<i64: 8, 16>}, {transform_indices = @transform_9, window_bounds = array<i64: 1, 8, 32>}]} {
    %c0 = arith.constant 0 : index
    %c0_0 = arith.constant 0 : index
    %c0_1 = arith.constant 0 : index
    %0 = vector.load %arg1[%c0, %c0_0, %c0_1] : memref<1x16x32xf32, #tpu.memory_space<vmem>>, vector<1x16x32xf32>
    %1 = vector.shape_cast %0 : vector<1x16x32xf32> to vector<16x32xf32>
    %2 = vector.extract_strided_slice %1 {offsets = [8, 0], sizes = [8, 32], strides = [1, 1]} : vector<16x32xf32> to vector<8x32xf32>
    %c0_2 = arith.constant 0 : index
    %c0_3 = arith.constant 0 : index
    %3 = vector.load %arg3[%c0_2, %c0_3] : memref<32x32xf32, #tpu.memory_space<vmem>>, vector<32x32xf32>
    %cst = arith.constant dense<0.000000e+00> : vector<8x32xf32>
    %4 = tpu.matmul %2, %3, %cst {dimension_numbers = #tpu.dot_dimension_numbers<[1], [0], [0], [1], [0, 0, 1, 1], [], []>} : vector<8x32xf32>, vector<32x32xf32>, vector<8x32xf32> -> vector<8x32xf32>
    %c0_4 = arith.constant 0 : index
    %c0_5 = arith.constant 0 : index
    %5 = vector.load %arg4[%c0_4, %c0_5] : memref<32x32xf32, #tpu.memory_space<vmem>>, vector<32x32xf32>
    %cst_6 = arith.constant dense<0.000000e+00> : vector<16x32xf32>
    %6 = tpu.matmul %1, %5, %cst_6 {dimension_numbers = #tpu.dot_dimension_numbers<[1], [0], [0], [1], [0, 0, 1, 1], [], []>} : vector<16x32xf32>, vector<32x32xf32>, vector<16x32xf32> -> vector<16x32xf32>
    %c0_7 = arith.constant 0 : index
    %c0_8 = arith.constant 0 : index
    %7 = vector.load %arg5[%c0_7, %c0_8] : memref<32x32xf32, #tpu.memory_space<vmem>>, vector<32x32xf32>
    %cst_9 = arith.constant dense<0.000000e+00> : vector<16x32xf32>
    %8 = tpu.matmul %1, %7, %cst_9 {dimension_numbers = #tpu.dot_dimension_numbers<[1], [0], [0], [1], [0, 0, 1, 1], [], []>} : vector<16x32xf32>, vector<32x32xf32>, vector<16x32xf32> -> vector<16x32xf32>
    %c0_10 = arith.constant 0 : index
    %c0_11 = arith.constant 0 : index
    %9 = vector.load %arg2[%c0_10, %c0_11] : memref<16x32xf32, #tpu.memory_space<vmem>>, vector<16x32xf32>
    %c0_12 = arith.constant 0 : index
    %c0_13 = arith.constant 0 : index
    %10 = vector.load %arg7[%c0_12, %c0_13] : memref<1x32xf32, #tpu.memory_space<vmem>>, vector<1x32xf32>
    %11 = vector.broadcast %10 : vector<1x32xf32> to vector<8x32xf32>
    %12 = arith.addf %4, %11 : vector<8x32xf32>
    %c0_14 = arith.constant 0 : index
    %c0_15 = arith.constant 0 : index
    %13 = vector.load %arg8[%c0_14, %c0_15] : memref<1x32xf32, #tpu.memory_space<vmem>>, vector<1x32xf32>
    %14 = vector.broadcast %13 : vector<1x32xf32> to vector<8x32xf32>
    %15 = arith.addf %4, %14 : vector<8x32xf32>
    %c0_16 = arith.constant 0 : index
    %c0_17 = arith.constant 0 : index
    %16 = vector.load %arg9[%c0_16, %c0_17] : memref<8x16xf32, #tpu.memory_space<vmem>>, vector<8x16xf32>
    %17 = vector.extract_strided_slice %12 {offsets = [0, 0], sizes = [8, 8], strides = [1, 1]} : vector<8x32xf32> to vector<8x8xf32>
    %18 = vector.extract_strided_slice %6 {offsets = [0, 0], sizes = [16, 8], strides = [1, 1]} : vector<16x32xf32> to vector<16x8xf32>
    %cst_18 = arith.constant dense<0.000000e+00> : vector<8x16xf32>
    %19 = tpu.matmul %17, %18, %cst_18 {dimension_numbers = #tpu.dot_dimension_numbers<[1], [1], [0], [0], [0, 0, 1, 0], [], []>} : vector<8x8xf32>, vector<16x8xf32>, vector<8x16xf32> -> vector<8x16xf32>
    %20 = vector.extract_strided_slice %15 {offsets = [0, 0], sizes = [8, 8], strides = [1, 1]} : vector<8x32xf32> to vector<8x8xf32>
    %21 = vector.extract_strided_slice %9 {offsets = [0, 0], sizes = [16, 8], strides = [1, 1]} : vector<16x32xf32> to vector<16x8xf32>
    %cst_19 = arith.constant dense<0.000000e+00> : vector<8x16xf32>
    %22 = tpu.matmul %20, %21, %cst_19 {dimension_numbers = #tpu.dot_dimension_numbers<[1], [1], [0], [0], [0, 0, 1, 0], [], []>} : vector<8x8xf32>, vector<16x8xf32>, vector<8x16xf32> -> vector<8x16xf32>
    %cst_20 = arith.constant 0.000000e+00 : f32
    %23 = vector.broadcast %cst_20 : f32 to vector<8x1xf32>
    %cst_21 = arith.constant 0.000000e+00 : f32
    %24 = vector.broadcast %cst_21 : f32 to vector<8x1xf32>
    %25 = vector.extract_strided_slice %22 {offsets = [1, 0], sizes = [7, 6], strides = [1, 1]} : vector<8x16xf32> to vector<7x6xf32>
    %cst_22 = arith.constant 0.000000e+00 : f32
    %26 = vector.broadcast %cst_22 : f32 to vector<1x6xf32>
    %27 = tpu.concatenate %25, %26 in 0 : vector<7x6xf32>, vector<1x6xf32> -> vector<8x6xf32>
    %cst_23 = arith.constant 0.000000e+00 : f32
    %28 = vector.broadcast %cst_23 : f32 to vector<8x104xf32>
    %29 = tpu.concatenate %23, %22, %24, %27, %28 in 1 : vector<8x1xf32>, vector<8x16xf32>, vector<8x1xf32>, vector<8x6xf32>, vector<8x104xf32> -> vector<8x128xf32>
    %c120_i32 = arith.constant 120 : i32
    %30 = tpu.dynamic_rotate %29 by %c120_i32 dim 1 {stride = 1 : si32, stride_dimension = 0 : si32} : vector<8x128xf32>, i32 -> vector<8x128xf32>
    %31 = vector.extract_strided_slice %30 {offsets = [0, 0], sizes = [8, 16], strides = [1, 1]} : vector<8x128xf32> to vector<8x16xf32>
    %32 = arith.addf %19, %31 : vector<8x16xf32>
    %33 = arith.addf %32, %16 : vector<8x16xf32>
    %cst_24 = arith.constant 0.353553385 : f32
    %34 = vector.broadcast %cst_24 : f32 to vector<8x16xf32>
    %35 = arith.mulf %33, %34 : vector<8x16xf32>
    %cst_25 = arith.constant dense<0xFF800000> : vector<8xf32>
    %36 = vector.multi_reduction <maximumf>, %35, %cst_25 [1] : vector<8x16xf32> to vector<8xf32>
    %37 = vector.shape_cast %36 : vector<8xf32> to vector<8x1xf32>
    %38 = vector.broadcast %37 : vector<8x1xf32> to vector<8x16xf32>
    %39 = arith.subf %35, %38 : vector<8x16xf32>
    %40 = math.exp %39 : vector<8x16xf32>
    %cst_26 = arith.constant dense<0.000000e+00> : vector<8xf32>
    %41 = vector.multi_reduction <add>, %40, %cst_26 [1] : vector<8x16xf32> to vector<8xf32>
    %42 = vector.shape_cast %41 : vector<8xf32> to vector<8x1xf32>
    %43 = tpu.reciprocal %42 : vector<8x1xf32> -> vector<8x1xf32>
    %44 = vector.extract_strided_slice %8 {offsets = [0, 0], sizes = [16, 8], strides = [1, 1]} : vector<16x32xf32> to vector<16x8xf32>
    %cst_27 = arith.constant dense<0.000000e+00> : vector<8x8xf32>
    %45 = tpu.matmul %40, %44, %cst_27 {dimension_numbers = #tpu.dot_dimension_numbers<[1], [0], [0], [1], [0, 0, 1, 1], [], []>} : vector<8x16xf32>, vector<16x8xf32>, vector<8x8xf32> -> vector<8x8xf32>
    %46 = vector.broadcast %43 : vector<8x1xf32> to vector<8x8xf32>
    %47 = arith.mulf %45, %46 : vector<8x8xf32>
    %48 = vector.extract_strided_slice %12 {offsets = [0, 8], sizes = [8, 8], strides = [1, 1]} : vector<8x32xf32> to vector<8x8xf32>
    %49 = vector.extract_strided_slice %6 {offsets = [0, 8], sizes = [16, 8], strides = [1, 1]} : vector<16x32xf32> to vector<16x8xf32>
    %cst_28 = arith.constant dense<0.000000e+00> : vector<8x16xf32>
    %50 = tpu.matmul %48, %49, %cst_28 {dimension_numbers = #tpu.dot_dimension_numbers<[1], [1], [0], [0], [0, 0, 1, 0], [], []>} : vector<8x8xf32>, vector<16x8xf32>, vector<8x16xf32> -> vector<8x16xf32>
    %51 = vector.extract_strided_slice %15 {offsets = [0, 8], sizes = [8, 8], strides = [1, 1]} : vector<8x32xf32> to vector<8x8xf32>
    %52 = vector.extract_strided_slice %9 {offsets = [0, 8], sizes = [16, 8], strides = [1, 1]} : vector<16x32xf32> to vector<16x8xf32>
    %cst_29 = arith.constant dense<0.000000e+00> : vector<8x16xf32>
    %53 = tpu.matmul %51, %52, %cst_29 {dimension_numbers = #tpu.dot_dimension_numbers<[1], [1], [0], [0], [0, 0, 1, 0], [], []>} : vector<8x8xf32>, vector<16x8xf32>, vector<8x16xf32> -> vector<8x16xf32>
    %cst_30 = arith.constant 0.000000e+00 : f32
    %54 = vector.broadcast %cst_30 : f32 to vector<8x1xf32>
    %cst_31 = arith.constant 0.000000e+00 : f32
    %55 = vector.broadcast %cst_31 : f32 to vector<8x1xf32>
    %56 = vector.extract_strided_slice %53 {offsets = [1, 0], sizes = [7, 6], strides = [1, 1]} : vector<8x16xf32> to vector<7x6xf32>
    %cst_32 = arith.constant 0.000000e+00 : f32
    %57 = vector.broadcast %cst_32 : f32 to vector<1x6xf32>
    %58 = tpu.concatenate %56, %57 in 0 : vector<7x6xf32>, vector<1x6xf32> -> vector<8x6xf32>
    %cst_33 = arith.constant 0.000000e+00 : f32
    %59 = vector.broadcast %cst_33 : f32 to vector<8x104xf32>
    %60 = tpu.concatenate %54, %53, %55, %58, %59 in 1 : vector<8x1xf32>, vector<8x16xf32>, vector<8x1xf32>, vector<8x6xf32>, vector<8x104xf32> -> vector<8x128xf32>
    %c120_i32_34 = arith.constant 120 : i32
    %61 = tpu.dynamic_rotate %60 by %c120_i32_34 dim 1 {stride = 1 : si32, stride_dimension = 0 : si32} : vector<8x128xf32>, i32 -> vector<8x128xf32>
    %62 = vector.extract_strided_slice %61 {offsets = [0, 0], sizes = [8, 16], strides = [1, 1]} : vector<8x128xf32> to vector<8x16xf32>
    %63 = arith.addf %50, %62 : vector<8x16xf32>
    %64 = arith.addf %63, %16 : vector<8x16xf32>
    %cst_35 = arith.constant 0.353553385 : f32
    %65 = vector.broadcast %cst_35 : f32 to vector<8x16xf32>
    %66 = arith.mulf %64, %65 : vector<8x16xf32>
    %cst_36 = arith.constant dense<0xFF800000> : vector<8xf32>
    %67 = vector.multi_reduction <maximumf>, %66, %cst_36 [1] : vector<8x16xf32> to vector<8xf32>
    %68 = vector.shape_cast %67 : vector<8xf32> to vector<8x1xf32>
    %69 = vector.broadcast %68 : vector<8x1xf32> to vector<8x16xf32>
    %70 = arith.subf %66, %69 : vector<8x16xf32>
    %71 = math.exp %70 : vector<8x16xf32>
    %cst_37 = arith.constant dense<0.000000e+00> : vector<8xf32>
    %72 = vector.multi_reduction <add>, %71, %cst_37 [1] : vector<8x16xf32> to vector<8xf32>
    %73 = vector.shape_cast %72 : vector<8xf32> to vector<8x1xf32>
    %74 = tpu.reciprocal %73 : vector<8x1xf32> -> vector<8x1xf32>
    %75 = vector.extract_strided_slice %8 {offsets = [0, 8], sizes = [16, 8], strides = [1, 1]} : vector<16x32xf32> to vector<16x8xf32>
    %cst_38 = arith.constant dense<0.000000e+00> : vector<8x8xf32>
    %76 = tpu.matmul %71, %75, %cst_38 {dimension_numbers = #tpu.dot_dimension_numbers<[1], [0], [0], [1], [0, 0, 1, 1], [], []>} : vector<8x16xf32>, vector<16x8xf32>, vector<8x8xf32> -> vector<8x8xf32>
    %77 = vector.broadcast %74 : vector<8x1xf32> to vector<8x8xf32>
    %78 = arith.mulf %76, %77 : vector<8x8xf32>
    %79 = vector.extract_strided_slice %12 {offsets = [0, 16], sizes = [8, 8], strides = [1, 1]} : vector<8x32xf32> to vector<8x8xf32>
    %80 = vector.extract_strided_slice %6 {offsets = [0, 16], sizes = [16, 8], strides = [1, 1]} : vector<16x32xf32> to vector<16x8xf32>
    %cst_39 = arith.constant dense<0.000000e+00> : vector<8x16xf32>
    %81 = tpu.matmul %79, %80, %cst_39 {dimension_numbers = #tpu.dot_dimension_numbers<[1], [1], [0], [0], [0, 0, 1, 0], [], []>} : vector<8x8xf32>, vector<16x8xf32>, vector<8x16xf32> -> vector<8x16xf32>
    %82 = vector.extract_strided_slice %15 {offsets = [0, 16], sizes = [8, 8], strides = [1, 1]} : vector<8x32xf32> to vector<8x8xf32>
    %83 = vector.extract_strided_slice %9 {offsets = [0, 16], sizes = [16, 8], strides = [1, 1]} : vector<16x32xf32> to vector<16x8xf32>
    %cst_40 = arith.constant dense<0.000000e+00> : vector<8x16xf32>
    %84 = tpu.matmul %82, %83, %cst_40 {dimension_numbers = #tpu.dot_dimension_numbers<[1], [1], [0], [0], [0, 0, 1, 0], [], []>} : vector<8x8xf32>, vector<16x8xf32>, vector<8x16xf32> -> vector<8x16xf32>
    %cst_41 = arith.constant 0.000000e+00 : f32
    %85 = vector.broadcast %cst_41 : f32 to vector<8x1xf32>
    %cst_42 = arith.constant 0.000000e+00 : f32
    %86 = vector.broadcast %cst_42 : f32 to vector<8x1xf32>
    %87 = vector.extract_strided_slice %84 {offsets = [1, 0], sizes = [7, 6], strides = [1, 1]} : vector<8x16xf32> to vector<7x6xf32>
    %cst_43 = arith.constant 0.000000e+00 : f32
    %88 = vector.broadcast %cst_43 : f32 to vector<1x6xf32>
    %89 = tpu.concatenate %87, %88 in 0 : vector<7x6xf32>, vector<1x6xf32> -> vector<8x6xf32>
    %cst_44 = arith.constant 0.000000e+00 : f32
    %90 = vector.broadcast %cst_44 : f32 to vector<8x104xf32>
    %91 = tpu.concatenate %85, %84, %86, %89, %90 in 1 : vector<8x1xf32>, vector<8x16xf32>, vector<8x1xf32>, vector<8x6xf32>, vector<8x104xf32> -> vector<8x128xf32>
    %c120_i32_45 = arith.constant 120 : i32
    %92 = tpu.dynamic_rotate %91 by %c120_i32_45 dim 1 {stride = 1 : si32, stride_dimension = 0 : si32} : vector<8x128xf32>, i32 -> vector<8x128xf32>
    %93 = vector.extract_strided_slice %92 {offsets = [0, 0], sizes = [8, 16], strides = [1, 1]} : vector<8x128xf32> to vector<8x16xf32>
    %94 = arith.addf %81, %93 : vector<8x16xf32>
    %95 = arith.addf %94, %16 : vector<8x16xf32>
    %cst_46 = arith.constant 0.353553385 : f32
    %96 = vector.broadcast %cst_46 : f32 to vector<8x16xf32>
    %97 = arith.mulf %95, %96 : vector<8x16xf32>
    %cst_47 = arith.constant dense<0xFF800000> : vector<8xf32>
    %98 = vector.multi_reduction <maximumf>, %97, %cst_47 [1] : vector<8x16xf32> to vector<8xf32>
    %99 = vector.shape_cast %98 : vector<8xf32> to vector<8x1xf32>
    %100 = vector.broadcast %99 : vector<8x1xf32> to vector<8x16xf32>
    %101 = arith.subf %97, %100 : vector<8x16xf32>
    %102 = math.exp %101 : vector<8x16xf32>
    %cst_48 = arith.constant dense<0.000000e+00> : vector<8xf32>
    %103 = vector.multi_reduction <add>, %102, %cst_48 [1] : vector<8x16xf32> to vector<8xf32>
    %104 = vector.shape_cast %103 : vector<8xf32> to vector<8x1xf32>
    %105 = tpu.reciprocal %104 : vector<8x1xf32> -> vector<8x1xf32>
    %106 = vector.extract_strided_slice %8 {offsets = [0, 16], sizes = [16, 8], strides = [1, 1]} : vector<16x32xf32> to vector<16x8xf32>
    %cst_49 = arith.constant dense<0.000000e+00> : vector<8x8xf32>
    %107 = tpu.matmul %102, %106, %cst_49 {dimension_numbers = #tpu.dot_dimension_numbers<[1], [0], [0], [1], [0, 0, 1, 1], [], []>} : vector<8x16xf32>, vector<16x8xf32>, vector<8x8xf32> -> vector<8x8xf32>
    %108 = vector.broadcast %105 : vector<8x1xf32> to vector<8x8xf32>
    %109 = arith.mulf %107, %108 : vector<8x8xf32>
    %110 = vector.extract_strided_slice %12 {offsets = [0, 24], sizes = [8, 8], strides = [1, 1]} : vector<8x32xf32> to vector<8x8xf32>
    %111 = vector.extract_strided_slice %6 {offsets = [0, 24], sizes = [16, 8], strides = [1, 1]} : vector<16x32xf32> to vector<16x8xf32>
    %cst_50 = arith.constant dense<0.000000e+00> : vector<8x16xf32>
    %112 = tpu.matmul %110, %111, %cst_50 {dimension_numbers = #tpu.dot_dimension_numbers<[1], [1], [0], [0], [0, 0, 1, 0], [], []>} : vector<8x8xf32>, vector<16x8xf32>, vector<8x16xf32> -> vector<8x16xf32>
    %113 = vector.extract_strided_slice %15 {offsets = [0, 24], sizes = [8, 8], strides = [1, 1]} : vector<8x32xf32> to vector<8x8xf32>
    %114 = vector.extract_strided_slice %9 {offsets = [0, 24], sizes = [16, 8], strides = [1, 1]} : vector<16x32xf32> to vector<16x8xf32>
    %cst_51 = arith.constant dense<0.000000e+00> : vector<8x16xf32>
    %115 = tpu.matmul %113, %114, %cst_51 {dimension_numbers = #tpu.dot_dimension_numbers<[1], [1], [0], [0], [0, 0, 1, 0], [], []>} : vector<8x8xf32>, vector<16x8xf32>, vector<8x16xf32> -> vector<8x16xf32>
    %cst_52 = arith.constant 0.000000e+00 : f32
    %116 = vector.broadcast %cst_52 : f32 to vector<8x1xf32>
    %cst_53 = arith.constant 0.000000e+00 : f32
    %117 = vector.broadcast %cst_53 : f32 to vector<8x1xf32>
    %118 = vector.extract_strided_slice %115 {offsets = [1, 0], sizes = [7, 6], strides = [1, 1]} : vector<8x16xf32> to vector<7x6xf32>
    %cst_54 = arith.constant 0.000000e+00 : f32
    %119 = vector.broadcast %cst_54 : f32 to vector<1x6xf32>
    %120 = tpu.concatenate %118, %119 in 0 : vector<7x6xf32>, vector<1x6xf32> -> vector<8x6xf32>
    %cst_55 = arith.constant 0.000000e+00 : f32
    %121 = vector.broadcast %cst_55 : f32 to vector<8x104xf32>
    %122 = tpu.concatenate %116, %115, %117, %120, %121 in 1 : vector<8x1xf32>, vector<8x16xf32>, vector<8x1xf32>, vector<8x6xf32>, vector<8x104xf32> -> vector<8x128xf32>
    %c120_i32_56 = arith.constant 120 : i32
    %123 = tpu.dynamic_rotate %122 by %c120_i32_56 dim 1 {stride = 1 : si32, stride_dimension = 0 : si32} : vector<8x128xf32>, i32 -> vector<8x128xf32>
    %124 = vector.extract_strided_slice %123 {offsets = [0, 0], sizes = [8, 16], strides = [1, 1]} : vector<8x128xf32> to vector<8x16xf32>
    %125 = arith.addf %112, %124 : vector<8x16xf32>
    %126 = arith.addf %125, %16 : vector<8x16xf32>
    %cst_57 = arith.constant 0.353553385 : f32
    %127 = vector.broadcast %cst_57 : f32 to vector<8x16xf32>
    %128 = arith.mulf %126, %127 : vector<8x16xf32>
    %cst_58 = arith.constant dense<0xFF800000> : vector<8xf32>
    %129 = vector.multi_reduction <maximumf>, %128, %cst_58 [1] : vector<8x16xf32> to vector<8xf32>
    %130 = vector.shape_cast %129 : vector<8xf32> to vector<8x1xf32>
    %131 = vector.broadcast %130 : vector<8x1xf32> to vector<8x16xf32>
    %132 = arith.subf %128, %131 : vector<8x16xf32>
    %133 = math.exp %132 : vector<8x16xf32>
    %cst_59 = arith.constant dense<0.000000e+00> : vector<8xf32>
    %134 = vector.multi_reduction <add>, %133, %cst_59 [1] : vector<8x16xf32> to vector<8xf32>
    %135 = vector.shape_cast %134 : vector<8xf32> to vector<8x1xf32>
    %136 = tpu.reciprocal %135 : vector<8x1xf32> -> vector<8x1xf32>
    %137 = vector.extract_strided_slice %8 {offsets = [0, 24], sizes = [16, 8], strides = [1, 1]} : vector<16x32xf32> to vector<16x8xf32>
    %cst_60 = arith.constant dense<0.000000e+00> : vector<8x8xf32>
    %138 = tpu.matmul %133, %137, %cst_60 {dimension_numbers = #tpu.dot_dimension_numbers<[1], [0], [0], [1], [0, 0, 1, 1], [], []>} : vector<8x16xf32>, vector<16x8xf32>, vector<8x8xf32> -> vector<8x8xf32>
    %139 = vector.broadcast %136 : vector<8x1xf32> to vector<8x8xf32>
    %140 = arith.mulf %138, %139 : vector<8x8xf32>
    %141 = tpu.concatenate %47, %78, %109, %140 in 1 : vector<8x8xf32>, vector<8x8xf32>, vector<8x8xf32>, vector<8x8xf32> -> vector<8x32xf32>
    %c0_61 = arith.constant 0 : index
    %c0_62 = arith.constant 0 : index
    %142 = vector.load %arg6[%c0_61, %c0_62] : memref<32x32xf32, #tpu.memory_space<vmem>>, vector<32x32xf32>
    %cst_63 = arith.constant dense<0.000000e+00> : vector<8x32xf32>
    %143 = tpu.matmul %141, %142, %cst_63 {dimension_numbers = #tpu.dot_dimension_numbers<[1], [0], [0], [1], [0, 0, 1, 1], [], []>} : vector<8x32xf32>, vector<32x32xf32>, vector<8x32xf32> -> vector<8x32xf32>
    %c0_64 = arith.constant 0 : index
    %c0_65 = arith.constant 0 : index
    %c0_66 = arith.constant 0 : index
    %144 = vector.load %arg10[%c0_64, %c0_65, %c0_66] : memref<1x8x32xf32, #tpu.memory_space<vmem>>, vector<1x8x32xf32>
    %145 = vector.shape_cast %144 : vector<1x8x32xf32> to vector<8x32xf32>
    %146 = vector.shape_cast %143 : vector<8x32xf32> to vector<1x8x32xf32>
    tpu.vector_store %arg10[%c0_64, %c0_65, %c0_66], %146 {strides = array<i32>} : memref<1x8x32xf32, #tpu.memory_space<vmem>>, vector<1x8x32xf32>,
    return
  }
  func.func @transform_0(%arg0: i32) -> (i32, i32, i32) {
    %c0_i32 = arith.constant 0 : i32
    %c0_i32_0 = arith.constant 0 : i32
    %c0_i32_1 = arith.constant 0 : i32
    return %arg0, %c0_i32, %c0_i32_0 : i32, i32, i32
  }
  func.func @transform_1(%arg0: i32) -> (i32, i32) {
    %c0_i32 = arith.constant 0 : i32
    %c0_i32_0 = arith.constant 0 : i32
    %c0_i32_1 = arith.constant 0 : i32
    return %c0_i32, %c0_i32_0 : i32, i32
  }
  func.func @transform_2(%arg0: i32) -> (i32, i32) {
    %c0_i32 = arith.constant 0 : i32
    %c0_i32_0 = arith.constant 0 : i32
    %c0_i32_1 = arith.constant 0 : i32
    return %c0_i32, %c0_i32_0 : i32, i32
  }
  func.func @transform_3(%arg0: i32) -> (i32, i32) {
    %c0_i32 = arith.constant 0 : i32
    %c0_i32_0 = arith.constant 0 : i32
    %c0_i32_1 = arith.constant 0 : i32
    return %c0_i32, %c0_i32_0 : i32, i32
  }
  func.func @transform_4(%arg0: i32) -> (i32, i32) {
    %c0_i32 = arith.constant 0 : i32
    %c0_i32_0 = arith.constant 0 : i32
    %c0_i32_1 = arith.constant 0 : i32
    return %c0_i32, %c0_i32_0 : i32, i32
  }
  func.func @transform_5(%arg0: i32) -> (i32, i32) {
    %c0_i32 = arith.constant 0 : i32
    %c0_i32_0 = arith.constant 0 : i32
    %c0_i32_1 = arith.constant 0 : i32
    return %c0_i32, %c0_i32_0 : i32, i32
  }
  func.func @transform_6(%arg0: i32) -> (i32, i32) {
    %c0_i32 = arith.constant 0 : i32
    %c0_i32_0 = arith.constant 0 : i32
    %c0_i32_1 = arith.constant 0 : i32
    return %c0_i32, %c0_i32_0 : i32, i32
  }
  func.func @transform_7(%arg0: i32) -> (i32, i32) {
    %c0_i32 = arith.constant 0 : i32
    %c0_i32_0 = arith.constant 0 : i32
    %c0_i32_1 = arith.constant 0 : i32
    return %c0_i32, %c0_i32_0 : i32, i32
  }
  func.func @transform_8(%arg0: i32) -> (i32, i32) {
    %c0_i32 = arith.constant 0 : i32
    %c0_i32_0 = arith.constant 0 : i32
    %c0_i32_1 = arith.constant 0 : i32
    return %c0_i32, %c0_i32_0 : i32, i32
  }
  func.func @transform_9(%arg0: i32) -> (i32, i32, i32) {
    %c0_i32 = arith.constant 0 : i32
    %c0_i32_0 = arith.constant 0 : i32
    %c0_i32_1 = arith.constant 0 : i32
    return %arg0, %c0_i32, %c0_i32_0 : i32, i32, i32
  }
}

module attributes {stable_mosaic.version = 11 : i64} {
  func.func @_mha_xl_kernel(%arg0: i32, %arg1: memref<1x16x32xf32, #tpu.memory_space<vmem>>, %arg2: memref<16x32xf32, #tpu.memory_space<vmem>>, %arg3: memref<32x32xf32, #tpu.memory_space<vmem>>, %arg4: memref<32x32xf32, #tpu.memory_space<vmem>>, %arg5: memref<32x32xf32, #tpu.memory_space<vmem>>, %arg6: memref<32x32xf32, #tpu.memory_space<vmem>>, %arg7: memref<1x32xf32, #tpu.memory_space<vmem>>, %arg8: memref<1x32xf32, #tpu.memory_space<vmem>>, %arg9: memref<8x16xf32, #tpu.memory_space<vmem>>, %arg10: memref<1x8x32xf32, #tpu.memory_space<vmem>>) attributes {dimension_semantics = [#tpu.dimension_semantics<parallel>], iteration_bounds = array<i64: 2>, scalar_prefetch = 0 : i64, scratch_operands = 0 : i64, tpu.core_type = #tpu.core_type<tc>, window_params = [{transform_indices = @transform_0, window_bounds = array<i64: 1, 16, 32>}, {pipeline_mode = #tpu.pipeline_mode<synchronous>, transform_indices = @transform_1, window_bounds = array<i64: 16, 32>}, {pipeline_mode = #tpu.pipeline_mode<synchronous>, transform_indices = @transform_2, window_bounds = array<i64: 32, 32>}, {pipeline_mode = #tpu.pipeline_mode<synchronous>, transform_indices = @transform_3, window_bounds = array<i64: 32, 32>}, {pipeline_mode = #tpu.pipeline_mode<synchronous>, transform_indices = @transform_4, window_bounds = array<i64: 32, 32>}, {pipeline_mode = #tpu.pipeline_mode<synchronous>, transform_indices = @transform_5, window_bounds = array<i64: 32, 32>}, {pipeline_mode = #tpu.pipeline_mode<synchronous>, transform_indices = @transform_6, window_bounds = array<i64: 1, 32>}, {pipeline_mode = #tpu.pipeline_mode<synchronous>, transform_indices = @transform_7, window_bounds = array<i64: 1, 32>}, {pipeline_mode = #tpu.pipeline_mode<synchronous>, transform_indices = @transform_8, window_bounds = array<i64: 8, 16>}, {transform_indices = @transform_9, window_bounds = array<i64: 1, 8, 32>}]} {
    %c0 = arith.constant 0 : index
    %c0_0 = arith.constant 0 : index
    %c0_1 = arith.constant 0 : index
    %0 = vector.load %arg1[%c0, %c0_0, %c0_1] : memref<1x16x32xf32, #tpu.memory_space<vmem>>, vector<1x16x32xf32>
    %1 = vector.shape_cast %0 : vector<1x16x32xf32> to vector<16x32xf32>
    %2 = vector.extract_strided_slice %1 {offsets = [8, 0], sizes = [8, 32], strides = [1, 1]} : vector<16x32xf32> to vector<8x32xf32>
    %c0_2 = arith.constant 0 : index
    %c0_3 = arith.constant 0 : index
    %3 = vector.load %arg3[%c0_2, %c0_3] : memref<32x32xf32, #tpu.memory_space<vmem>>, vector<32x32xf32>
    %cst = arith.constant dense<0.000000e+00> : vector<8x32xf32>
    %4 = tpu.matmul %2, %3, %cst {dimension_numbers = #tpu.dot_dimension_numbers<[1], [0], [0], [1], [0, 0, 1, 1], [], []>} : vector<8x32xf32>, vector<32x32xf32>, vector<8x32xf32> -> vector<8x32xf32>
    %c0_4 = arith.constant 0 : index
    %c0_5 = arith.constant 0 : index
    %5 = vector.load %arg4[%c0_4, %c0_5] : memref<32x32xf32, #tpu.memory_space<vmem>>, vector<32x32xf32>
    %cst_6 = arith.constant dense<0.000000e+00> : vector<16x32xf32>
    %6 = tpu.matmul %1, %5, %cst_6 {dimension_numbers = #tpu.dot_dimension_numbers<[1], [0], [0], [1], [0, 0, 1, 1], [], []>} : vector<16x32xf32>, vector<32x32xf32>, vector<16x32xf32> -> vector<16x32xf32>
    %c0_7 = arith.constant 0 : index
    %c0_8 = arith.constant 0 : index
    %7 = vector.load %arg5[%c0_7, %c0_8] : memref<32x32xf32, #tpu.memory_space<vmem>>, vector<32x32xf32>
    %cst_9 = arith.constant dense<0.000000e+00> : vector<16x32xf32>
    %8 = tpu.matmul %1, %7, %cst_9 {dimension_numbers = #tpu.dot_dimension_numbers<[1], [0], [0], [1], [0, 0, 1, 1], [], []>} : vector<16x32xf32>, vector<32x32xf32>, vector<16x32xf32> -> vector<16x32xf32>
    %c0_10 = arith.constant 0 : index
    %c0_11 = arith.constant 0 : index
    %9 = vector.load %arg2[%c0_10, %c0_11] : memref<16x32xf32, #tpu.memory_space<vmem>>, vector<16x32xf32>
    %c0_12 = arith.constant 0 : index
    %c0_13 = arith.constant 0 : index
    %10 = vector.load %arg7[%c0_12, %c0_13] : memref<1x32xf32, #tpu.memory_space<vmem>>, vector<1x32xf32>
    %11 = vector.broadcast %10 : vector<1x32xf32> to vector<8x32xf32>
    %12 = arith.addf %4, %11 : vector<8x32xf32>
    %c0_14 = arith.constant 0 : index
    %c0_15 = arith.constant 0 : index
    %13 = vector.load %arg8[%c0_14, %c0_15] : memref<1x32xf32, #tpu.memory_space<vmem>>, vector<1x32xf32>
    %14 = vector.broadcast %13 : vector<1x32xf32> to vector<8x32xf32>
    %15 = arith.addf %4, %14 : vector<8x32xf32>
    %c0_16 = arith.constant 0 : index
    %c0_17 = arith.constant 0 : index
    %16 = vector.load %arg9[%c0_16, %c0_17] : memref<8x16xf32, #tpu.memory_space<vmem>>, vector<8x16xf32>
    %17 = vector.extract_strided_slice %12 {offsets = [0, 0], sizes = [8, 8], strides = [1, 1]} : vector<8x32xf32> to vector<8x8xf32>
    %18 = vector.extract_strided_slice %6 {offsets = [0, 0], sizes = [16, 8], strides = [1, 1]} : vector<16x32xf32> to vector<16x8xf32>
    %cst_18 = arith.constant dense<0.000000e+00> : vector<8x16xf32>
    %19 = tpu.matmul %17, %18, %cst_18 {dimension_numbers = #tpu.dot_dimension_numbers<[1], [1], [0], [0], [0, 0, 1, 0], [], []>} : vector<8x8xf32>, vector<16x8xf32>, vector<8x16xf32> -> vector<8x16xf32>
    %20 = vector.extract_strided_slice %15 {offsets = [0, 0], sizes = [8, 8], strides = [1, 1]} : vector<8x32xf32> to vector<8x8xf32>
    %21 = vector.extract_strided_slice %9 {offsets = [0, 0], sizes = [16, 8], strides = [1, 1]} : vector<16x32xf32> to vector<16x8xf32>
    %cst_19 = arith.constant dense<0.000000e+00> : vector<8x16xf32>
    %22 = tpu.matmul %20, %21, %cst_19 {dimension_numbers = #tpu.dot_dimension_numbers<[1], [1], [0], [0], [0, 0, 1, 0], [], []>} : vector<8x8xf32>, vector<16x8xf32>, vector<8x16xf32> -> vector<8x16xf32>
    %cst_20 = arith.constant 0.000000e+00 : f32
    %23 = vector.broadcast %cst_20 : f32 to vector<8x1xf32>
    %cst_21 = arith.constant 0.000000e+00 : f32
    %24 = vector.broadcast %cst_21 : f32 to vector<8x1xf32>
    %25 = vector.extract_strided_slice %22 {offsets = [1, 0], sizes = [7, 6], strides = [1, 1]} : vector<8x16xf32> to vector<7x6xf32>
    %cst_22 = arith.constant 0.000000e+00 : f32
    %26 = vector.broadcast %cst_22 : f32 to vector<1x6xf32>
    %27 = tpu.concatenate %25, %26 in 0 : vector<7x6xf32>, vector<1x6xf32> -> vector<8x6xf32>
    %cst_23 = arith.constant 0.000000e+00 : f32
    %28 = vector.broadcast %cst_23 : f32 to vector<8x104xf32>
    %29 = tpu.concatenate %23, %22, %24, %27, %28 in 1 : vector<8x1xf32>, vector<8x16xf32>, vector<8x1xf32>, vector<8x6xf32>, vector<8x104xf32> -> vector<8x128xf32>
    %30 = tpu.iota {dimensions = array<i32: 0>} : vector<8x128xi32>
    %c8_i32 = arith.constant 8 : i32
    %31 = vector.broadcast %c8_i32 : i32 to vector<8x128xi32>
    %32 = arith.subi %31, %30 : vector<8x128xi32>
    %33 = vector.extract_strided_slice %29 {offsets = [0, 1], sizes = [8, 127], strides = [1, 1]} : vector<8x128xf32> to vector<8x127xf32>
    %34 = vector.extract_strided_slice %29 {offsets = [0, 0], sizes = [8, 1], strides = [1, 1]} : vector<8x128xf32> to vector<8x1xf32>
    %35 = tpu.concatenate %33, %34 in 1 : vector<8x127xf32>, vector<8x1xf32> -> vector<8x128xf32>
    %c1_i32 = arith.constant 1 : i32
    %36 = vector.broadcast %c1_i32 : i32 to vector<8x128xi32>
    %37 = arith.andi %32, %36 : vector<8x128xi32>
    %c0_i32 = arith.constant 0 : i32
    %38 = vector.broadcast %c0_i32 : i32 to vector<8x128xi32>
    %39 = arith.cmpi ne, %37, %38 : vector<8x128xi32>
    %40 = arith.select %39, %35, %29 : vector<8x128xi1>, vector<8x128xf32>
    %41 = vector.extract_strided_slice %40 {offsets = [0, 2], sizes = [8, 126], strides = [1, 1]} : vector<8x128xf32> to vector<8x126xf32>
    %42 = vector.extract_strided_slice %40 {offsets = [0, 0], sizes = [8, 2], strides = [1, 1]} : vector<8x128xf32> to vector<8x2xf32>
    %43 = tpu.concatenate %41, %42 in 1 : vector<8x126xf32>, vector<8x2xf32> -> vector<8x128xf32>
    %c2_i32 = arith.constant 2 : i32
    %44 = vector.broadcast %c2_i32 : i32 to vector<8x128xi32>
    %45 = arith.andi %32, %44 : vector<8x128xi32>
    %c0_i32_24 = arith.constant 0 : i32
    %46 = vector.broadcast %c0_i32_24 : i32 to vector<8x128xi32>
    %47 = arith.cmpi ne, %45, %46 : vector<8x128xi32>
    %48 = arith.select %47, %43, %40 : vector<8x128xi1>, vector<8x128xf32>
    %49 = vector.extract_strided_slice %48 {offsets = [0, 4], sizes = [8, 124], strides = [1, 1]} : vector<8x128xf32> to vector<8x124xf32>
    %50 = vector.extract_strided_slice %48 {offsets = [0, 0], sizes = [8, 4], strides = [1, 1]} : vector<8x128xf32> to vector<8x4xf32>
    %51 = tpu.concatenate %49, %50 in 1 : vector<8x124xf32>, vector<8x4xf32> -> vector<8x128xf32>
    %c4_i32 = arith.constant 4 : i32
    %52 = vector.broadcast %c4_i32 : i32 to vector<8x128xi32>
    %53 = arith.andi %32, %52 : vector<8x128xi32>
    %c0_i32_25 = arith.constant 0 : i32
    %54 = vector.broadcast %c0_i32_25 : i32 to vector<8x128xi32>
    %55 = arith.cmpi ne, %53, %54 : vector<8x128xi32>
    %56 = arith.select %55, %51, %48 : vector<8x128xi1>, vector<8x128xf32>
    %57 = vector.extract_strided_slice %56 {offsets = [0, 8], sizes = [8, 120], strides = [1, 1]} : vector<8x128xf32> to vector<8x120xf32>
    %58 = vector.extract_strided_slice %56 {offsets = [0, 0], sizes = [8, 8], strides = [1, 1]} : vector<8x128xf32> to vector<8x8xf32>
    %59 = tpu.concatenate %57, %58 in 1 : vector<8x120xf32>, vector<8x8xf32> -> vector<8x128xf32>
    %c8_i32_26 = arith.constant 8 : i32
    %60 = vector.broadcast %c8_i32_26 : i32 to vector<8x128xi32>
    %61 = arith.andi %32, %60 : vector<8x128xi32>
    %c0_i32_27 = arith.constant 0 : i32
    %62 = vector.broadcast %c0_i32_27 : i32 to vector<8x128xi32>
    %63 = arith.cmpi ne, %61, %62 : vector<8x128xi32>
    %64 = arith.select %63, %59, %56 : vector<8x128xi1>, vector<8x128xf32>
    %65 = vector.extract_strided_slice %64 {offsets = [0, 0], sizes = [8, 16], strides = [1, 1]} : vector<8x128xf32> to vector<8x16xf32>
    %66 = arith.addf %19, %65 : vector<8x16xf32>
    %67 = arith.addf %66, %16 : vector<8x16xf32>
    %cst_28 = arith.constant 0.353553385 : f32
    %68 = vector.broadcast %cst_28 : f32 to vector<8x16xf32>
    %69 = arith.mulf %67, %68 : vector<8x16xf32>
    %cst_29 = arith.constant dense<0xFF800000> : vector<8xf32>
    %70 = vector.multi_reduction <maximumf>, %69, %cst_29 [1] : vector<8x16xf32> to vector<8xf32>
    %71 = vector.shape_cast %70 : vector<8xf32> to vector<8x1xf32>
    %72 = vector.broadcast %71 : vector<8x1xf32> to vector<8x16xf32>
    %73 = arith.subf %69, %72 : vector<8x16xf32>
    %74 = math.exp %73 : vector<8x16xf32>
    %cst_30 = arith.constant dense<0.000000e+00> : vector<8xf32>
    %75 = vector.multi_reduction <add>, %74, %cst_30 [1] : vector<8x16xf32> to vector<8xf32>
    %76 = vector.shape_cast %75 : vector<8xf32> to vector<8x1xf32>
    %77 = tpu.reciprocal %76 : vector<8x1xf32> -> vector<8x1xf32>
    %78 = vector.extract_strided_slice %8 {offsets = [0, 0], sizes = [16, 8], strides = [1, 1]} : vector<16x32xf32> to vector<16x8xf32>
    %cst_31 = arith.constant dense<0.000000e+00> : vector<8x8xf32>
    %79 = tpu.matmul %74, %78, %cst_31 {dimension_numbers = #tpu.dot_dimension_numbers<[1], [0], [0], [1], [0, 0, 1, 1], [], []>} : vector<8x16xf32>, vector<16x8xf32>, vector<8x8xf32> -> vector<8x8xf32>
    %80 = vector.broadcast %77 : vector<8x1xf32> to vector<8x8xf32>
    %81 = arith.mulf %79, %80 : vector<8x8xf32>
    %82 = vector.extract_strided_slice %12 {offsets = [0, 8], sizes = [8, 8], strides = [1, 1]} : vector<8x32xf32> to vector<8x8xf32>
    %83 = vector.extract_strided_slice %6 {offsets = [0, 8], sizes = [16, 8], strides = [1, 1]} : vector<16x32xf32> to vector<16x8xf32>
    %cst_32 = arith.constant dense<0.000000e+00> : vector<8x16xf32>
    %84 = tpu.matmul %82, %83, %cst_32 {dimension_numbers = #tpu.dot_dimension_numbers<[1], [1], [0], [0], [0, 0, 1, 0], [], []>} : vector<8x8xf32>, vector<16x8xf32>, vector<8x16xf32> -> vector<8x16xf32>
    %85 = vector.extract_strided_slice %15 {offsets = [0, 8], sizes = [8, 8], strides = [1, 1]} : vector<8x32xf32> to vector<8x8xf32>
    %86 = vector.extract_strided_slice %9 {offsets = [0, 8], sizes = [16, 8], strides = [1, 1]} : vector<16x32xf32> to vector<16x8xf32>
    %cst_33 = arith.constant dense<0.000000e+00> : vector<8x16xf32>
    %87 = tpu.matmul %85, %86, %cst_33 {dimension_numbers = #tpu.dot_dimension_numbers<[1], [1], [0], [0], [0, 0, 1, 0], [], []>} : vector<8x8xf32>, vector<16x8xf32>, vector<8x16xf32> -> vector<8x16xf32>
    %cst_34 = arith.constant 0.000000e+00 : f32
    %88 = vector.broadcast %cst_34 : f32 to vector<8x1xf32>
    %cst_35 = arith.constant 0.000000e+00 : f32
    %89 = vector.broadcast %cst_35 : f32 to vector<8x1xf32>
    %90 = vector.extract_strided_slice %87 {offsets = [1, 0], sizes = [7, 6], strides = [1, 1]} : vector<8x16xf32> to vector<7x6xf32>
    %cst_36 = arith.constant 0.000000e+00 : f32
    %91 = vector.broadcast %cst_36 : f32 to vector<1x6xf32>
    %92 = tpu.concatenate %90, %91 in 0 : vector<7x6xf32>, vector<1x6xf32> -> vector<8x6xf32>
    %cst_37 = arith.constant 0.000000e+00 : f32
    %93 = vector.broadcast %cst_37 : f32 to vector<8x104xf32>
    %94 = tpu.concatenate %88, %87, %89, %92, %93 in 1 : vector<8x1xf32>, vector<8x16xf32>, vector<8x1xf32>, vector<8x6xf32>, vector<8x104xf32> -> vector<8x128xf32>
    %95 = tpu.iota {dimensions = array<i32: 0>} : vector<8x128xi32>
    %c8_i32_38 = arith.constant 8 : i32
    %96 = vector.broadcast %c8_i32_38 : i32 to vector<8x128xi32>
    %97 = arith.subi %96, %95 : vector<8x128xi32>
    %98 = vector.extract_strided_slice %94 {offsets = [0, 1], sizes = [8, 127], strides = [1, 1]} : vector<8x128xf32> to vector<8x127xf32>
    %99 = vector.extract_strided_slice %94 {offsets = [0, 0], sizes = [8, 1], strides = [1, 1]} : vector<8x128xf32> to vector<8x1xf32>
    %100 = tpu.concatenate %98, %99 in 1 : vector<8x127xf32>, vector<8x1xf32> -> vector<8x128xf32>
    %c1_i32_39 = arith.constant 1 : i32
    %101 = vector.broadcast %c1_i32_39 : i32 to vector<8x128xi32>
    %102 = arith.andi %97, %101 : vector<8x128xi32>
    %c0_i32_40 = arith.constant 0 : i32
    %103 = vector.broadcast %c0_i32_40 : i32 to vector<8x128xi32>
    %104 = arith.cmpi ne, %102, %103 : vector<8x128xi32>
    %105 = arith.select %104, %100, %94 : vector<8x128xi1>, vector<8x128xf32>
    %106 = vector.extract_strided_slice %105 {offsets = [0, 2], sizes = [8, 126], strides = [1, 1]} : vector<8x128xf32> to vector<8x126xf32>
    %107 = vector.extract_strided_slice %105 {offsets = [0, 0], sizes = [8, 2], strides = [1, 1]} : vector<8x128xf32> to vector<8x2xf32>
    %108 = tpu.concatenate %106, %107 in 1 : vector<8x126xf32>, vector<8x2xf32> -> vector<8x128xf32>
    %c2_i32_41 = arith.constant 2 : i32
    %109 = vector.broadcast %c2_i32_41 : i32 to vector<8x128xi32>
    %110 = arith.andi %97, %109 : vector<8x128xi32>
    %c0_i32_42 = arith.constant 0 : i32
    %111 = vector.broadcast %c0_i32_42 : i32 to vector<8x128xi32>
    %112 = arith.cmpi ne, %110, %111 : vector<8x128xi32>
    %113 = arith.select %112, %108, %105 : vector<8x128xi1>, vector<8x128xf32>
    %114 = vector.extract_strided_slice %113 {offsets = [0, 4], sizes = [8, 124], strides = [1, 1]} : vector<8x128xf32> to vector<8x124xf32>
    %115 = vector.extract_strided_slice %113 {offsets = [0, 0], sizes = [8, 4], strides = [1, 1]} : vector<8x128xf32> to vector<8x4xf32>
    %116 = tpu.concatenate %114, %115 in 1 : vector<8x124xf32>, vector<8x4xf32> -> vector<8x128xf32>
    %c4_i32_43 = arith.constant 4 : i32
    %117 = vector.broadcast %c4_i32_43 : i32 to vector<8x128xi32>
    %118 = arith.andi %97, %117 : vector<8x128xi32>
    %c0_i32_44 = arith.constant 0 : i32
    %119 = vector.broadcast %c0_i32_44 : i32 to vector<8x128xi32>
    %120 = arith.cmpi ne, %118, %119 : vector<8x128xi32>
    %121 = arith.select %120, %116, %113 : vector<8x128xi1>, vector<8x128xf32>
    %122 = vector.extract_strided_slice %121 {offsets = [0, 8], sizes = [8, 120], strides = [1, 1]} : vector<8x128xf32> to vector<8x120xf32>
    %123 = vector.extract_strided_slice %121 {offsets = [0, 0], sizes = [8, 8], strides = [1, 1]} : vector<8x128xf32> to vector<8x8xf32>
    %124 = tpu.concatenate %122, %123 in 1 : vector<8x120xf32>, vector<8x8xf32> -> vector<8x128xf32>
    %c8_i32_45 = arith.constant 8 : i32
    %125 = vector.broadcast %c8_i32_45 : i32 to vector<8x128xi32>
    %126 = arith.andi %97, %125 : vector<8x128xi32>
    %c0_i32_46 = arith.constant 0 : i32
    %127 = vector.broadcast %c0_i32_46 : i32 to vector<8x128xi32>
    %128 = arith.cmpi ne, %126, %127 : vector<8x128xi32>
    %129 = arith.select %128, %124, %121 : vector<8x128xi1>, vector<8x128xf32>
    %130 = vector.extract_strided_slice %129 {offsets = [0, 0], sizes = [8, 16], strides = [1, 1]} : vector<8x128xf32> to vector<8x16xf32>
    %131 = arith.addf %84, %130 : vector<8x16xf32>
    %132 = arith.addf %131, %16 : vector<8x16xf32>
    %cst_47 = arith.constant 0.353553385 : f32
    %133 = vector.broadcast %cst_47 : f32 to vector<8x16xf32>
    %134 = arith.mulf %132, %133 : vector<8x16xf32>
    %cst_48 = arith.constant dense<0xFF800000> : vector<8xf32>
    %135 = vector.multi_reduction <maximumf>, %134, %cst_48 [1] : vector<8x16xf32> to vector<8xf32>
    %136 = vector.shape_cast %135 : vector<8xf32> to vector<8x1xf32>
    %137 = vector.broadcast %136 : vector<8x1xf32> to vector<8x16xf32>
    %138 = arith.subf %134, %137 : vector<8x16xf32>
    %139 = math.exp %138 : vector<8x16xf32>
    %cst_49 = arith.constant dense<0.000000e+00> : vector<8xf32>
    %140 = vector.multi_reduction <add>, %139, %cst_49 [1] : vector<8x16xf32> to vector<8xf32>
    %141 = vector.shape_cast %140 : vector<8xf32> to vector<8x1xf32>
    %142 = tpu.reciprocal %141 : vector<8x1xf32> -> vector<8x1xf32>
    %143 = vector.extract_strided_slice %8 {offsets = [0, 8], sizes = [16, 8], strides = [1, 1]} : vector<16x32xf32> to vector<16x8xf32>
    %cst_50 = arith.constant dense<0.000000e+00> : vector<8x8xf32>
    %144 = tpu.matmul %139, %143, %cst_50 {dimension_numbers = #tpu.dot_dimension_numbers<[1], [0], [0], [1], [0, 0, 1, 1], [], []>} : vector<8x16xf32>, vector<16x8xf32>, vector<8x8xf32> -> vector<8x8xf32>
    %145 = vector.broadcast %142 : vector<8x1xf32> to vector<8x8xf32>
    %146 = arith.mulf %144, %145 : vector<8x8xf32>
    %147 = vector.extract_strided_slice %12 {offsets = [0, 16], sizes = [8, 8], strides = [1, 1]} : vector<8x32xf32> to vector<8x8xf32>
    %148 = vector.extract_strided_slice %6 {offsets = [0, 16], sizes = [16, 8], strides = [1, 1]} : vector<16x32xf32> to vector<16x8xf32>
    %cst_51 = arith.constant dense<0.000000e+00> : vector<8x16xf32>
    %149 = tpu.matmul %147, %148, %cst_51 {dimension_numbers = #tpu.dot_dimension_numbers<[1], [1], [0], [0], [0, 0, 1, 0], [], []>} : vector<8x8xf32>, vector<16x8xf32>, vector<8x16xf32> -> vector<8x16xf32>
    %150 = vector.extract_strided_slice %15 {offsets = [0, 16], sizes = [8, 8], strides = [1, 1]} : vector<8x32xf32> to vector<8x8xf32>
    %151 = vector.extract_strided_slice %9 {offsets = [0, 16], sizes = [16, 8], strides = [1, 1]} : vector<16x32xf32> to vector<16x8xf32>
    %cst_52 = arith.constant dense<0.000000e+00> : vector<8x16xf32>
    %152 = tpu.matmul %150, %151, %cst_52 {dimension_numbers = #tpu.dot_dimension_numbers<[1], [1], [0], [0], [0, 0, 1, 0], [], []>} : vector<8x8xf32>, vector<16x8xf32>, vector<8x16xf32> -> vector<8x16xf32>
    %cst_53 = arith.constant 0.000000e+00 : f32
    %153 = vector.broadcast %cst_53 : f32 to vector<8x1xf32>
    %cst_54 = arith.constant 0.000000e+00 : f32
    %154 = vector.broadcast %cst_54 : f32 to vector<8x1xf32>
    %155 = vector.extract_strided_slice %152 {offsets = [1, 0], sizes = [7, 6], strides = [1, 1]} : vector<8x16xf32> to vector<7x6xf32>
    %cst_55 = arith.constant 0.000000e+00 : f32
    %156 = vector.broadcast %cst_55 : f32 to vector<1x6xf32>
    %157 = tpu.concatenate %155, %156 in 0 : vector<7x6xf32>, vector<1x6xf32> -> vector<8x6xf32>
    %cst_56 = arith.constant 0.000000e+00 : f32
    %158 = vector.broadcast %cst_56 : f32 to vector<8x104xf32>
    %159 = tpu.concatenate %153, %152, %154, %157, %158 in 1 : vector<8x1xf32>, vector<8x16xf32>, vector<8x1xf32>, vector<8x6xf32>, vector<8x104xf32> -> vector<8x128xf32>
    %160 = tpu.iota {dimensions = array<i32: 0>} : vector<8x128xi32>
    %c8_i32_57 = arith.constant 8 : i32
    %161 = vector.broadcast %c8_i32_57 : i32 to vector<8x128xi32>
    %162 = arith.subi %161, %160 : vector<8x128xi32>
    %163 = vector.extract_strided_slice %159 {offsets = [0, 1], sizes = [8, 127], strides = [1, 1]} : vector<8x128xf32> to vector<8x127xf32>
    %164 = vector.extract_strided_slice %159 {offsets = [0, 0], sizes = [8, 1], strides = [1, 1]} : vector<8x128xf32> to vector<8x1xf32>
    %165 = tpu.concatenate %163, %164 in 1 : vector<8x127xf32>, vector<8x1xf32> -> vector<8x128xf32>
    %c1_i32_58 = arith.constant 1 : i32
    %166 = vector.broadcast %c1_i32_58 : i32 to vector<8x128xi32>
    %167 = arith.andi %162, %166 : vector<8x128xi32>
    %c0_i32_59 = arith.constant 0 : i32
    %168 = vector.broadcast %c0_i32_59 : i32 to vector<8x128xi32>
    %169 = arith.cmpi ne, %167, %168 : vector<8x128xi32>
    %170 = arith.select %169, %165, %159 : vector<8x128xi1>, vector<8x128xf32>
    %171 = vector.extract_strided_slice %170 {offsets = [0, 2], sizes = [8, 126], strides = [1, 1]} : vector<8x128xf32> to vector<8x126xf32>
    %172 = vector.extract_strided_slice %170 {offsets = [0, 0], sizes = [8, 2], strides = [1, 1]} : vector<8x128xf32> to vector<8x2xf32>
    %173 = tpu.concatenate %171, %172 in 1 : vector<8x126xf32>, vector<8x2xf32> -> vector<8x128xf32>
    %c2_i32_60 = arith.constant 2 : i32
    %174 = vector.broadcast %c2_i32_60 : i32 to vector<8x128xi32>
    %175 = arith.andi %162, %174 : vector<8x128xi32>
    %c0_i32_61 = arith.constant 0 : i32
    %176 = vector.broadcast %c0_i32_61 : i32 to vector<8x128xi32>
    %177 = arith.cmpi ne, %175, %176 : vector<8x128xi32>
    %178 = arith.select %177, %173, %170 : vector<8x128xi1>, vector<8x128xf32>
    %179 = vector.extract_strided_slice %178 {offsets = [0, 4], sizes = [8, 124], strides = [1, 1]} : vector<8x128xf32> to vector<8x124xf32>
    %180 = vector.extract_strided_slice %178 {offsets = [0, 0], sizes = [8, 4], strides = [1, 1]} : vector<8x128xf32> to vector<8x4xf32>
    %181 = tpu.concatenate %179, %180 in 1 : vector<8x124xf32>, vector<8x4xf32> -> vector<8x128xf32>
    %c4_i32_62 = arith.constant 4 : i32
    %182 = vector.broadcast %c4_i32_62 : i32 to vector<8x128xi32>
    %183 = arith.andi %162, %182 : vector<8x128xi32>
    %c0_i32_63 = arith.constant 0 : i32
    %184 = vector.broadcast %c0_i32_63 : i32 to vector<8x128xi32>
    %185 = arith.cmpi ne, %183, %184 : vector<8x128xi32>
    %186 = arith.select %185, %181, %178 : vector<8x128xi1>, vector<8x128xf32>
    %187 = vector.extract_strided_slice %186 {offsets = [0, 8], sizes = [8, 120], strides = [1, 1]} : vector<8x128xf32> to vector<8x120xf32>
    %188 = vector.extract_strided_slice %186 {offsets = [0, 0], sizes = [8, 8], strides = [1, 1]} : vector<8x128xf32> to vector<8x8xf32>
    %189 = tpu.concatenate %187, %188 in 1 : vector<8x120xf32>, vector<8x8xf32> -> vector<8x128xf32>
    %c8_i32_64 = arith.constant 8 : i32
    %190 = vector.broadcast %c8_i32_64 : i32 to vector<8x128xi32>
    %191 = arith.andi %162, %190 : vector<8x128xi32>
    %c0_i32_65 = arith.constant 0 : i32
    %192 = vector.broadcast %c0_i32_65 : i32 to vector<8x128xi32>
    %193 = arith.cmpi ne, %191, %192 : vector<8x128xi32>
    %194 = arith.select %193, %189, %186 : vector<8x128xi1>, vector<8x128xf32>
    %195 = vector.extract_strided_slice %194 {offsets = [0, 0], sizes = [8, 16], strides = [1, 1]} : vector<8x128xf32> to vector<8x16xf32>
    %196 = arith.addf %149, %195 : vector<8x16xf32>
    %197 = arith.addf %196, %16 : vector<8x16xf32>
    %cst_66 = arith.constant 0.353553385 : f32
    %198 = vector.broadcast %cst_66 : f32 to vector<8x16xf32>
    %199 = arith.mulf %197, %198 : vector<8x16xf32>
    %cst_67 = arith.constant dense<0xFF800000> : vector<8xf32>
    %200 = vector.multi_reduction <maximumf>, %199, %cst_67 [1] : vector<8x16xf32> to vector<8xf32>
    %201 = vector.shape_cast %200 : vector<8xf32> to vector<8x1xf32>
    %202 = vector.broadcast %201 : vector<8x1xf32> to vector<8x16xf32>
    %203 = arith.subf %199, %202 : vector<8x16xf32>
    %204 = math.exp %203 : vector<8x16xf32>
    %cst_68 = arith.constant dense<0.000000e+00> : vector<8xf32>
    %205 = vector.multi_reduction <add>, %204, %cst_68 [1] : vector<8x16xf32> to vector<8xf32>
    %206 = vector.shape_cast %205 : vector<8xf32> to vector<8x1xf32>
    %207 = tpu.reciprocal %206 : vector<8x1xf32> -> vector<8x1xf32>
    %208 = vector.extract_strided_slice %8 {offsets = [0, 16], sizes = [16, 8], strides = [1, 1]} : vector<16x32xf32> to vector<16x8xf32>
    %cst_69 = arith.constant dense<0.000000e+00> : vector<8x8xf32>
    %209 = tpu.matmul %204, %208, %cst_69 {dimension_numbers = #tpu.dot_dimension_numbers<[1], [0], [0], [1], [0, 0, 1, 1], [], []>} : vector<8x16xf32>, vector<16x8xf32>, vector<8x8xf32> -> vector<8x8xf32>
    %210 = vector.broadcast %207 : vector<8x1xf32> to vector<8x8xf32>
    %211 = arith.mulf %209, %210 : vector<8x8xf32>
    %212 = vector.extract_strided_slice %12 {offsets = [0, 24], sizes = [8, 8], strides = [1, 1]} : vector<8x32xf32> to vector<8x8xf32>
    %213 = vector.extract_strided_slice %6 {offsets = [0, 24], sizes = [16, 8], strides = [1, 1]} : vector<16x32xf32> to vector<16x8xf32>
    %cst_70 = arith.constant dense<0.000000e+00> : vector<8x16xf32>
    %214 = tpu.matmul %212, %213, %cst_70 {dimension_numbers = #tpu.dot_dimension_numbers<[1], [1], [0], [0], [0, 0, 1, 0], [], []>} : vector<8x8xf32>, vector<16x8xf32>, vector<8x16xf32> -> vector<8x16xf32>
    %215 = vector.extract_strided_slice %15 {offsets = [0, 24], sizes = [8, 8], strides = [1, 1]} : vector<8x32xf32> to vector<8x8xf32>
    %216 = vector.extract_strided_slice %9 {offsets = [0, 24], sizes = [16, 8], strides = [1, 1]} : vector<16x32xf32> to vector<16x8xf32>
    %cst_71 = arith.constant dense<0.000000e+00> : vector<8x16xf32>
    %217 = tpu.matmul %215, %216, %cst_71 {dimension_numbers = #tpu.dot_dimension_numbers<[1], [1], [0], [0], [0, 0, 1, 0], [], []>} : vector<8x8xf32>, vector<16x8xf32>, vector<8x16xf32> -> vector<8x16xf32>
    %cst_72 = arith.constant 0.000000e+00 : f32
    %218 = vector.broadcast %cst_72 : f32 to vector<8x1xf32>
    %cst_73 = arith.constant 0.000000e+00 : f32
    %219 = vector.broadcast %cst_73 : f32 to vector<8x1xf32>
    %220 = vector.extract_strided_slice %217 {offsets = [1, 0], sizes = [7, 6], strides = [1, 1]} : vector<8x16xf32> to vector<7x6xf32>
    %cst_74 = arith.constant 0.000000e+00 : f32
    %221 = vector.broadcast %cst_74 : f32 to vector<1x6xf32>
    %222 = tpu.concatenate %220, %221 in 0 : vector<7x6xf32>, vector<1x6xf32> -> vector<8x6xf32>
    %cst_75 = arith.constant 0.000000e+00 : f32
    %223 = vector.broadcast %cst_75 : f32 to vector<8x104xf32>
    %224 = tpu.concatenate %218, %217, %219, %222, %223 in 1 : vector<8x1xf32>, vector<8x16xf32>, vector<8x1xf32>, vector<8x6xf32>, vector<8x104xf32> -> vector<8x128xf32>
    %225 = tpu.iota {dimensions = array<i32: 0>} : vector<8x128xi32>
    %c8_i32_76 = arith.constant 8 : i32
    %226 = vector.broadcast %c8_i32_76 : i32 to vector<8x128xi32>
    %227 = arith.subi %226, %225 : vector<8x128xi32>
    %228 = vector.extract_strided_slice %224 {offsets = [0, 1], sizes = [8, 127], strides = [1, 1]} : vector<8x128xf32> to vector<8x127xf32>
    %229 = vector.extract_strided_slice %224 {offsets = [0, 0], sizes = [8, 1], strides = [1, 1]} : vector<8x128xf32> to vector<8x1xf32>
    %230 = tpu.concatenate %228, %229 in 1 : vector<8x127xf32>, vector<8x1xf32> -> vector<8x128xf32>
    %c1_i32_77 = arith.constant 1 : i32
    %231 = vector.broadcast %c1_i32_77 : i32 to vector<8x128xi32>
    %232 = arith.andi %227, %231 : vector<8x128xi32>
    %c0_i32_78 = arith.constant 0 : i32
    %233 = vector.broadcast %c0_i32_78 : i32 to vector<8x128xi32>
    %234 = arith.cmpi ne, %232, %233 : vector<8x128xi32>
    %235 = arith.select %234, %230, %224 : vector<8x128xi1>, vector<8x128xf32>
    %236 = vector.extract_strided_slice %235 {offsets = [0, 2], sizes = [8, 126], strides = [1, 1]} : vector<8x128xf32> to vector<8x126xf32>
    %237 = vector.extract_strided_slice %235 {offsets = [0, 0], sizes = [8, 2], strides = [1, 1]} : vector<8x128xf32> to vector<8x2xf32>
    %238 = tpu.concatenate %236, %237 in 1 : vector<8x126xf32>, vector<8x2xf32> -> vector<8x128xf32>
    %c2_i32_79 = arith.constant 2 : i32
    %239 = vector.broadcast %c2_i32_79 : i32 to vector<8x128xi32>
    %240 = arith.andi %227, %239 : vector<8x128xi32>
    %c0_i32_80 = arith.constant 0 : i32
    %241 = vector.broadcast %c0_i32_80 : i32 to vector<8x128xi32>
    %242 = arith.cmpi ne, %240, %241 : vector<8x128xi32>
    %243 = arith.select %242, %238, %235 : vector<8x128xi1>, vector<8x128xf32>
    %244 = vector.extract_strided_slice %243 {offsets = [0, 4], sizes = [8, 124], strides = [1, 1]} : vector<8x128xf32> to vector<8x124xf32>
    %245 = vector.extract_strided_slice %243 {offsets = [0, 0], sizes = [8, 4], strides = [1, 1]} : vector<8x128xf32> to vector<8x4xf32>
    %246 = tpu.concatenate %244, %245 in 1 : vector<8x124xf32>, vector<8x4xf32> -> vector<8x128xf32>
    %c4_i32_81 = arith.constant 4 : i32
    %247 = vector.broadcast %c4_i32_81 : i32 to vector<8x128xi32>
    %248 = arith.andi %227, %247 : vector<8x128xi32>
    %c0_i32_82 = arith.constant 0 : i32
    %249 = vector.broadcast %c0_i32_82 : i32 to vector<8x128xi32>
    %250 = arith.cmpi ne, %248, %249 : vector<8x128xi32>
    %251 = arith.select %250, %246, %243 : vector<8x128xi1>, vector<8x128xf32>
    %252 = vector.extract_strided_slice %251 {offsets = [0, 8], sizes = [8, 120], strides = [1, 1]} : vector<8x128xf32> to vector<8x120xf32>
    %253 = vector.extract_strided_slice %251 {offsets = [0, 0], sizes = [8, 8], strides = [1, 1]} : vector<8x128xf32> to vector<8x8xf32>
    %254 = tpu.concatenate %252, %253 in 1 : vector<8x120xf32>, vector<8x8xf32> -> vector<8x128xf32>
    %c8_i32_83 = arith.constant 8 : i32
    %255 = vector.broadcast %c8_i32_83 : i32 to vector<8x128xi32>
    %256 = arith.andi %227, %255 : vector<8x128xi32>
    %c0_i32_84 = arith.constant 0 : i32
    %257 = vector.broadcast %c0_i32_84 : i32 to vector<8x128xi32>
    %258 = arith.cmpi ne, %256, %257 : vector<8x128xi32>
    %259 = arith.select %258, %254, %251 : vector<8x128xi1>, vector<8x128xf32>
    %260 = vector.extract_strided_slice %259 {offsets = [0, 0], sizes = [8, 16], strides = [1, 1]} : vector<8x128xf32> to vector<8x16xf32>
    %261 = arith.addf %214, %260 : vector<8x16xf32>
    %262 = arith.addf %261, %16 : vector<8x16xf32>
    %cst_85 = arith.constant 0.353553385 : f32
    %263 = vector.broadcast %cst_85 : f32 to vector<8x16xf32>
    %264 = arith.mulf %262, %263 : vector<8x16xf32>
    %cst_86 = arith.constant dense<0xFF800000> : vector<8xf32>
    %265 = vector.multi_reduction <maximumf>, %264, %cst_86 [1] : vector<8x16xf32> to vector<8xf32>
    %266 = vector.shape_cast %265 : vector<8xf32> to vector<8x1xf32>
    %267 = vector.broadcast %266 : vector<8x1xf32> to vector<8x16xf32>
    %268 = arith.subf %264, %267 : vector<8x16xf32>
    %269 = math.exp %268 : vector<8x16xf32>
    %cst_87 = arith.constant dense<0.000000e+00> : vector<8xf32>
    %270 = vector.multi_reduction <add>, %269, %cst_87 [1] : vector<8x16xf32> to vector<8xf32>
    %271 = vector.shape_cast %270 : vector<8xf32> to vector<8x1xf32>
    %272 = tpu.reciprocal %271 : vector<8x1xf32> -> vector<8x1xf32>
    %273 = vector.extract_strided_slice %8 {offsets = [0, 24], sizes = [16, 8], strides = [1, 1]} : vector<16x32xf32> to vector<16x8xf32>
    %cst_88 = arith.constant dense<0.000000e+00> : vector<8x8xf32>
    %274 = tpu.matmul %269, %273, %cst_88 {dimension_numbers = #tpu.dot_dimension_numbers<[1], [0], [0], [1], [0, 0, 1, 1], [], []>} : vector<8x16xf32>, vector<16x8xf32>, vector<8x8xf32> -> vector<8x8xf32>
    %275 = vector.broadcast %272 : vector<8x1xf32> to vector<8x8xf32>
    %276 = arith.mulf %274, %275 : vector<8x8xf32>
    %277 = tpu.concatenate %81, %146, %211, %276 in 1 : vector<8x8xf32>, vector<8x8xf32>, vector<8x8xf32>, vector<8x8xf32> -> vector<8x32xf32>
    %c0_89 = arith.constant 0 : index
    %c0_90 = arith.constant 0 : index
    %278 = vector.load %arg6[%c0_89, %c0_90] : memref<32x32xf32, #tpu.memory_space<vmem>>, vector<32x32xf32>
    %cst_91 = arith.constant dense<0.000000e+00> : vector<8x32xf32>
    %279 = tpu.matmul %277, %278, %cst_91 {dimension_numbers = #tpu.dot_dimension_numbers<[1], [0], [0], [1], [0, 0, 1, 1], [], []>} : vector<8x32xf32>, vector<32x32xf32>, vector<8x32xf32> -> vector<8x32xf32>
    %c0_92 = arith.constant 0 : index
    %c0_93 = arith.constant 0 : index
    %c0_94 = arith.constant 0 : index
    %280 = vector.load %arg10[%c0_92, %c0_93, %c0_94] : memref<1x8x32xf32, #tpu.memory_space<vmem>>, vector<1x8x32xf32>
    %281 = vector.shape_cast %280 : vector<1x8x32xf32> to vector<8x32xf32>
    %282 = vector.shape_cast %279 : vector<8x32xf32> to vector<1x8x32xf32>
    tpu.vector_store %arg10[%c0_92, %c0_93, %c0_94], %282 {strides = array<i32>} : memref<1x8x32xf32, #tpu.memory_space<vmem>>, vector<1x8x32xf32>,
    return
  }
  func.func @transform_0(%arg0: i32) -> (i32, i32, i32) {
    %c0_i32 = arith.constant 0 : i32
    %c0_i32_0 = arith.constant 0 : i32
    %c0_i32_1 = arith.constant 0 : i32
    return %arg0, %c0_i32, %c0_i32_0 : i32, i32, i32
  }
  func.func @transform_1(%arg0: i32) -> (i32, i32) {
    %c0_i32 = arith.constant 0 : i32
    %c0_i32_0 = arith.constant 0 : i32
    %c0_i32_1 = arith.constant 0 : i32
    return %c0_i32, %c0_i32_0 : i32, i32
  }
  func.func @transform_2(%arg0: i32) -> (i32, i32) {
    %c0_i32 = arith.constant 0 : i32
    %c0_i32_0 = arith.constant 0 : i32
    %c0_i32_1 = arith.constant 0 : i32
    return %c0_i32, %c0_i32_0 : i32, i32
  }
  func.func @transform_3(%arg0: i32) -> (i32, i32) {
    %c0_i32 = arith.constant 0 : i32
    %c0_i32_0 = arith.constant 0 : i32
    %c0_i32_1 = arith.constant 0 : i32
    return %c0_i32, %c0_i32_0 : i32, i32
  }
  func.func @transform_4(%arg0: i32) -> (i32, i32) {
    %c0_i32 = arith.constant 0 : i32
    %c0_i32_0 = arith.constant 0 : i32
    %c0_i32_1 = arith.constant 0 : i32
    return %c0_i32, %c0_i32_0 : i32, i32
  }
  func.func @transform_5(%arg0: i32) -> (i32, i32) {
    %c0_i32 = arith.constant 0 : i32
    %c0_i32_0 = arith.constant 0 : i32
    %c0_i32_1 = arith.constant 0 : i32
    return %c0_i32, %c0_i32_0 : i32, i32
  }
  func.func @transform_6(%arg0: i32) -> (i32, i32) {
    %c0_i32 = arith.constant 0 : i32
    %c0_i32_0 = arith.constant 0 : i32
    %c0_i32_1 = arith.constant 0 : i32
    return %c0_i32, %c0_i32_0 : i32, i32
  }
  func.func @transform_7(%arg0: i32) -> (i32, i32) {
    %c0_i32 = arith.constant 0 : i32
    %c0_i32_0 = arith.constant 0 : i32
    %c0_i32_1 = arith.constant 0 : i32
    return %c0_i32, %c0_i32_0 : i32, i32
  }
  func.func @transform_8(%arg0: i32) -> (i32, i32) {
    %c0_i32 = arith.constant 0 : i32
    %c0_i32_0 = arith.constant 0 : i32
    %c0_i32_1 = arith.constant 0 : i32
    return %c0_i32, %c0_i32_0 : i32, i32
  }
  func.func @transform_9(%arg0: i32) -> (i32, i32, i32) {
    %c0_i32 = arith.constant 0 : i32
    %c0_i32_0 = arith.constant 0 : i32
    %c0_i32_1 = arith.constant 0 : i32
    return %arg0, %c0_i32, %c0_i32_0 : i32, i32, i32
  }
}

</mosaic_0001>

<llo_original>
// kernel: tpu_custom_call.1
$region0: #{tpu_custom_call.1}
  #allocation0 [shape = 'u32[]', space=smem, size = 0x4, offset = 0x4, fixed_abs, tag = 'smem constant byte address 0x4 - core index']
  #allocation1 [shape = 'u32[144,128]{1,0:T(1,128)}', space=vmem, size = 0x12000, scoped, tag = 'internal scratch']
  %s0 = inlined_call_operand.hbm [shape: f32[2,16,32], index: 0, kind: input, shape index: {}]
  %s1 = inlined_call_operand.hbm [shape: f32[16,32], index: 1, kind: input, shape index: {}]
  %s2 = inlined_call_operand.hbm [shape: f32[32,32], index: 2, kind: input, shape index: {}]
  %s3 = inlined_call_operand.hbm [shape: f32[32,32], index: 3, kind: input, shape index: {}]
  %s4 = inlined_call_operand.hbm [shape: f32[32,32], index: 4, kind: input, shape index: {}]
  %s5 = inlined_call_operand.hbm [shape: f32[32,32], index: 5, kind: input, shape index: {}]
  %s6 = inlined_call_operand.vmem [shape: f32[1,32], index: 6, kind: input, shape index: {}]
  %s7 = inlined_call_operand.vmem [shape: f32[1,32], index: 7, kind: input, shape index: {}]
  %s8 = inlined_call_operand.vmem [shape: f32[8,16], index: 8, kind: input, shape index: {}]
  %s9 = inlined_call_operand.hbm [shape: f32[2,8,32], index: 9, kind: output, shape index: {}]
  %s10 = sld [smem:[#allocation0]]
  $region93: #{tpu_custom_call.1} parent=0
    _
  %s12 = ssub.s32 1, %s10
  %s13 = scalar_select 0, %s12, %s10
  $region1: #{tpu_custom_call.1} parent=0
    #allocation2 [shape = 'u8[16384]{0}', space=vmem, size = 0x4000, scoped, tag = 'input window, operand 0']
    #allocation3 [shape = 's32[2]{0}', space=sflag, size = 0x8, scoped, tag = 'scoped memory for tpu_custom_call.1']
    #allocation4 [shape = 's32[2]{0}', space=sflag, size = 0x8, scoped, tag = 'scoped memory for tpu_custom_call.1']
    #allocation5 [shape = 'u8[8192]{0}', space=vmem, size = 0x2000, scoped, tag = 'input window, operand 1, single buffered']
    #allocation6 [shape = 's32[1]{0}', space=sflag, size = 0x4, scoped, tag = 'scoped memory for tpu_custom_call.1']
    #allocation7 [shape = 'u8[16384]{0}', space=vmem, size = 0x4000, scoped, tag = 'input window, operand 2, single buffered']
    #allocation8 [shape = 'u8[16384]{0}', space=vmem, size = 0x4000, scoped, tag = 'input window, operand 3, single buffered']
    #allocation9 [shape = 's32[1]{0}', space=sflag, size = 0x4, scoped, tag = 'scoped memory for tpu_custom_call.1']
    #allocation10 [shape = 'u8[16384]{0}', space=vmem, size = 0x4000, scoped, tag = 'input window, operand 4, single buffered']
    #allocation11 [shape = 'u8[16384]{0}', space=vmem, size = 0x4000, scoped, tag = 'input window, operand 5, single buffered']
    #allocation12 [shape = 's32[1]{0}', space=sflag, size = 0x4, scoped, tag = 'scoped memory for tpu_custom_call.1']
    #allocation13 [shape = 'u8[8192]{0}', space=vmem, size = 0x2000, scoped, tag = 'output window, operand 0']
    %14 = vsyncpa [#allocation3], 0
    %s15 = scalar_lea.sflag [#allocation3], 1
    %16 = vsyncpa %s15, 0
    %17 = vsyncpa [#allocation6], 0
    %18 = vsyncpa [#allocation9], 0
    %19 = vsyncpa [#allocation12], 0
    %20 = vsyncpa [#allocation4], 0
    %s21 = scalar_lea.sflag [#allocation4], 1
    %22 = vsyncpa %s21, 0
    loop: start=0, step=1, limit=4
    $region2: #{tpu_custom_call.1} parent=1 // loop_pre_header
      _
    $region3: #{tpu_custom_call.1} parent=1 // loop_header
      %s24 = sphi 0, %s28
      %p25 = scmp.ge.s32.totalorder %s24, 4
      %s34 = sphi 0, %s36
      %s37 = sphi 0, %s34
      %s38 = sphi 0, %s37
      %s54 = sphi 0, %s38
      %s58 = sphi 0, %s58
      %s60 = sphi 0, %s58
      %s61 = sphi 0, %s60
      %s75 = sphi 0, %s61
      %s79 = sphi 0, %s79
      %s81 = sphi 0, %s79
      %s82 = sphi 0, %s81
      %s96 = sphi 0, %s82
      %s100 = sphi 0, %s100
      %s102 = sphi 0, %s100
      %s103 = sphi 0, %s102
      %s117 = sphi 0, %s103
      %s121 = sphi 0, %s121
      %s123 = sphi 0, %s121
      %s124 = sphi 0, %s123
      %s138 = sphi 0, %s124
      %s142 = sphi 0, %s142
      %s144 = sphi 0, %s142
      %s145 = sphi 0, %s144
      %s159 = sphi 0, %s145
      %s163 = sphi 0, %s163
      %s165 = sphi 0, %s163
      %s166 = sphi 0, %s165
      %s180 = sphi 0, %s166
      %s184 = sphi 0, %s184
      %s186 = sphi 0, %s184
      %s187 = sphi 0, %s186
      %s201 = sphi 0, %s187
      %s205 = sphi 0, %s205
      %s207 = sphi 0, %s205
      %s208 = sphi 0, %s207
      %s222 = sphi 0, %s208
      %s228 = sphi 0, %s230
      %s231 = sphi 0, %s228
      %s232 = sphi 0, %s231
      %s248 = sphi 0, %s232
    $region4: #{tpu_custom_call.1} parent=1 // loop_header_branch
      %27 = sbr.rel (%p25) target = $region8
    $region5: #{tpu_custom_call.1} parent=1 // loop_body
      %s29 = ssub.s32 %s24, 1
      %s30 = ssub.s32 %s24, 2
      %s31 = sadd.s32 %s24, 1
      %s32 = ssub.s32 %s24, %s31
      %p33 = scmp.eq.s32.totalorder %s32, 0
      %s35 = sadd.s32 %s34, 1
      %s36 = scalar_select %p33, %s34, %s35
      %p39 = pneg %p33
      %p40 = scmp.eq.s32.totalorder %s24, 1
      %p41 = por %p39, %p40
      %p42 = scmp.ne.s32.totalorder %s34, %s37
      %p43 = scmp.eq.s32.totalorder %s24, 0
      %p44 = por %p42, %p43
      %p45 = scmp.ne.s32.totalorder %s34, %s37
      %p46 = scmp.eq.s32.totalorder %s29, 1
      %p47 = por %p45, %p46
      %p48 = scmp.ne.s32.totalorder %s37, %s38
      %p49 = scmp.eq.s32.totalorder %s29, 0
      %p50 = por %p48, %p49
      %p51 = scmp.ne.s32.totalorder %s37, %s38
      %p52 = scmp.eq.s32.totalorder %s30, 1
      %p53 = por %p51, %p52
      %p55 = scmp.ne.s32.totalorder %s38, %s54
      %p56 = scmp.eq.s32.totalorder %s30, 0
      %p57 = por %p55, %p56
      %s59 = sadd.s32 %s58, 1
      %p62 = scmp.eq.s32.totalorder %s24, 1
      %p63 = scmp.ne.s32.totalorder %s58, %s60
      %p64 = scmp.eq.s32.totalorder %s24, 0
      %p65 = por %p63, %p64
      %p66 = scmp.ne.s32.totalorder %s58, %s60
      %p67 = scmp.eq.s32.totalorder %s29, 1
      %p68 = por %p66, %p67
      %p69 = scmp.ne.s32.totalorder %s60, %s61
      %p70 = scmp.eq.s32.totalorder %s29, 0
      %p71 = por %p69, %p70
      %p72 = scmp.ne.s32.totalorder %s60, %s61
      %p73 = scmp.eq.s32.totalorder %s30, 1
      %p74 = por %p72, %p73
      %p76 = scmp.ne.s32.totalorder %s61, %s75
      %p77 = scmp.eq.s32.totalorder %s30, 0
      %p78 = por %p76, %p77
      %s80 = sadd.s32 %s79, 1
      %p83 = scmp.eq.s32.totalorder %s24, 1
      %p84 = scmp.ne.s32.totalorder %s79, %s81
      %p85 = scmp.eq.s32.totalorder %s24, 0
      %p86 = por %p84, %p85
      %p87 = scmp.ne.s32.totalorder %s79, %s81
      %p88 = scmp.eq.s32.totalorder %s29, 1
      %p89 = por %p87, %p88
      %p90 = scmp.ne.s32.totalorder %s81, %s82
      %p91 = scmp.eq.s32.totalorder %s29, 0
      %p92 = por %p90, %p91
      %p93 = scmp.ne.s32.totalorder %s81, %s82
      %p94 = scmp.eq.s32.totalorder %s30, 1
      %p95 = por %p93, %p94
      %p97 = scmp.ne.s32.totalorder %s82, %s96
      %p98 = scmp.eq.s32.totalorder %s30, 0
      %p99 = por %p97, %p98
      %s101 = sadd.s32 %s100, 1
      %p104 = scmp.eq.s32.totalorder %s24, 1
      %p105 = scmp.ne.s32.totalorder %s100, %s102
      %p106 = scmp.eq.s32.totalorder %s24, 0
      %p107 = por %p105, %p106
      %p108 = scmp.ne.s32.totalorder %s100, %s102
      %p109 = scmp.eq.s32.totalorder %s29, 1
      %p110 = por %p108, %p109
      %p111 = scmp.ne.s32.totalorder %s102, %s103
      %p112 = scmp.eq.s32.totalorder %s29, 0
      %p113 = por %p111, %p112
      %p114 = scmp.ne.s32.totalorder %s102, %s103
      %p115 = scmp.eq.s32.totalorder %s30, 1
      %p116 = por %p114, %p115
      %p118 = scmp.ne.s32.totalorder %s103, %s117
      %p119 = scmp.eq.s32.totalorder %s30, 0
      %p120 = por %p118, %p119
      %s122 = sadd.s32 %s121, 1
      %p125 = scmp.eq.s32.totalorder %s24, 1
      %p126 = scmp.ne.s32.totalorder %s121, %s123
      %p127 = scmp.eq.s32.totalorder %s24, 0
      %p128 = por %p126, %p127
      %p129 = scmp.ne.s32.totalorder %s121, %s123
      %p130 = scmp.eq.s32.totalorder %s29, 1
      %p131 = por %p129, %p130
      %p132 = scmp.ne.s32.totalorder %s123, %s124
      %p133 = scmp.eq.s32.totalorder %s29, 0
      %p134 = por %p132, %p133
      %p135 = scmp.ne.s32.totalorder %s123, %s124
      %p136 = scmp.eq.s32.totalorder %s30, 1
      %p137 = por %p135, %p136
      %p139 = scmp.ne.s32.totalorder %s124, %s138
      %p140 = scmp.eq.s32.totalorder %s30, 0
      %p141 = por %p139, %p140
      %s143 = sadd.s32 %s142, 1
      %p146 = scmp.eq.s32.totalorder %s24, 1
      %p147 = scmp.ne.s32.totalorder %s142, %s144
      %p148 = scmp.eq.s32.totalorder %s24, 0
      %p149 = por %p147, %p148
      %p150 = scmp.ne.s32.totalorder %s142, %s144
      %p151 = scmp.eq.s32.totalorder %s29, 1
      %p152 = por %p150, %p151
      %p153 = scmp.ne.s32.totalorder %s144, %s145
      %p154 = scmp.eq.s32.totalorder %s29, 0
      %p155 = por %p153, %p154
      %p156 = scmp.ne.s32.totalorder %s144, %s145
      %p157 = scmp.eq.s32.totalorder %s30, 1
      %p158 = por %p156, %p157
      %p160 = scmp.ne.s32.totalorder %s145, %s159
      %p161 = scmp.eq.s32.totalorder %s30, 0
      %p162 = por %p160, %p161
      %s164 = sadd.s32 %s163, 1
      %p167 = scmp.eq.s32.totalorder %s24, 1
      %p168 = scmp.ne.s32.totalorder %s163, %s165
      %p169 = scmp.eq.s32.totalorder %s24, 0
      %p170 = por %p168, %p169
      %p171 = scmp.ne.s32.totalorder %s163, %s165
      %p172 = scmp.eq.s32.totalorder %s29, 1
      %p173 = por %p171, %p172
      %p174 = scmp.ne.s32.totalorder %s165, %s166
      %p175 = scmp.eq.s32.totalorder %s29, 0
      %p176 = por %p174, %p175
      %p177 = scmp.ne.s32.totalorder %s165, %s166
      %p178 = scmp.eq.s32.totalorder %s30, 1
      %p179 = por %p177, %p178
      %p181 = scmp.ne.s32.totalorder %s166, %s180
      %p182 = scmp.eq.s32.totalorder %s30, 0
      %p183 = por %p181, %p182
      %s185 = sadd.s32 %s184, 1
      %p188 = scmp.eq.s32.totalorder %s24, 1
      %p189 = scmp.ne.s32.totalorder %s184, %s186
      %p190 = scmp.eq.s32.totalorder %s24, 0
      %p191 = por %p189, %p190
      %p192 = scmp.ne.s32.totalorder %s184, %s186
      %p193 = scmp.eq.s32.totalorder %s29, 1
      %p194 = por %p192, %p193
      %p195 = scmp.ne.s32.totalorder %s186, %s187
      %p196 = scmp.eq.s32.totalorder %s29, 0
      %p197 = por %p195, %p196
      %p198 = scmp.ne.s32.totalorder %s186, %s187
      %p199 = scmp.eq.s32.totalorder %s30, 1
      %p200 = por %p198, %p199
      %p202 = scmp.ne.s32.totalorder %s187, %s201
      %p203 = scmp.eq.s32.totalorder %s30, 0
      %p204 = por %p202, %p203
      %s206 = sadd.s32 %s205, 1
      %p209 = scmp.eq.s32.totalorder %s24, 1
      %p210 = scmp.ne.s32.totalorder %s205, %s207
      %p211 = scmp.eq.s32.totalorder %s24, 0
      %p212 = por %p210, %p211
      %p213 = scmp.ne.s32.totalorder %s205, %s207
      %p214 = scmp.eq.s32.totalorder %s29, 1
      %p215 = por %p213, %p214
      %p216 = scmp.ne.s32.totalorder %s207, %s208
      %p217 = scmp.eq.s32.totalorder %s29, 0
      %p218 = por %p216, %p217
      %p219 = scmp.ne.s32.totalorder %s207, %s208
      %p220 = scmp.eq.s32.totalorder %s30, 1
      %p221 = por %p219, %p220
      %p223 = scmp.ne.s32.totalorder %s208, %s222
      %p224 = scmp.eq.s32.totalorder %s30, 0
      %p225 = por %p223, %p224
      %s226 = ssub.s32 %s24, %s31
      %p227 = scmp.eq.s32.totalorder %s226, 0
      %s229 = sadd.s32 %s228, 1
      %s230 = scalar_select %p227, %s228, %s229
      %p233 = pneg %p227
      %p234 = scmp.eq.s32.totalorder %s24, 1
      %p235 = por %p233, %p234
      %p236 = scmp.ne.s32.totalorder %s228, %s231
      %p237 = scmp.eq.s32.totalorder %s24, 0
      %p238 = por %p236, %p237
      %p239 = scmp.ne.s32.totalorder %s228, %s231
      %p240 = scmp.eq.s32.totalorder %s29, 1
      %p241 = por %p239, %p240
      %p242 = scmp.ne.s32.totalorder %s231, %s232
      %p243 = scmp.eq.s32.totalorder %s29, 0
      %p244 = por %p242, %p243
      %p245 = scmp.ne.s32.totalorder %s231, %s232
      %p246 = scmp.eq.s32.totalorder %s30, 1
      %p247 = por %p245, %p246
      %p249 = scmp.ne.s32.totalorder %s232, %s248
      %p250 = scmp.eq.s32.totalorder %s30, 0
      %p251 = por %p249, %p250
      %p252 = scmp.le.s32.totalorder 1, %s24
      %p253 = scmp.lt.s32.totalorder %s24, 3
      %p254 = pnand %p252, %p253
      %p255 = pneg %p254
      // Predicated region
      $region9: #{tpu_custom_call.1} parent=5 // pred_check
        _
      $region10: #{tpu_custom_call.1} parent=5 // pred_check_branch
        %257 = sbr.rel (%p254) target = $region12
      $region11: #{tpu_custom_call.1} parent=5 // pred_region
        %s258 = ssub.s32 %s24, 1
        // Predicated region
        $region13: #{tpu_custom_call.1} parent=11 // pred_check
          %p259 = pneg %p71
        $region14: #{tpu_custom_call.1} parent=11 // pred_check_branch
          %261 = sbr.rel (%p259) target = $region16
        $region15: #{tpu_custom_call.1} parent=11 // pred_region
          %s263 = ssub.s32 256, 256
          %264 = vsyncadd [#allocation6], %s263
          %s265 = sshll.u32 [#allocation5], 4
          %s266 = int_to_ptr.vmem [resolvable:$true] %s265
          %271 = dma.hbm_to_vmem [thread:$0]  %s1, 256, %s266, [#allocation6], 128, 128, 8
        $region16: #{tpu_custom_call.1} parent=11 // pred_fallthru
          _
        // Predicated region
        $region17: #{tpu_custom_call.1} parent=11 // pred_check
          %p272 = pneg %p92
        $region18: #{tpu_custom_call.1} parent=11 // pred_check_branch
          %274 = sbr.rel (%p272) target = $region20
        $region19: #{tpu_custom_call.1} parent=11 // pred_region
          %s276 = ssub.s32 512, 512
          %277 = vsyncadd [#allocation6], %s276
          %s278 = sshll.u32 [#allocation7], 4
          %s279 = int_to_ptr.vmem [resolvable:$true] %s278
          %284 = dma.hbm_to_vmem [thread:$0]  %s2, 512, %s279, [#allocation6], 128, 128, 8
        $region20: #{tpu_custom_call.1} parent=11 // pred_fallthru
          _
        // Predicated region
        $region21: #{tpu_custom_call.1} parent=11 // pred_check
          %p285 = pneg %p113
        $region22: #{tpu_custom_call.1} parent=11 // pred_check_branch
          %287 = sbr.rel (%p285) target = $region24
        $region23: #{tpu_custom_call.1} parent=11 // pred_region
          %s289 = ssub.s32 512, 512
          %290 = vsyncadd [#allocation9], %s289
          %s291 = sshll.u32 [#allocation8], 4
          %s292 = int_to_ptr.vmem [resolvable:$true] %s291
          %297 = dma.hbm_to_vmem [thread:$0]  %s3, 512, %s292, [#allocation9], 128, 128, 8
        $region24: #{tpu_custom_call.1} parent=11 // pred_fallthru
          _
        // Predicated region
        $region25: #{tpu_custom_call.1} parent=11 // pred_check
          %p298 = pneg %p134
        $region26: #{tpu_custom_call.1} parent=11 // pred_check_branch
          %300 = sbr.rel (%p298) target = $region28
        $region27: #{tpu_custom_call.1} parent=11 // pred_region
          %s302 = ssub.s32 512, 512
          %303 = vsyncadd [#allocation9], %s302
          %s304 = sshll.u32 [#allocation10], 4
          %s305 = int_to_ptr.vmem [resolvable:$true] %s304
          %310 = dma.hbm_to_vmem [thread:$0]  %s4, 512, %s305, [#allocation9], 128, 128, 8
        $region28: #{tpu_custom_call.1} parent=11 // pred_fallthru
          _
        // Predicated region
        $region29: #{tpu_custom_call.1} parent=11 // pred_check
          %p311 = pneg %p155
        $region30: #{tpu_custom_call.1} parent=11 // pred_check_branch
          %313 = sbr.rel (%p311) target = $region32
        $region31: #{tpu_custom_call.1} parent=11 // pred_region
          %s315 = ssub.s32 512, 512
          %316 = vsyncadd [#allocation12], %s315
          %s317 = sshll.u32 [#allocation11], 4
          %s318 = int_to_ptr.vmem [resolvable:$true] %s317
          %323 = dma.hbm_to_vmem [thread:$0]  %s5, 512, %s318, [#allocation12], 128, 128, 8
        $region32: #{tpu_custom_call.1} parent=11 // pred_fallthru
          _
        // Predicated region
        $region33: #{tpu_custom_call.1} parent=11 // pred_check
          %p324 = pneg %p176
        $region34: #{tpu_custom_call.1} parent=11 // pred_check_branch
          %326 = sbr.rel (%p324) target = $region36
        $region35: #{tpu_custom_call.1} parent=11 // pred_region
          _
        $region36: #{tpu_custom_call.1} parent=11 // pred_fallthru
          _
        // Predicated region
        $region37: #{tpu_custom_call.1} parent=11 // pred_check
          %p327 = pneg %p197
        $region38: #{tpu_custom_call.1} parent=11 // pred_check_branch
          %329 = sbr.rel (%p327) target = $region40
        $region39: #{tpu_custom_call.1} parent=11 // pred_region
          _
        $region40: #{tpu_custom_call.1} parent=11 // pred_fallthru
          _
        // Predicated region
        $region41: #{tpu_custom_call.1} parent=11 // pred_check
          %p330 = pneg %p218
        $region42: #{tpu_custom_call.1} parent=11 // pred_check_branch
          %332 = sbr.rel (%p330) target = $region44
        $region43: #{tpu_custom_call.1} parent=11 // pred_region
          _
        $region44: #{tpu_custom_call.1} parent=11 // pred_fallthru
          _
      $region12: #{tpu_custom_call.1} parent=5 // pred_fallthru
        _
      %p333 = scmp.lt.s32.totalorder %s24, 2
      // Predicated region
      $region45: #{tpu_custom_call.1} parent=5 // pred_check
        %p334 = pneg %p333
      $region46: #{tpu_custom_call.1} parent=5 // pred_check_branch
        %336 = sbr.rel (%p334) target = $region48
      $region47: #{tpu_custom_call.1} parent=5 // pred_region
        // Predicated region
        $region49: #{tpu_custom_call.1} parent=47 // pred_check
          %p337 = pneg %p44
        $region50: #{tpu_custom_call.1} parent=47 // pred_check_branch
          %339 = sbr.rel (%p337) target = $region52
        $region51: #{tpu_custom_call.1} parent=47 // pred_region
          %s340 = sand.u32 %s34, 1
          %s341 = scalar_lea.sflag [#allocation3], %s340
          %s342 = sand.u32 %s34, 1
          %s343 = smul.addr %s342, 16
          %s344 = scalar_lea.vmem [#allocation2], %s343
          %s346 = ssub.s32 256, 256
          %347 = vsyncadd %s341, %s346
          %s348 = smul.addr %s24, 2
          %s349 = smul.addr %s348, 128
          %s350 = scalar_lea.hbm %s0, %s349
          %s351 = sshll.u32 %s344, 4
          %s352 = int_to_ptr.vmem [resolvable:$true] %s351
          %357 = dma.hbm_to_vmem [thread:$0]  %s350, 256, %s352, %s341, 128, 128, 8
        $region52: #{tpu_custom_call.1} parent=47 // pred_fallthru
          _
      $region48: #{tpu_custom_call.1} parent=5 // pred_fallthru
        _
      %p358 = scmp.le.s32.totalorder 1, %s24
      %p359 = scmp.lt.s32.totalorder %s24, 3
      %p360 = pnand %p358, %p359
      %p361 = pneg %p360
      // Predicated region
      $region53: #{tpu_custom_call.1} parent=5 // pred_check
        _
      $region54: #{tpu_custom_call.1} parent=5 // pred_check_branch
        %363 = sbr.rel (%p360) target = $region56
      $region55: #{tpu_custom_call.1} parent=5 // pred_region
        %s364 = ssub.s32 %s24, 1
        %s365 = sand.u32 %s37, 1
        %s366 = scalar_lea.sflag [#allocation3], %s365
        %s367 = sand.u32 %s37, 1
        %s368 = smul.addr %s367, 16
        %s369 = scalar_lea.vmem [#allocation2], %s368
        // Predicated region
        $region57: #{tpu_custom_call.1} parent=55 // pred_check
          %p370 = pneg %p50
        $region58: #{tpu_custom_call.1} parent=55 // pred_check_branch
          %372 = sbr.rel (%p370) target = $region60
        $region59: #{tpu_custom_call.1} parent=55 // pred_region
          %373 = dma.done %s366, 256
        $region60: #{tpu_custom_call.1} parent=55 // pred_fallthru
          _
        // Predicated region
        $region61: #{tpu_custom_call.1} parent=55 // pred_check
          %p374 = pneg %p71
        $region62: #{tpu_custom_call.1} parent=55 // pred_check_branch
          %376 = sbr.rel (%p374) target = $region64
        $region63: #{tpu_custom_call.1} parent=55 // pred_region
          %377 = dma.done [#allocation6], 256
        $region64: #{tpu_custom_call.1} parent=55 // pred_fallthru
          _
        // Predicated region
        $region65: #{tpu_custom_call.1} parent=55 // pred_check
          %p378 = pneg %p92
        $region66: #{tpu_custom_call.1} parent=55 // pred_check_branch
          %380 = sbr.rel (%p378) target = $region68
        $region67: #{tpu_custom_call.1} parent=55 // pred_region
          %381 = dma.done [#allocation6], 512
        $region68: #{tpu_custom_call.1} parent=55 // pred_fallthru
          _
        // Predicated region
        $region69: #{tpu_custom_call.1} parent=55 // pred_check
          %p382 = pneg %p113
        $region70: #{tpu_custom_call.1} parent=55 // pred_check_branch
          %384 = sbr.rel (%p382) target = $region72
        $region71: #{tpu_custom_call.1} parent=55 // pred_region
          %385 = dma.done [#allocation9], 512
        $region72: #{tpu_custom_call.1} parent=55 // pred_fallthru
          _
        // Predicated region
        $region73: #{tpu_custom_call.1} parent=55 // pred_check
          %p386 = pneg %p134
        $region74: #{tpu_custom_call.1} parent=55 // pred_check_branch
          %388 = sbr.rel (%p386) target = $region76
        $region75: #{tpu_custom_call.1} parent=55 // pred_region
          %389 = dma.done [#allocation9], 512
        $region76: #{tpu_custom_call.1} parent=55 // pred_fallthru
          _
        // Predicated region
        $region77: #{tpu_custom_call.1} parent=55 // pred_check
          %p390 = pneg %p155
        $region78: #{tpu_custom_call.1} parent=55 // pred_check_branch
          %392 = sbr.rel (%p390) target = $region80
        $region79: #{tpu_custom_call.1} parent=55 // pred_region
          %393 = dma.done [#allocation12], 512
        $region80: #{tpu_custom_call.1} parent=55 // pred_fallthru
          _
        %s394 = sand.u32 %s37, 1
        %s395 = scalar_lea.sflag [#allocation3], %s394
        %s396 = sand.u32 %s37, 1
        %s397 = smul.addr %s396, 16
        %s398 = scalar_lea.vmem [#allocation2], %s397
        %p399 = pneg %p50
        %p400 = pneg %p47
        %p401 = pneg %p71
        %p402 = pneg %p68
        %p403 = pneg %p92
        %p404 = pneg %p89
        %p405 = pneg %p113
        %p406 = pneg %p110
        %p407 = pneg %p134
        %p408 = pneg %p131
        %p409 = pneg %p155
        %p410 = pneg %p152
        %p411 = pneg %p176
        %p412 = pneg %p173
        %p413 = pneg %p197
        %p414 = pneg %p194
        %p415 = pneg %p218
        %p416 = pneg %p215
        %p417 = pneg %p244
        %p418 = pneg %p241
        %s419 = sand.u32 %s231, 1
        %s420 = scalar_lea.sflag [#allocation4], %s419
        %s421 = sand.u32 %s231, 1
        %s422 = smul.addr %s421, 8
        %s423 = scalar_lea.vmem [#allocation13], %s422
        %v424 = vld [vmem:[%s369] sm:$0xff]
        %v425 = vld [vmem:[%s369 + $0x8] sm:$0xff]
        %v426 = vld [vmem:[#allocation7] sm:$0xff]
        %v427 = vld [vmem:[#allocation7 + $0x8] sm:$0xff]
        %v428 = vld [vmem:[#allocation7 + $0x10] sm:$0xff]
        %v429 = vld [vmem:[#allocation7 + $0x18] sm:$0xff]
        %vm430 = vcmask 261120
        %v432 = vsel %vm430, %v425, 0
        %434 = vmatprep.subr.mxu0 0.0
        %435 = vmatpush1.msra.mxu0 0.0
        %436 = vmatprep.subr.mxu0 0.0
        %437 = vmatpush1.msra.mxu0 0.0
        %438 = vmatprep.subr.mxu0 0.0
        %439 = vmatpush1.msra.mxu0 0.0
        %440 = vmatprep.subr.mxu0 0.0
        %441 = vmatpush1.msra.mxu0 0.0
        %442 = vmatprep.subr.mxu0 0.0
        %443 = vmatpush1.msra.mxu0 0.0
        %444 = vmatprep.subr.mxu0 0.0
        %445 = vmatpush1.msra.mxu0 0.0
        %446 = vmatprep.subr.mxu0 0.0
        %447 = vmatpush1.msra.mxu0 0.0
        %448 = vmatprep.subr.mxu0 0.0
        %449 = vmatpush1.msra.mxu0 0.0
        %450 = vmatprep.subr.mxu0 0.0
        %451 = vmatpush1.msra.mxu0 0.0
        %452 = vmatprep.subr.mxu0 0.0
        %453 = vmatpush1.msra.mxu0 0.0
        %454 = vmatprep.subr.mxu0 0.0
        %455 = vmatpush1.msra.mxu0 0.0
        %456 = vmatprep.subr.mxu0 0.0
        %457 = vmatpush1.msra.mxu0 0.0
        %458 = vmatprep.subr.mxu0 0.0
        %459 = vmatpush1.msra.mxu0 %v429
        %460 = vmatprep.subr.mxu0 0.0
        %461 = vmatpush1.msra.mxu0 %v428
        %462 = vmatprep.subr.mxu0 0.0
        %463 = vmatpush1.msra.mxu0 %v427
        %464 = vmatprep.subr.mxu0 0.0
        %465 = vmatpush1.msra.mxu0 %v426
        %466 = vmatprep.subr.mxu0 0.0
        %467 = vmatpush2.msra.mxu0 0.0
        %468 = vmatprep.subr.mxu0 0.0
        %469 = vmatpush2.msra.mxu0 0.0
        %470 = vmatprep.subr.mxu0 0.0
        %471 = vmatpush2.msra.mxu0 0.0
        %472 = vmatprep.subr.mxu0 0.0
        %473 = vmatpush2.msra.mxu0 0.0
        %474 = vmatprep.subr.mxu0 0.0
        %475 = vmatpush2.msra.mxu0 0.0
        %476 = vmatprep.subr.mxu0 0.0
        %477 = vmatpush2.msra.mxu0 0.0
        %478 = vmatprep.subr.mxu0 0.0
        %479 = vmatpush2.msra.mxu0 0.0
        %480 = vmatprep.subr.mxu0 0.0
        %481 = vmatpush2.msra.mxu0 0.0
        %482 = vmatprep.subr.mxu0 0.0
        %483 = vmatpush2.msra.mxu0 0.0
        %484 = vmatprep.subr.mxu0 0.0
        %485 = vmatpush2.msra.mxu0 0.0
        %486 = vmatprep.subr.mxu0 0.0
        %487 = vmatpush2.msra.mxu0 0.0
        %488 = vmatprep.subr.mxu0 0.0
        %489 = vmatpush2.msra.mxu0 0.0
        %490 = vmatprep.subr.mxu0 0.0
        %491 = vmatpush2.msra.mxu0 0.0
        %492 = vmatprep.subr.mxu0 0.0
        %493 = vmatpush2.msra.mxu0 0.0
        %494 = vmatprep.subr.mxu0 0.0
        %495 = vmatpush2.msra.mxu0 0.0
        %496 = vmatprep.subr.mxu0 0.0
        %497 = vmatpush2.msra.mxu0 0.0
        %498 = vmatprep.mubr.f32.mxu0 0.0
        %499 = vmatmul.mubr.f32.gmra.mxu0 %v432
        %v500 = vpop.f32.mrf.mxu0
        %v501 = vadd.f32 0.0, %v500
        %v502 = vpop.f32.mrf.mxu0
        %503 = vdwg.mxu0
        %v504 = vld [vmem:[#allocation8] sm:$0xff]
        %v505 = vld [vmem:[#allocation8 + $0x8] sm:$0xff]
        %v506 = vld [vmem:[#allocation8 + $0x10] sm:$0xff]
        %v507 = vld [vmem:[#allocation8 + $0x18] sm:$0xff]
        %v509 = vsel %vm430, %v424, 0
        %511 = vmatprep.subr.mxu0 0.0
        %512 = vmatpush1.msra.mxu0 0.0
        %513 = vmatprep.subr.mxu0 0.0
        %514 = vmatpush1.msra.mxu0 0.0
        %515 = vmatprep.subr.mxu0 0.0
        %516 = vmatpush1.msra.mxu0 0.0
        %517 = vmatprep.subr.mxu0 0.0
        %518 = vmatpush1.msra.mxu0 0.0
        %519 = vmatprep.subr.mxu0 0.0
        %520 = vmatpush1.msra.mxu0 0.0
        %521 = vmatprep.subr.mxu0 0.0
        %522 = vmatpush1.msra.mxu0 0.0
        %523 = vmatprep.subr.mxu0 0.0
        %524 = vmatpush1.msra.mxu0 0.0
        %525 = vmatprep.subr.mxu0 0.0
        %526 = vmatpush1.msra.mxu0 0.0
        %527 = vmatprep.subr.mxu0 0.0
        %528 = vmatpush1.msra.mxu0 0.0
        %529 = vmatprep.subr.mxu0 0.0
        %530 = vmatpush1.msra.mxu0 0.0
        %531 = vmatprep.subr.mxu0 0.0
        %532 = vmatpush1.msra.mxu0 0.0
        %533 = vmatprep.subr.mxu0 0.0
        %534 = vmatpush1.msra.mxu0 0.0
        %535 = vmatprep.subr.mxu0 0.0
        %536 = vmatpush1.msra.mxu0 %v507
        %537 = vmatprep.subr.mxu0 0.0
        %538 = vmatpush1.msra.mxu0 %v506
        %539 = vmatprep.subr.mxu0 0.0
        %540 = vmatpush1.msra.mxu0 %v505
        %541 = vmatprep.subr.mxu0 0.0
        %542 = vmatpush1.msra.mxu0 %v504
        %543 = vmatprep.subr.mxu0 0.0
        %544 = vmatpush2.msra.mxu0 0.0
        %545 = vmatprep.subr.mxu0 0.0
        %546 = vmatpush2.msra.mxu0 0.0
        %547 = vmatprep.subr.mxu0 0.0
        %548 = vmatpush2.msra.mxu0 0.0
        %549 = vmatprep.subr.mxu0 0.0
        %550 = vmatpush2.msra.mxu0 0.0
        %551 = vmatprep.subr.mxu0 0.0
        %552 = vmatpush2.msra.mxu0 0.0
        %553 = vmatprep.subr.mxu0 0.0
        %554 = vmatpush2.msra.mxu0 0.0
        %555 = vmatprep.subr.mxu0 0.0
        %556 = vmatpush2.msra.mxu0 0.0
        %557 = vmatprep.subr.mxu0 0.0
        %558 = vmatpush2.msra.mxu0 0.0
        %559 = vmatprep.subr.mxu0 0.0
        %560 = vmatpush2.msra.mxu0 0.0
        %561 = vmatprep.subr.mxu0 0.0
        %562 = vmatpush2.msra.mxu0 0.0
        %563 = vmatprep.subr.mxu0 0.0
        %564 = vmatpush2.msra.mxu0 0.0
        %565 = vmatprep.subr.mxu0 0.0
        %566 = vmatpush2.msra.mxu0 0.0
        %567 = vmatprep.subr.mxu0 0.0
        %568 = vmatpush2.msra.mxu0 0.0
        %569 = vmatprep.subr.mxu0 0.0
        %570 = vmatpush2.msra.mxu0 0.0
        %571 = vmatprep.subr.mxu0 0.0
        %572 = vmatpush2.msra.mxu0 0.0
        %573 = vmatprep.subr.mxu0 0.0
        %574 = vmatpush2.msra.mxu0 0.0
        %575 = vmatprep.mubr.f32.mxu0 0.0
        %576 = vmatmul.mubr.f32.gmra.mxu0 %v509
        %v577 = vpop.f32.mrf.mxu0
        %v578 = vadd.f32 0.0, %v577
        %v579 = vpop.f32.mrf.mxu0
        %580 = vmatprep.mubr.f32.mxu0 0.0
        %581 = vmatmul.mubr.f32.gmra.mxu0 %v432
        %v582 = vpop.f32.mrf.mxu0
        %v583 = vadd.f32 0.0, %v582
        %v584 = vpop.f32.mrf.mxu0
        %585 = vdwg.mxu0
        %v586 = vld [vmem:[#allocation10] sm:$0xff]
        %v587 = vld [vmem:[#allocation10 + $0x8] sm:$0xff]
        %v588 = vld [vmem:[#allocation10 + $0x10] sm:$0xff]
        %v589 = vld [vmem:[#allocation10 + $0x18] sm:$0xff]
        %590 = vmatprep.subr.mxu0 0.0
        %591 = vmatpush1.msra.mxu0 0.0
        %592 = vmatprep.subr.mxu0 0.0
        %593 = vmatpush1.msra.mxu0 0.0
        %594 = vmatprep.subr.mxu0 0.0
        %595 = vmatpush1.msra.mxu0 0.0
        %596 = vmatprep.subr.mxu0 0.0
        %597 = vmatpush1.msra.mxu0 0.0
        %598 = vmatprep.subr.mxu0 0.0
        %599 = vmatpush1.msra.mxu0 0.0
        %600 = vmatprep.subr.mxu0 0.0
        %601 = vmatpush1.msra.mxu0 0.0
        %602 = vmatprep.subr.mxu0 0.0
        %603 = vmatpush1.msra.mxu0 0.0
        %604 = vmatprep.subr.mxu0 0.0
        %605 = vmatpush1.msra.mxu0 0.0
        %606 = vmatprep.subr.mxu0 0.0
        %607 = vmatpush1.msra.mxu0 0.0
        %608 = vmatprep.subr.mxu0 0.0
        %609 = vmatpush1.msra.mxu0 0.0
        %610 = vmatprep.subr.mxu0 0.0
        %611 = vmatpush1.msra.mxu0 0.0
        %612 = vmatprep.subr.mxu0 0.0
        %613 = vmatpush1.msra.mxu0 0.0
        %614 = vmatprep.subr.mxu0 0.0
        %615 = vmatpush1.msra.mxu0 %v589
        %616 = vmatprep.subr.mxu0 0.0
        %617 = vmatpush1.msra.mxu0 %v588
        %618 = vmatprep.subr.mxu0 0.0
        %619 = vmatpush1.msra.mxu0 %v587
        %620 = vmatprep.subr.mxu0 0.0
        %621 = vmatpush1.msra.mxu0 %v586
        %622 = vmatprep.subr.mxu0 0.0
        %623 = vmatpush2.msra.mxu0 0.0
        %624 = vmatprep.subr.mxu0 0.0
        %625 = vmatpush2.msra.mxu0 0.0
        %626 = vmatprep.subr.mxu0 0.0
        %627 = vmatpush2.msra.mxu0 0.0
        %628 = vmatprep.subr.mxu0 0.0
        %629 = vmatpush2.msra.mxu0 0.0
        %630 = vmatprep.subr.mxu0 0.0
        %631 = vmatpush2.msra.mxu0 0.0
        %632 = vmatprep.subr.mxu0 0.0
        %633 = vmatpush2.msra.mxu0 0.0
        %634 = vmatprep.subr.mxu0 0.0
        %635 = vmatpush2.msra.mxu0 0.0
        %636 = vmatprep.subr.mxu0 0.0
        %637 = vmatpush2.msra.mxu0 0.0
        %638 = vmatprep.subr.mxu0 0.0
        %639 = vmatpush2.msra.mxu0 0.0
        %640 = vmatprep.subr.mxu0 0.0
        %641 = vmatpush2.msra.mxu0 0.0
        %642 = vmatprep.subr.mxu0 0.0
        %643 = vmatpush2.msra.mxu0 0.0
        %644 = vmatprep.subr.mxu0 0.0
        %645 = vmatpush2.msra.mxu0 0.0
        %646 = vmatprep.subr.mxu0 0.0
        %647 = vmatpush2.msra.mxu0 0.0
        %648 = vmatprep.subr.mxu0 0.0
        %649 = vmatpush2.msra.mxu0 0.0
        %650 = vmatprep.subr.mxu0 0.0
        %651 = vmatpush2.msra.mxu0 0.0
        %652 = vmatprep.subr.mxu0 0.0
        %653 = vmatpush2.msra.mxu0 0.0
        %654 = vmatprep.mubr.f32.mxu0 0.0
        %655 = vmatmul.mubr.f32.gmra.mxu0 %v509
        %v656 = vpop.f32.mrf.mxu0
        %v657 = vadd.f32 0.0, %v656
        %v658 = vpop.f32.mrf.mxu0
        %659 = vmatprep.mubr.f32.mxu0 0.0
        %660 = vmatmul.mubr.f32.gmra.mxu0 %v432
        %v661 = vpop.f32.mrf.mxu0
        %v662 = vadd.f32 0.0, %v661
        %v663 = vpop.f32.mrf.mxu0
        %664 = vdwg.mxu0
        %v665 = vld [vmem:[#allocation5] sm:$0xff]
        %v666 = vld [vmem:[#allocation5 + $0x8] sm:$0xff]
        %v667 = vld [vmem:[%s6] sm:$0x1]
        %v669 = vlaneseq
        %v670 = vshrl.u32 %v669, 7
        %v671 = vsub.s32 0, %v670
        %v672 = vrot.slane %v667, %v671
        %v674 = vadd.f32 %v501, %v672
        %v675 = vld [vmem:[%s7] sm:$0x1]
        %v677 = vlaneseq
        %v678 = vshrl.u32 %v677, 7
        %v679 = vsub.s32 0, %v678
        %v680 = vrot.slane %v675, %v679
        %v682 = vadd.f32 %v501, %v680
        %v683 = vld [vmem:[%s8] sm:$0xff]
        %vm684 = vcmask 64512
        %v686 = vsel %vm684, %v682, 0
        %v689 = vsel %vm684, %v665, 0
        %v692 = vsel %vm684, %v666, 0
        %694 = vmatprep.subr.mxu0 0.0
        %695 = vmatpush1.xpose.msra.mxu0 0.0
        %696 = vmatprep.subr.mxu0 0.0
        %697 = vmatpush1.xpose.msra.mxu0 0.0
        %698 = vmatprep.subr.mxu0 0.0
        %699 = vmatpush1.xpose.msra.mxu0 0.0
        %700 = vmatprep.subr.mxu0 0.0
        %701 = vmatpush1.xpose.msra.mxu0 0.0
        %702 = vmatprep.subr.mxu0 0.0
        %703 = vmatpush1.xpose.msra.mxu0 0.0
        %704 = vmatprep.subr.mxu0 0.0
        %705 = vmatpush1.xpose.msra.mxu0 0.0
        %706 = vmatprep.subr.mxu0 0.0
        %707 = vmatpush1.xpose.msra.mxu0 0.0
        %708 = vmatprep.subr.mxu0 0.0
        %709 = vmatpush1.xpose.msra.mxu0 0.0
        %710 = vmatprep.subr.mxu0 0.0
        %711 = vmatpush1.xpose.msra.mxu0 0.0
        %712 = vmatprep.subr.mxu0 0.0
        %713 = vmatpush1.xpose.msra.mxu0 0.0
        %714 = vmatprep.subr.mxu0 0.0
        %715 = vmatpush1.xpose.msra.mxu0 0.0
        %716 = vmatprep.subr.mxu0 0.0
        %717 = vmatpush1.xpose.msra.mxu0 0.0
        %718 = vmatprep.subr.mxu0 0.0
        %719 = vmatpush1.xpose.msra.mxu0 0.0
        %720 = vmatprep.subr.mxu0 0.0
        %721 = vmatpush1.xpose.msra.mxu0 0.0
        %722 = vmatprep.subr.mxu0 0.0
        %723 = vmatpush1.xpose.msra.mxu0 %v692
        %724 = vmatprep.subr.mxu0 0.0
        %725 = vmatpush1.xpose.msra.mxu0 %v689
        %726 = vmatprep.subr.mxu0 0.0
        %727 = vmatpush2.xpose.msra.mxu0 0.0
        %728 = vmatprep.subr.mxu0 0.0
        %729 = vmatpush2.xpose.msra.mxu0 0.0
        %730 = vmatprep.subr.mxu0 0.0
        %731 = vmatpush2.xpose.msra.mxu0 0.0
        %732 = vmatprep.subr.mxu0 0.0
        %733 = vmatpush2.xpose.msra.mxu0 0.0
        %734 = vmatprep.subr.mxu0 0.0
        %735 = vmatpush2.xpose.msra.mxu0 0.0
        %736 = vmatprep.subr.mxu0 0.0
        %737 = vmatpush2.xpose.msra.mxu0 0.0
        %738 = vmatprep.subr.mxu0 0.0
        %739 = vmatpush2.xpose.msra.mxu0 0.0
        %740 = vmatprep.subr.mxu0 0.0
        %741 = vmatpush2.xpose.msra.mxu0 0.0
        %742 = vmatprep.subr.mxu0 0.0
        %743 = vmatpush2.xpose.msra.mxu0 0.0
        %744 = vmatprep.subr.mxu0 0.0
        %745 = vmatpush2.xpose.msra.mxu0 0.0
        %746 = vmatprep.subr.mxu0 0.0
        %747 = vmatpush2.xpose.msra.mxu0 0.0
        %748 = vmatprep.subr.mxu0 0.0
        %749 = vmatpush2.xpose.msra.mxu0 0.0
        %750 = vmatprep.subr.mxu0 0.0
        %751 = vmatpush2.xpose.msra.mxu0 0.0
        %752 = vmatprep.subr.mxu0 0.0
        %753 = vmatpush2.xpose.msra.mxu0 0.0
        %754 = vmatprep.subr.mxu0 0.0
        %755 = vmatpush2.xpose.msra.mxu0 0.0
        %756 = vmatprep.subr.mxu0 0.0
        %757 = vmatpush2.xpose.msra.mxu0 0.0
        %758 = vmatprep.mubr.f32.mxu0 0.0
        %759 = vmatmul.mubr.f32.gmra.mxu0 %v686
        %v760 = vpop.f32.mrf.mxu0
        %v761 = vadd.f32 0.0, %v760
        %v762 = vpop.f32.mrf.mxu0
        %763 = vdwg.mxu0
        %v765 = vrot.slane %v761, 1
        %vm767 = vcmask 1046528
        %v768 = vsel %vm767, %v765, 0.0
        %769 = vrot.lane.b32.xlu0 %v761, 1
        %v770 = vpop.permute.xlu0 %769
        %773 = vrot.lane.b32.xlu0 %v768, 18
        %v774 = vpop.permute.xlu0 %773
        %vm776 = vcmask 7168
        %v777 = vsel %vm776, 0.0, %v770
        %vm778 = vcmask 138240
        %v779 = vsel %vm778, %v777, 0.0
        %vm780 = vcmask 146432
        %v781 = vsel %vm780, %v779, %v774
        %vm782 = vcmask 195584
        %v783 = vsel %vm782, %v781, 0.0
        %s785 = sor.u32 256, 120
        %786 = vrot.lane.b32.xlu0 %v783, %s785
        %v787 = vpop.permute.xlu0 %786
        %v789 = vsel %vm684, %v674, 0
        %v792 = vsel %vm684, %v578, 0
        %v795 = vsel %vm684, %v583, 0
        %797 = vmatprep.subr.mxu0 0.0
        %798 = vmatpush1.xpose.msra.mxu0 0.0
        %799 = vmatprep.subr.mxu0 0.0
        %800 = vmatpush1.xpose.msra.mxu0 0.0
        %801 = vmatprep.subr.mxu0 0.0
        %802 = vmatpush1.xpose.msra.mxu0 0.0
        %803 = vmatprep.subr.mxu0 0.0
        %804 = vmatpush1.xpose.msra.mxu0 0.0
        %805 = vmatprep.subr.mxu0 0.0
        %806 = vmatpush1.xpose.msra.mxu0 0.0
        %807 = vmatprep.subr.mxu0 0.0
        %808 = vmatpush1.xpose.msra.mxu0 0.0
        %809 = vmatprep.subr.mxu0 0.0
        %810 = vmatpush1.xpose.msra.mxu0 0.0
        %811 = vmatprep.subr.mxu0 0.0
        %812 = vmatpush1.xpose.msra.mxu0 0.0
        %813 = vmatprep.subr.mxu0 0.0
        %814 = vmatpush1.xpose.msra.mxu0 0.0
        %815 = vmatprep.subr.mxu0 0.0
        %816 = vmatpush1.xpose.msra.mxu0 0.0
        %817 = vmatprep.subr.mxu0 0.0
        %818 = vmatpush1.xpose.msra.mxu0 0.0
        %819 = vmatprep.subr.mxu0 0.0
        %820 = vmatpush1.xpose.msra.mxu0 0.0
        %821 = vmatprep.subr.mxu0 0.0
        %822 = vmatpush1.xpose.msra.mxu0 0.0
        %823 = vmatprep.subr.mxu0 0.0
        %824 = vmatpush1.xpose.msra.mxu0 0.0
        %825 = vmatprep.subr.mxu0 0.0
        %826 = vmatpush1.xpose.msra.mxu0 %v795
        %827 = vmatprep.subr.mxu0 0.0
        %828 = vmatpush1.xpose.msra.mxu0 %v792
        %829 = vmatprep.subr.mxu0 0.0
        %830 = vmatpush2.xpose.msra.mxu0 0.0
        %831 = vmatprep.subr.mxu0 0.0
        %832 = vmatpush2.xpose.msra.mxu0 0.0
        %833 = vmatprep.subr.mxu0 0.0
        %834 = vmatpush2.xpose.msra.mxu0 0.0
        %835 = vmatprep.subr.mxu0 0.0
        %836 = vmatpush2.xpose.msra.mxu0 0.0
        %837 = vmatprep.subr.mxu0 0.0
        %838 = vmatpush2.xpose.msra.mxu0 0.0
        %839 = vmatprep.subr.mxu0 0.0
        %840 = vmatpush2.xpose.msra.mxu0 0.0
        %841 = vmatprep.subr.mxu0 0.0
        %842 = vmatpush2.xpose.msra.mxu0 0.0
        %843 = vmatprep.subr.mxu0 0.0
        %844 = vmatpush2.xpose.msra.mxu0 0.0
        %845 = vmatprep.subr.mxu0 0.0
        %846 = vmatpush2.xpose.msra.mxu0 0.0
        %847 = vmatprep.subr.mxu0 0.0
        %848 = vmatpush2.xpose.msra.mxu0 0.0
        %849 = vmatprep.subr.mxu0 0.0
        %850 = vmatpush2.xpose.msra.mxu0 0.0
        %851 = vmatprep.subr.mxu0 0.0
        %852 = vmatpush2.xpose.msra.mxu0 0.0
        %853 = vmatprep.subr.mxu0 0.0
        %854 = vmatpush2.xpose.msra.mxu0 0.0
        %855 = vmatprep.subr.mxu0 0.0
        %856 = vmatpush2.xpose.msra.mxu0 0.0
        %857 = vmatprep.subr.mxu0 0.0
        %858 = vmatpush2.xpose.msra.mxu0 0.0
        %859 = vmatprep.subr.mxu0 0.0
        %860 = vmatpush2.xpose.msra.mxu0 0.0
        %861 = vmatprep.mubr.f32.mxu0 0.0
        %862 = vmatmul.mubr.f32.gmra.mxu0 %v789
        %v863 = vpop.f32.mrf.mxu0
        %v864 = vadd.f32 %v787, %v863
        %v865 = vpop.f32.mrf.mxu0
        %866 = vdwg.mxu0
        %v867 = vadd.f32 %v864, %v683
        %v868 = vmul.f32 %v867, 0.35355338
        %vm869 = vcmask 130048
        %v870 = vsel %vm869, %v868, -inf
        %871 = vmax.xlane.f32.xlu0 %v870
        %v872 = vpop.xlane.xlu0 %871
        %v873 = vsub.f32 %v868, %v872
        %v874 = vmul.f32 %v873, 1.442695
        %v875 = vpow.pop %v874
        %v876 = vsel %vm869, %v875, 0.0
        %877 = vadd.xlane.f32.xlu0 %v876
        %v878 = vpop.xlane.xlu0 %877
        %v879 = vrcp.pop %v878
        %v881 = vsel %vm869, %v875, 0
        %883 = vmatprep.subr.mxu0 0.0
        %884 = vmatpush1.msra.mxu0 0.0
        %885 = vmatprep.subr.mxu0 0.0
        %886 = vmatpush1.msra.mxu0 0.0
        %887 = vmatprep.subr.mxu0 0.0
        %888 = vmatpush1.msra.mxu0 0.0
        %889 = vmatprep.subr.mxu0 0.0
        %890 = vmatpush1.msra.mxu0 0.0
        %891 = vmatprep.subr.mxu0 0.0
        %892 = vmatpush1.msra.mxu0 0.0
        %893 = vmatprep.subr.mxu0 0.0
        %894 = vmatpush1.msra.mxu0 0.0
        %895 = vmatprep.subr.mxu0 0.0
        %896 = vmatpush1.msra.mxu0 0.0
        %897 = vmatprep.subr.mxu0 0.0
        %898 = vmatpush1.msra.mxu0 0.0
        %899 = vmatprep.subr.mxu0 0.0
        %900 = vmatpush1.msra.mxu0 0.0
        %901 = vmatprep.subr.mxu0 0.0
        %902 = vmatpush1.msra.mxu0 0.0
        %903 = vmatprep.subr.mxu0 0.0
        %904 = vmatpush1.msra.mxu0 0.0
        %905 = vmatprep.subr.mxu0 0.0
        %906 = vmatpush1.msra.mxu0 0.0
        %907 = vmatprep.subr.mxu0 0.0
        %908 = vmatpush1.msra.mxu0 0.0
        %909 = vmatprep.subr.mxu0 0.0
        %910 = vmatpush1.msra.mxu0 0.0
        %911 = vmatprep.subr.mxu0 0.0
        %912 = vmatpush1.msra.mxu0 %v662
        %913 = vmatprep.subr.mxu0 0.0
        %914 = vmatpush1.msra.mxu0 %v657
        %915 = vmatprep.subr.mxu0 0.0
        %916 = vmatpush2.msra.mxu0 0.0
        %917 = vmatprep.subr.mxu0 0.0
        %918 = vmatpush2.msra.mxu0 0.0
        %919 = vmatprep.subr.mxu0 0.0
        %920 = vmatpush2.msra.mxu0 0.0
        %921 = vmatprep.subr.mxu0 0.0
        %922 = vmatpush2.msra.mxu0 0.0
        %923 = vmatprep.subr.mxu0 0.0
        %924 = vmatpush2.msra.mxu0 0.0
        %925 = vmatprep.subr.mxu0 0.0
        %926 = vmatpush2.msra.mxu0 0.0
        %927 = vmatprep.subr.mxu0 0.0
        %928 = vmatpush2.msra.mxu0 0.0
        %929 = vmatprep.subr.mxu0 0.0
        %930 = vmatpush2.msra.mxu0 0.0
        %931 = vmatprep.subr.mxu0 0.0
        %932 = vmatpush2.msra.mxu0 0.0
        %933 = vmatprep.subr.mxu0 0.0
        %934 = vmatpush2.msra.mxu0 0.0
        %935 = vmatprep.subr.mxu0 0.0
        %936 = vmatpush2.msra.mxu0 0.0
        %937 = vmatprep.subr.mxu0 0.0
        %938 = vmatpush2.msra.mxu0 0.0
        %939 = vmatprep.subr.mxu0 0.0
        %940 = vmatpush2.msra.mxu0 0.0
        %941 = vmatprep.subr.mxu0 0.0
        %942 = vmatpush2.msra.mxu0 0.0
        %943 = vmatprep.subr.mxu0 0.0
        %944 = vmatpush2.msra.mxu0 0.0
        %945 = vmatprep.subr.mxu0 0.0
        %946 = vmatpush2.msra.mxu0 0.0
        %947 = vmatprep.mubr.f32.mxu0 0.0
        %948 = vmatmul.mubr.f32.gmra.mxu0 %v881
        %v949 = vpop.f32.mrf.mxu0
        %v950 = vadd.f32 0.0, %v949
        %v951 = vpop.f32.mrf.mxu0
        %952 = vdwg.mxu0
        %v953 = vmul.f32 %v950, %v879
        %954 = vrot.lane.b32.xlu0 %v682, 120
        %v955 = vpop.permute.xlu0 %954
        %956 = vrot.lane.b32.xlu0 %v665, 120
        %v957 = vpop.permute.xlu0 %956
        %958 = vrot.lane.b32.xlu0 %v666, 120
        %v959 = vpop.permute.xlu0 %958
        %v960 = vsel %vm684, %v955, 0
        %v962 = vsel %vm684, %v957, 0
        %v964 = vsel %vm684, %v959, 0
        %966 = vmatprep.subr.mxu0 0.0
        %967 = vmatpush1.xpose.msra.mxu0 0.0
        %968 = vmatprep.subr.mxu0 0.0
        %969 = vmatpush1.xpose.msra.mxu0 0.0
        %970 = vmatprep.subr.mxu0 0.0
        %971 = vmatpush1.xpose.msra.mxu0 0.0
        %972 = vmatprep.subr.mxu0 0.0
        %973 = vmatpush1.xpose.msra.mxu0 0.0
        %974 = vmatprep.subr.mxu0 0.0
        %975 = vmatpush1.xpose.msra.mxu0 0.0
        %976 = vmatprep.subr.mxu0 0.0
        %977 = vmatpush1.xpose.msra.mxu0 0.0
        %978 = vmatprep.subr.mxu0 0.0
        %979 = vmatpush1.xpose.msra.mxu0 0.0
        %980 = vmatprep.subr.mxu0 0.0
        %981 = vmatpush1.xpose.msra.mxu0 0.0
        %982 = vmatprep.subr.mxu0 0.0
        %983 = vmatpush1.xpose.msra.mxu0 0.0
        %984 = vmatprep.subr.mxu0 0.0
        %985 = vmatpush1.xpose.msra.mxu0 0.0
        %986 = vmatprep.subr.mxu0 0.0
        %987 = vmatpush1.xpose.msra.mxu0 0.0
        %988 = vmatprep.subr.mxu0 0.0
        %989 = vmatpush1.xpose.msra.mxu0 0.0
        %990 = vmatprep.subr.mxu0 0.0
        %991 = vmatpush1.xpose.msra.mxu0 0.0
        %992 = vmatprep.subr.mxu0 0.0
        %993 = vmatpush1.xpose.msra.mxu0 0.0
        %994 = vmatprep.subr.mxu0 0.0
        %995 = vmatpush1.xpose.msra.mxu0 %v964
        %996 = vmatprep.subr.mxu0 0.0
        %997 = vmatpush1.xpose.msra.mxu0 %v962
        %998 = vmatprep.subr.mxu0 0.0
        %999 = vmatpush2.xpose.msra.mxu0 0.0
        %1000 = vmatprep.subr.mxu0 0.0
        %1001 = vmatpush2.xpose.msra.mxu0 0.0
        %1002 = vmatprep.subr.mxu0 0.0
        %1003 = vmatpush2.xpose.msra.mxu0 0.0
        %1004 = vmatprep.subr.mxu0 0.0
        %1005 = vmatpush2.xpose.msra.mxu0 0.0
        %1006 = vmatprep.subr.mxu0 0.0
        %1007 = vmatpush2.xpose.msra.mxu0 0.0
        %1008 = vmatprep.subr.mxu0 0.0
        %1009 = vmatpush2.xpose.msra.mxu0 0.0
        %1010 = vmatprep.subr.mxu0 0.0
        %1011 = vmatpush2.xpose.msra.mxu0 0.0
        %1012 = vmatprep.subr.mxu0 0.0
        %1013 = vmatpush2.xpose.msra.mxu0 0.0
        %1014 = vmatprep.subr.mxu0 0.0
        %1015 = vmatpush2.xpose.msra.mxu0 0.0
        %1016 = vmatprep.subr.mxu0 0.0
        %1017 = vmatpush2.xpose.msra.mxu0 0.0
        %1018 = vmatprep.subr.mxu0 0.0
        %1019 = vmatpush2.xpose.msra.mxu0 0.0
        %1020 = vmatprep.subr.mxu0 0.0
        %1021 = vmatpush2.xpose.msra.mxu0 0.0
        %1022 = vmatprep.subr.mxu0 0.0
        %1023 = vmatpush2.xpose.msra.mxu0 0.0
        %1024 = vmatprep.subr.mxu0 0.0
        %1025 = vmatpush2.xpose.msra.mxu0 0.0
        %1026 = vmatprep.subr.mxu0 0.0
        %1027 = vmatpush2.xpose.msra.mxu0 0.0
        %1028 = vmatprep.subr.mxu0 0.0
        %1029 = vmatpush2.xpose.msra.mxu0 0.0
        %1030 = vmatprep.mubr.f32.mxu0 0.0
        %1031 = vmatmul.mubr.f32.gmra.mxu0 %v960
        %v1032 = vpop.f32.mrf.mxu0
        %v1033 = vadd.f32 0.0, %v1032
        %v1034 = vpop.f32.mrf.mxu0
        %1035 = vdwg.mxu0
        %v1037 = vrot.slane %v1033, 1
        %v1039 = vsel %vm767, %v1037, 0.0
        %1040 = vrot.lane.b32.xlu0 %v1033, 1
        %v1041 = vpop.permute.xlu0 %1040
        %1044 = vrot.lane.b32.xlu0 %v1039, 18
        %v1045 = vpop.permute.xlu0 %1044
        %v1047 = vsel %vm776, 0.0, %v1041
        %v1048 = vsel %vm778, %v1047, 0.0
        %v1049 = vsel %vm780, %v1048, %v1045
        %v1050 = vsel %vm782, %v1049, 0.0
        %s1052 = sor.u32 256, 120
        %1053 = vrot.lane.b32.xlu0 %v1050, %s1052
        %v1054 = vpop.permute.xlu0 %1053
        %1055 = vrot.lane.b32.xlu0 %v674, 120
        %v1056 = vpop.permute.xlu0 %1055
        %1057 = vrot.lane.b32.xlu0 %v578, 120
        %v1058 = vpop.permute.xlu0 %1057
        %1059 = vrot.lane.b32.xlu0 %v583, 120
        %v1060 = vpop.permute.xlu0 %1059
        %v1061 = vsel %vm684, %v1056, 0
        %v1063 = vsel %vm684, %v1058, 0
        %v1065 = vsel %vm684, %v1060, 0
        %1067 = vmatprep.subr.mxu0 0.0
        %1068 = vmatpush1.xpose.msra.mxu0 0.0
        %1069 = vmatprep.subr.mxu0 0.0
        %1070 = vmatpush1.xpose.msra.mxu0 0.0
        %1071 = vmatprep.subr.mxu0 0.0
        %1072 = vmatpush1.xpose.msra.mxu0 0.0
        %1073 = vmatprep.subr.mxu0 0.0
        %1074 = vmatpush1.xpose.msra.mxu0 0.0
        %1075 = vmatprep.subr.mxu0 0.0
        %1076 = vmatpush1.xpose.msra.mxu0 0.0
        %1077 = vmatprep.subr.mxu0 0.0
        %1078 = vmatpush1.xpose.msra.mxu0 0.0
        %1079 = vmatprep.subr.mxu0 0.0
        %1080 = vmatpush1.xpose.msra.mxu0 0.0
        %1081 = vmatprep.subr.mxu0 0.0
        %1082 = vmatpush1.xpose.msra.mxu0 0.0
        %1083 = vmatprep.subr.mxu0 0.0
        %1084 = vmatpush1.xpose.msra.mxu0 0.0
        %1085 = vmatprep.subr.mxu0 0.0
        %1086 = vmatpush1.xpose.msra.mxu0 0.0
        %1087 = vmatprep.subr.mxu0 0.0
        %1088 = vmatpush1.xpose.msra.mxu0 0.0
        %1089 = vmatprep.subr.mxu0 0.0
        %1090 = vmatpush1.xpose.msra.mxu0 0.0
        %1091 = vmatprep.subr.mxu0 0.0
        %1092 = vmatpush1.xpose.msra.mxu0 0.0
        %1093 = vmatprep.subr.mxu0 0.0
        %1094 = vmatpush1.xpose.msra.mxu0 0.0
        %1095 = vmatprep.subr.mxu0 0.0
        %1096 = vmatpush1.xpose.msra.mxu0 %v1065
        %1097 = vmatprep.subr.mxu0 0.0
        %1098 = vmatpush1.xpose.msra.mxu0 %v1063
        %1099 = vmatprep.subr.mxu0 0.0
        %1100 = vmatpush2.xpose.msra.mxu0 0.0
        %1101 = vmatprep.subr.mxu0 0.0
        %1102 = vmatpush2.xpose.msra.mxu0 0.0
        %1103 = vmatprep.subr.mxu0 0.0
        %1104 = vmatpush2.xpose.msra.mxu0 0.0
        %1105 = vmatprep.subr.mxu0 0.0
        %1106 = vmatpush2.xpose.msra.mxu0 0.0
        %1107 = vmatprep.subr.mxu0 0.0
        %1108 = vmatpush2.xpose.msra.mxu0 0.0
        %1109 = vmatprep.subr.mxu0 0.0
        %1110 = vmatpush2.xpose.msra.mxu0 0.0
        %1111 = vmatprep.subr.mxu0 0.0
        %1112 = vmatpush2.xpose.msra.mxu0 0.0
        %1113 = vmatprep.subr.mxu0 0.0
        %1114 = vmatpush2.xpose.msra.mxu0 0.0
        %1115 = vmatprep.subr.mxu0 0.0
        %1116 = vmatpush2.xpose.msra.mxu0 0.0
        %1117 = vmatprep.subr.mxu0 0.0
        %1118 = vmatpush2.xpose.msra.mxu0 0.0
        %1119 = vmatprep.subr.mxu0 0.0
        %1120 = vmatpush2.xpose.msra.mxu0 0.0
        %1121 = vmatprep.subr.mxu0 0.0
        %1122 = vmatpush2.xpose.msra.mxu0 0.0
        %1123 = vmatprep.subr.mxu0 0.0
        %1124 = vmatpush2.xpose.msra.mxu0 0.0
        %1125 = vmatprep.subr.mxu0 0.0
        %1126 = vmatpush2.xpose.msra.mxu0 0.0
        %1127 = vmatprep.subr.mxu0 0.0
        %1128 = vmatpush2.xpose.msra.mxu0 0.0
        %1129 = vmatprep.subr.mxu0 0.0
        %1130 = vmatpush2.xpose.msra.mxu0 0.0
        %1131 = vmatprep.mubr.f32.mxu0 0.0
        %1132 = vmatmul.mubr.f32.gmra.mxu0 %v1061
        %v1133 = vpop.f32.mrf.mxu0
        %v1134 = vadd.f32 %v1054, %v1133
        %v1135 = vpop.f32.mrf.mxu0
        %1136 = vdwg.mxu0
        %v1137 = vadd.f32 %v1134, %v683
        %v1138 = vmul.f32 %v1137, 0.35355338
        %v1139 = vsel %vm869, %v1138, -inf
        %1140 = vmax.xlane.f32.xlu0 %v1139
        %v1141 = vpop.xlane.xlu0 %1140
        %v1142 = vsub.f32 %v1138, %v1141
        %v1143 = vmul.f32 %v1142, 1.442695
        %v1144 = vpow.pop %v1143
        %v1145 = vsel %vm869, %v1144, 0.0
        %1146 = vadd.xlane.f32.xlu0 %v1145
        %v1147 = vpop.xlane.xlu0 %1146
        %v1148 = vrcp.pop %v1147
        %1151 = vrot.lane.b32.xlu0 %v657, 120
        %v1152 = vpop.permute.xlu0 %1151
        %1153 = vrot.lane.b32.xlu0 %v662, 120
        %v1154 = vpop.permute.xlu0 %1153
        %v1158 = vsel %vm869, %v1144, 0
        %1160 = vmatprep.subr.mxu0 0.0
        %1161 = vmatpush1.msra.mxu0 0.0
        %1162 = vmatprep.subr.mxu0 0.0
        %1163 = vmatpush1.msra.mxu0 0.0
        %1164 = vmatprep.subr.mxu0 0.0
        %1165 = vmatpush1.msra.mxu0 0.0
        %1166 = vmatprep.subr.mxu0 0.0
        %1167 = vmatpush1.msra.mxu0 0.0
        %1168 = vmatprep.subr.mxu0 0.0
        %1169 = vmatpush1.msra.mxu0 0.0
        %1170 = vmatprep.subr.mxu0 0.0
        %1171 = vmatpush1.msra.mxu0 0.0
        %1172 = vmatprep.subr.mxu0 0.0
        %1173 = vmatpush1.msra.mxu0 0.0
        %1174 = vmatprep.subr.mxu0 0.0
        %1175 = vmatpush1.msra.mxu0 0.0
        %1176 = vmatprep.subr.mxu0 0.0
        %1177 = vmatpush1.msra.mxu0 0.0
        %1178 = vmatprep.subr.mxu0 0.0
        %1179 = vmatpush1.msra.mxu0 0.0
        %1180 = vmatprep.subr.mxu0 0.0
        %1181 = vmatpush1.msra.mxu0 0.0
        %1182 = vmatprep.subr.mxu0 0.0
        %1183 = vmatpush1.msra.mxu0 0.0
        %1184 = vmatprep.subr.mxu0 0.0
        %1185 = vmatpush1.msra.mxu0 0.0
        %1186 = vmatprep.subr.mxu0 0.0
        %1187 = vmatpush1.msra.mxu0 0.0
        %1188 = vmatprep.subr.mxu0 0.0
        %1189 = vmatpush1.msra.mxu0 %v1154
        %1190 = vmatprep.subr.mxu0 0.0
        %1191 = vmatpush1.msra.mxu0 %v1152
        %1192 = vmatprep.subr.mxu0 0.0
        %1193 = vmatpush2.msra.mxu0 0.0
        %1194 = vmatprep.subr.mxu0 0.0
        %1195 = vmatpush2.msra.mxu0 0.0
        %1196 = vmatprep.subr.mxu0 0.0
        %1197 = vmatpush2.msra.mxu0 0.0
        %1198 = vmatprep.subr.mxu0 0.0
        %1199 = vmatpush2.msra.mxu0 0.0
        %1200 = vmatprep.subr.mxu0 0.0
        %1201 = vmatpush2.msra.mxu0 0.0
        %1202 = vmatprep.subr.mxu0 0.0
        %1203 = vmatpush2.msra.mxu0 0.0
        %1204 = vmatprep.subr.mxu0 0.0
        %1205 = vmatpush2.msra.mxu0 0.0
        %1206 = vmatprep.subr.mxu0 0.0
        %1207 = vmatpush2.msra.mxu0 0.0
        %1208 = vmatprep.subr.mxu0 0.0
        %1209 = vmatpush2.msra.mxu0 0.0
        %1210 = vmatprep.subr.mxu0 0.0
        %1211 = vmatpush2.msra.mxu0 0.0
        %1212 = vmatprep.subr.mxu0 0.0
        %1213 = vmatpush2.msra.mxu0 0.0
        %1214 = vmatprep.subr.mxu0 0.0
        %1215 = vmatpush2.msra.mxu0 0.0
        %1216 = vmatprep.subr.mxu0 0.0
        %1217 = vmatpush2.msra.mxu0 0.0
        %1218 = vmatprep.subr.mxu0 0.0
        %1219 = vmatpush2.msra.mxu0 0.0
        %1220 = vmatprep.subr.mxu0 0.0
        %1221 = vmatpush2.msra.mxu0 0.0
        %1222 = vmatprep.subr.mxu0 0.0
        %1223 = vmatpush2.msra.mxu0 0.0
        %1224 = vmatprep.mubr.f32.mxu0 0.0
        %1225 = vmatmul.mubr.f32.gmra.mxu0 %v1158
        %v1226 = vpop.f32.mrf.mxu0
        %v1227 = vadd.f32 0.0, %v1226
        %v1228 = vpop.f32.mrf.mxu0
        %1229 = vdwg.mxu0
        %v1230 = vmul.f32 %v1227, %v1148
        %1231 = vrot.lane.b32.xlu0 %v682, 112
        %v1232 = vpop.permute.xlu0 %1231
        %1233 = vrot.lane.b32.xlu0 %v665, 112
        %v1234 = vpop.permute.xlu0 %1233
        %1235 = vrot.lane.b32.xlu0 %v666, 112
        %v1236 = vpop.permute.xlu0 %1235
        %v1237 = vsel %vm684, %v1232, 0
        %v1239 = vsel %vm684, %v1234, 0
        %v1241 = vsel %vm684, %v1236, 0
        %1243 = vmatprep.subr.mxu0 0.0
        %1244 = vmatpush1.xpose.msra.mxu0 0.0
        %1245 = vmatprep.subr.mxu0 0.0
        %1246 = vmatpush1.xpose.msra.mxu0 0.0
        %1247 = vmatprep.subr.mxu0 0.0
        %1248 = vmatpush1.xpose.msra.mxu0 0.0
        %1249 = vmatprep.subr.mxu0 0.0
        %1250 = vmatpush1.xpose.msra.mxu0 0.0
        %1251 = vmatprep.subr.mxu0 0.0
        %1252 = vmatpush1.xpose.msra.mxu0 0.0
        %1253 = vmatprep.subr.mxu0 0.0
        %1254 = vmatpush1.xpose.msra.mxu0 0.0
        %1255 = vmatprep.subr.mxu0 0.0
        %1256 = vmatpush1.xpose.msra.mxu0 0.0
        %1257 = vmatprep.subr.mxu0 0.0
        %1258 = vmatpush1.xpose.msra.mxu0 0.0
        %1259 = vmatprep.subr.mxu0 0.0
        %1260 = vmatpush1.xpose.msra.mxu0 0.0
        %1261 = vmatprep.subr.mxu0 0.0
        %1262 = vmatpush1.xpose.msra.mxu0 0.0
        %1263 = vmatprep.subr.mxu0 0.0
        %1264 = vmatpush1.xpose.msra.mxu0 0.0
        %1265 = vmatprep.subr.mxu0 0.0
        %1266 = vmatpush1.xpose.msra.mxu0 0.0
        %1267 = vmatprep.subr.mxu0 0.0
        %1268 = vmatpush1.xpose.msra.mxu0 0.0
        %1269 = vmatprep.subr.mxu0 0.0
        %1270 = vmatpush1.xpose.msra.mxu0 0.0
        %1271 = vmatprep.subr.mxu0 0.0
        %1272 = vmatpush1.xpose.msra.mxu0 %v1241
        %1273 = vmatprep.subr.mxu0 0.0
        %1274 = vmatpush1.xpose.msra.mxu0 %v1239
        %1275 = vmatprep.subr.mxu0 0.0
        %1276 = vmatpush2.xpose.msra.mxu0 0.0
        %1277 = vmatprep.subr.mxu0 0.0
        %1278 = vmatpush2.xpose.msra.mxu0 0.0
        %1279 = vmatprep.subr.mxu0 0.0
        %1280 = vmatpush2.xpose.msra.mxu0 0.0
        %1281 = vmatprep.subr.mxu0 0.0
        %1282 = vmatpush2.xpose.msra.mxu0 0.0
        %1283 = vmatprep.subr.mxu0 0.0
        %1284 = vmatpush2.xpose.msra.mxu0 0.0
        %1285 = vmatprep.subr.mxu0 0.0
        %1286 = vmatpush2.xpose.msra.mxu0 0.0
        %1287 = vmatprep.subr.mxu0 0.0
        %1288 = vmatpush2.xpose.msra.mxu0 0.0
        %1289 = vmatprep.subr.mxu0 0.0
        %1290 = vmatpush2.xpose.msra.mxu0 0.0
        %1291 = vmatprep.subr.mxu0 0.0
        %1292 = vmatpush2.xpose.msra.mxu0 0.0
        %1293 = vmatprep.subr.mxu0 0.0
        %1294 = vmatpush2.xpose.msra.mxu0 0.0
        %1295 = vmatprep.subr.mxu0 0.0
        %1296 = vmatpush2.xpose.msra.mxu0 0.0
        %1297 = vmatprep.subr.mxu0 0.0
        %1298 = vmatpush2.xpose.msra.mxu0 0.0
        %1299 = vmatprep.subr.mxu0 0.0
        %1300 = vmatpush2.xpose.msra.mxu0 0.0
        %1301 = vmatprep.subr.mxu0 0.0
        %1302 = vmatpush2.xpose.msra.mxu0 0.0
        %1303 = vmatprep.subr.mxu0 0.0
        %1304 = vmatpush2.xpose.msra.mxu0 0.0
        %1305 = vmatprep.subr.mxu0 0.0
        %1306 = vmatpush2.xpose.msra.mxu0 0.0
        %1307 = vmatprep.mubr.f32.mxu0 0.0
        %1308 = vmatmul.mubr.f32.gmra.mxu0 %v1237
        %v1309 = vpop.f32.mrf.mxu0
        %v1310 = vadd.f32 0.0, %v1309
        %v1311 = vpop.f32.mrf.mxu0
        %1312 = vdwg.mxu0
        %v1314 = vrot.slane %v1310, 1
        %v1316 = vsel %vm767, %v1314, 0.0
        %1317 = vrot.lane.b32.xlu0 %v1310, 1
        %v1318 = vpop.permute.xlu0 %1317
        %1321 = vrot.lane.b32.xlu0 %v1316, 18
        %v1322 = vpop.permute.xlu0 %1321
        %v1324 = vsel %vm776, 0.0, %v1318
        %v1325 = vsel %vm778, %v1324, 0.0
        %v1326 = vsel %vm780, %v1325, %v1322
        %v1327 = vsel %vm782, %v1326, 0.0
        %s1329 = sor.u32 256, 120
        %1330 = vrot.lane.b32.xlu0 %v1327, %s1329
        %v1331 = vpop.permute.xlu0 %1330
        %1332 = vrot.lane.b32.xlu0 %v674, 112
        %v1333 = vpop.permute.xlu0 %1332
        %1334 = vrot.lane.b32.xlu0 %v578, 112
        %v1335 = vpop.permute.xlu0 %1334
        %1336 = vrot.lane.b32.xlu0 %v583, 112
        %v1337 = vpop.permute.xlu0 %1336
        %v1338 = vsel %vm684, %v1333, 0
        %v1340 = vsel %vm684, %v1335, 0
        %v1342 = vsel %vm684, %v1337, 0
        %1344 = vmatprep.subr.mxu0 0.0
        %1345 = vmatpush1.xpose.msra.mxu0 0.0
        %1346 = vmatprep.subr.mxu0 0.0
        %1347 = vmatpush1.xpose.msra.mxu0 0.0
        %1348 = vmatprep.subr.mxu0 0.0
        %1349 = vmatpush1.xpose.msra.mxu0 0.0
        %1350 = vmatprep.subr.mxu0 0.0
        %1351 = vmatpush1.xpose.msra.mxu0 0.0
        %1352 = vmatprep.subr.mxu0 0.0
        %1353 = vmatpush1.xpose.msra.mxu0 0.0
        %1354 = vmatprep.subr.mxu0 0.0
        %1355 = vmatpush1.xpose.msra.mxu0 0.0
        %1356 = vmatprep.subr.mxu0 0.0
        %1357 = vmatpush1.xpose.msra.mxu0 0.0
        %1358 = vmatprep.subr.mxu0 0.0
        %1359 = vmatpush1.xpose.msra.mxu0 0.0
        %1360 = vmatprep.subr.mxu0 0.0
        %1361 = vmatpush1.xpose.msra.mxu0 0.0
        %1362 = vmatprep.subr.mxu0 0.0
        %1363 = vmatpush1.xpose.msra.mxu0 0.0
        %1364 = vmatprep.subr.mxu0 0.0
        %1365 = vmatpush1.xpose.msra.mxu0 0.0
        %1366 = vmatprep.subr.mxu0 0.0
        %1367 = vmatpush1.xpose.msra.mxu0 0.0
        %1368 = vmatprep.subr.mxu0 0.0
        %1369 = vmatpush1.xpose.msra.mxu0 0.0
        %1370 = vmatprep.subr.mxu0 0.0
        %1371 = vmatpush1.xpose.msra.mxu0 0.0
        %1372 = vmatprep.subr.mxu0 0.0
        %1373 = vmatpush1.xpose.msra.mxu0 %v1342
        %1374 = vmatprep.subr.mxu0 0.0
        %1375 = vmatpush1.xpose.msra.mxu0 %v1340
        %1376 = vmatprep.subr.mxu0 0.0
        %1377 = vmatpush2.xpose.msra.mxu0 0.0
        %1378 = vmatprep.subr.mxu0 0.0
        %1379 = vmatpush2.xpose.msra.mxu0 0.0
        %1380 = vmatprep.subr.mxu0 0.0
        %1381 = vmatpush2.xpose.msra.mxu0 0.0
        %1382 = vmatprep.subr.mxu0 0.0
        %1383 = vmatpush2.xpose.msra.mxu0 0.0
        %1384 = vmatprep.subr.mxu0 0.0
        %1385 = vmatpush2.xpose.msra.mxu0 0.0
        %1386 = vmatprep.subr.mxu0 0.0
        %1387 = vmatpush2.xpose.msra.mxu0 0.0
        %1388 = vmatprep.subr.mxu0 0.0
        %1389 = vmatpush2.xpose.msra.mxu0 0.0
        %1390 = vmatprep.subr.mxu0 0.0
        %1391 = vmatpush2.xpose.msra.mxu0 0.0
        %1392 = vmatprep.subr.mxu0 0.0
        %1393 = vmatpush2.xpose.msra.mxu0 0.0
        %1394 = vmatprep.subr.mxu0 0.0
        %1395 = vmatpush2.xpose.msra.mxu0 0.0
        %1396 = vmatprep.subr.mxu0 0.0
        %1397 = vmatpush2.xpose.msra.mxu0 0.0
        %1398 = vmatprep.subr.mxu0 0.0
        %1399 = vmatpush2.xpose.msra.mxu0 0.0
        %1400 = vmatprep.subr.mxu0 0.0
        %1401 = vmatpush2.xpose.msra.mxu0 0.0
        %1402 = vmatprep.subr.mxu0 0.0
        %1403 = vmatpush2.xpose.msra.mxu0 0.0
        %1404 = vmatprep.subr.mxu0 0.0
        %1405 = vmatpush2.xpose.msra.mxu0 0.0
        %1406 = vmatprep.subr.mxu0 0.0
        %1407 = vmatpush2.xpose.msra.mxu0 0.0
        %1408 = vmatprep.mubr.f32.mxu0 0.0
        %1409 = vmatmul.mubr.f32.gmra.mxu0 %v1338
        %v1410 = vpop.f32.mrf.mxu0
        %v1411 = vadd.f32 %v1331, %v1410
        %v1412 = vpop.f32.mrf.mxu0
        %1413 = vdwg.mxu0
        %v1414 = vadd.f32 %v1411, %v683
        %v1415 = vmul.f32 %v1414, 0.35355338
        %v1416 = vsel %vm869, %v1415, -inf
        %1417 = vmax.xlane.f32.xlu0 %v1416
        %v1418 = vpop.xlane.xlu0 %1417
        %v1419 = vsub.f32 %v1415, %v1418
        %v1420 = vmul.f32 %v1419, 1.442695
        %v1421 = vpow.pop %v1420
        %v1422 = vsel %vm869, %v1421, 0.0
        %1423 = vadd.xlane.f32.xlu0 %v1422
        %v1424 = vpop.xlane.xlu0 %1423
        %v1425 = vrcp.pop %v1424
        %1426 = vrot.lane.b32.xlu0 %v657, 112
        %v1427 = vpop.permute.xlu0 %1426
        %1428 = vrot.lane.b32.xlu0 %v662, 112
        %v1429 = vpop.permute.xlu0 %1428
        %v1433 = vsel %vm869, %v1421, 0
        %1435 = vmatprep.subr.mxu0 0.0
        %1436 = vmatpush1.msra.mxu0 0.0
        %1437 = vmatprep.subr.mxu0 0.0
        %1438 = vmatpush1.msra.mxu0 0.0
        %1439 = vmatprep.subr.mxu0 0.0
        %1440 = vmatpush1.msra.mxu0 0.0
        %1441 = vmatprep.subr.mxu0 0.0
        %1442 = vmatpush1.msra.mxu0 0.0
        %1443 = vmatprep.subr.mxu0 0.0
        %1444 = vmatpush1.msra.mxu0 0.0
        %1445 = vmatprep.subr.mxu0 0.0
        %1446 = vmatpush1.msra.mxu0 0.0
        %1447 = vmatprep.subr.mxu0 0.0
        %1448 = vmatpush1.msra.mxu0 0.0
        %1449 = vmatprep.subr.mxu0 0.0
        %1450 = vmatpush1.msra.mxu0 0.0
        %1451 = vmatprep.subr.mxu0 0.0
        %1452 = vmatpush1.msra.mxu0 0.0
        %1453 = vmatprep.subr.mxu0 0.0
        %1454 = vmatpush1.msra.mxu0 0.0
        %1455 = vmatprep.subr.mxu0 0.0
        %1456 = vmatpush1.msra.mxu0 0.0
        %1457 = vmatprep.subr.mxu0 0.0
        %1458 = vmatpush1.msra.mxu0 0.0
        %1459 = vmatprep.subr.mxu0 0.0
        %1460 = vmatpush1.msra.mxu0 0.0
        %1461 = vmatprep.subr.mxu0 0.0
        %1462 = vmatpush1.msra.mxu0 0.0
        %1463 = vmatprep.subr.mxu0 0.0
        %1464 = vmatpush1.msra.mxu0 %v1429
        %1465 = vmatprep.subr.mxu0 0.0
        %1466 = vmatpush1.msra.mxu0 %v1427
        %1467 = vmatprep.subr.mxu0 0.0
        %1468 = vmatpush2.msra.mxu0 0.0
        %1469 = vmatprep.subr.mxu0 0.0
        %1470 = vmatpush2.msra.mxu0 0.0
        %1471 = vmatprep.subr.mxu0 0.0
        %1472 = vmatpush2.msra.mxu0 0.0
        %1473 = vmatprep.subr.mxu0 0.0
        %1474 = vmatpush2.msra.mxu0 0.0
        %1475 = vmatprep.subr.mxu0 0.0
        %1476 = vmatpush2.msra.mxu0 0.0
        %1477 = vmatprep.subr.mxu0 0.0
        %1478 = vmatpush2.msra.mxu0 0.0
        %1479 = vmatprep.subr.mxu0 0.0
        %1480 = vmatpush2.msra.mxu0 0.0
        %1481 = vmatprep.subr.mxu0 0.0
        %1482 = vmatpush2.msra.mxu0 0.0
        %1483 = vmatprep.subr.mxu0 0.0
        %1484 = vmatpush2.msra.mxu0 0.0
        %1485 = vmatprep.subr.mxu0 0.0
        %1486 = vmatpush2.msra.mxu0 0.0
        %1487 = vmatprep.subr.mxu0 0.0
        %1488 = vmatpush2.msra.mxu0 0.0
        %1489 = vmatprep.subr.mxu0 0.0
        %1490 = vmatpush2.msra.mxu0 0.0
        %1491 = vmatprep.subr.mxu0 0.0
        %1492 = vmatpush2.msra.mxu0 0.0
        %1493 = vmatprep.subr.mxu0 0.0
        %1494 = vmatpush2.msra.mxu0 0.0
        %1495 = vmatprep.subr.mxu0 0.0
        %1496 = vmatpush2.msra.mxu0 0.0
        %1497 = vmatprep.subr.mxu0 0.0
        %1498 = vmatpush2.msra.mxu0 0.0
        %1499 = vmatprep.mubr.f32.mxu0 0.0
        %1500 = vmatmul.mubr.f32.gmra.mxu0 %v1433
        %v1501 = vpop.f32.mrf.mxu0
        %v1502 = vadd.f32 0.0, %v1501
        %v1503 = vpop.f32.mrf.mxu0
        %1504 = vdwg.mxu0
        %v1505 = vmul.f32 %v1502, %v1425
        %1506 = vrot.lane.b32.xlu0 %v682, 104
        %v1507 = vpop.permute.xlu0 %1506
        %1508 = vrot.lane.b32.xlu0 %v665, 104
        %v1509 = vpop.permute.xlu0 %1508
        %1510 = vrot.lane.b32.xlu0 %v666, 104
        %v1511 = vpop.permute.xlu0 %1510
        %v1512 = vsel %vm684, %v1507, 0
        %v1514 = vsel %vm684, %v1509, 0
        %v1516 = vsel %vm684, %v1511, 0
        %1518 = vmatprep.subr.mxu0 0.0
        %1519 = vmatpush1.xpose.msra.mxu0 0.0
        %1520 = vmatprep.subr.mxu0 0.0
        %1521 = vmatpush1.xpose.msra.mxu0 0.0
        %1522 = vmatprep.subr.mxu0 0.0
        %1523 = vmatpush1.xpose.msra.mxu0 0.0
        %1524 = vmatprep.subr.mxu0 0.0
        %1525 = vmatpush1.xpose.msra.mxu0 0.0
        %1526 = vmatprep.subr.mxu0 0.0
        %1527 = vmatpush1.xpose.msra.mxu0 0.0
        %1528 = vmatprep.subr.mxu0 0.0
        %1529 = vmatpush1.xpose.msra.mxu0 0.0
        %1530 = vmatprep.subr.mxu0 0.0
        %1531 = vmatpush1.xpose.msra.mxu0 0.0
        %1532 = vmatprep.subr.mxu0 0.0
        %1533 = vmatpush1.xpose.msra.mxu0 0.0
        %1534 = vmatprep.subr.mxu0 0.0
        %1535 = vmatpush1.xpose.msra.mxu0 0.0
        %1536 = vmatprep.subr.mxu0 0.0
        %1537 = vmatpush1.xpose.msra.mxu0 0.0
        %1538 = vmatprep.subr.mxu0 0.0
        %1539 = vmatpush1.xpose.msra.mxu0 0.0
        %1540 = vmatprep.subr.mxu0 0.0
        %1541 = vmatpush1.xpose.msra.mxu0 0.0
        %1542 = vmatprep.subr.mxu0 0.0
        %1543 = vmatpush1.xpose.msra.mxu0 0.0
        %1544 = vmatprep.subr.mxu0 0.0
        %1545 = vmatpush1.xpose.msra.mxu0 0.0
        %1546 = vmatprep.subr.mxu0 0.0
        %1547 = vmatpush1.xpose.msra.mxu0 %v1516
        %1548 = vmatprep.subr.mxu0 0.0
        %1549 = vmatpush1.xpose.msra.mxu0 %v1514
        %1550 = vmatprep.subr.mxu0 0.0
        %1551 = vmatpush2.xpose.msra.mxu0 0.0
        %1552 = vmatprep.subr.mxu0 0.0
        %1553 = vmatpush2.xpose.msra.mxu0 0.0
        %1554 = vmatprep.subr.mxu0 0.0
        %1555 = vmatpush2.xpose.msra.mxu0 0.0
        %1556 = vmatprep.subr.mxu0 0.0
        %1557 = vmatpush2.xpose.msra.mxu0 0.0
        %1558 = vmatprep.subr.mxu0 0.0
        %1559 = vmatpush2.xpose.msra.mxu0 0.0
        %1560 = vmatprep.subr.mxu0 0.0
        %1561 = vmatpush2.xpose.msra.mxu0 0.0
        %1562 = vmatprep.subr.mxu0 0.0
        %1563 = vmatpush2.xpose.msra.mxu0 0.0
        %1564 = vmatprep.subr.mxu0 0.0
        %1565 = vmatpush2.xpose.msra.mxu0 0.0
        %1566 = vmatprep.subr.mxu0 0.0
        %1567 = vmatpush2.xpose.msra.mxu0 0.0
        %1568 = vmatprep.subr.mxu0 0.0
        %1569 = vmatpush2.xpose.msra.mxu0 0.0
        %1570 = vmatprep.subr.mxu0 0.0
        %1571 = vmatpush2.xpose.msra.mxu0 0.0
        %1572 = vmatprep.subr.mxu0 0.0
        %1573 = vmatpush2.xpose.msra.mxu0 0.0
        %1574 = vmatprep.subr.mxu0 0.0
        %1575 = vmatpush2.xpose.msra.mxu0 0.0
        %1576 = vmatprep.subr.mxu0 0.0
        %1577 = vmatpush2.xpose.msra.mxu0 0.0
        %1578 = vmatprep.subr.mxu0 0.0
        %1579 = vmatpush2.xpose.msra.mxu0 0.0
        %1580 = vmatprep.subr.mxu0 0.0
        %1581 = vmatpush2.xpose.msra.mxu0 0.0
        %1582 = vmatprep.mubr.f32.mxu0 0.0
        %1583 = vmatmul.mubr.f32.gmra.mxu0 %v1512
        %v1584 = vpop.f32.mrf.mxu0
        %v1585 = vadd.f32 0.0, %v1584
        %v1586 = vpop.f32.mrf.mxu0
        %1587 = vdwg.mxu0
        %v1589 = vrot.slane %v1585, 1
        %v1591 = vsel %vm767, %v1589, 0.0
        %1592 = vrot.lane.b32.xlu0 %v1585, 1
        %v1593 = vpop.permute.xlu0 %1592
        %1596 = vrot.lane.b32.xlu0 %v1591, 18
        %v1597 = vpop.permute.xlu0 %1596
        %v1599 = vsel %vm776, 0.0, %v1593
        %v1600 = vsel %vm778, %v1599, 0.0
        %v1601 = vsel %vm780, %v1600, %v1597
        %v1602 = vsel %vm782, %v1601, 0.0
        %s1604 = sor.u32 256, 120
        %1605 = vrot.lane.b32.xlu0 %v1602, %s1604
        %v1606 = vpop.permute.xlu0 %1605
        %1607 = vrot.lane.b32.xlu0 %v674, 104
        %v1608 = vpop.permute.xlu0 %1607
        %1609 = vrot.lane.b32.xlu0 %v578, 104
        %v1610 = vpop.permute.xlu0 %1609
        %1611 = vrot.lane.b32.xlu0 %v583, 104
        %v1612 = vpop.permute.xlu0 %1611
        %v1613 = vsel %vm684, %v1608, 0
        %v1615 = vsel %vm684, %v1610, 0
        %v1617 = vsel %vm684, %v1612, 0
        %1619 = vmatprep.subr.mxu0 0.0
        %1620 = vmatpush1.xpose.msra.mxu0 0.0
        %1621 = vmatprep.subr.mxu0 0.0
        %1622 = vmatpush1.xpose.msra.mxu0 0.0
        %1623 = vmatprep.subr.mxu0 0.0
        %1624 = vmatpush1.xpose.msra.mxu0 0.0
        %1625 = vmatprep.subr.mxu0 0.0
        %1626 = vmatpush1.xpose.msra.mxu0 0.0
        %1627 = vmatprep.subr.mxu0 0.0
        %1628 = vmatpush1.xpose.msra.mxu0 0.0
        %1629 = vmatprep.subr.mxu0 0.0
        %1630 = vmatpush1.xpose.msra.mxu0 0.0
        %1631 = vmatprep.subr.mxu0 0.0
        %1632 = vmatpush1.xpose.msra.mxu0 0.0
        %1633 = vmatprep.subr.mxu0 0.0
        %1634 = vmatpush1.xpose.msra.mxu0 0.0
        %1635 = vmatprep.subr.mxu0 0.0
        %1636 = vmatpush1.xpose.msra.mxu0 0.0
        %1637 = vmatprep.subr.mxu0 0.0
        %1638 = vmatpush1.xpose.msra.mxu0 0.0
        %1639 = vmatprep.subr.mxu0 0.0
        %1640 = vmatpush1.xpose.msra.mxu0 0.0
        %1641 = vmatprep.subr.mxu0 0.0
        %1642 = vmatpush1.xpose.msra.mxu0 0.0
        %1643 = vmatprep.subr.mxu0 0.0
        %1644 = vmatpush1.xpose.msra.mxu0 0.0
        %1645 = vmatprep.subr.mxu0 0.0
        %1646 = vmatpush1.xpose.msra.mxu0 0.0
        %1647 = vmatprep.subr.mxu0 0.0
        %1648 = vmatpush1.xpose.msra.mxu0 %v1617
        %1649 = vmatprep.subr.mxu0 0.0
        %1650 = vmatpush1.xpose.msra.mxu0 %v1615
        %1651 = vmatprep.subr.mxu0 0.0
        %1652 = vmatpush2.xpose.msra.mxu0 0.0
        %1653 = vmatprep.subr.mxu0 0.0
        %1654 = vmatpush2.xpose.msra.mxu0 0.0
        %1655 = vmatprep.subr.mxu0 0.0
        %1656 = vmatpush2.xpose.msra.mxu0 0.0
        %1657 = vmatprep.subr.mxu0 0.0
        %1658 = vmatpush2.xpose.msra.mxu0 0.0
        %1659 = vmatprep.subr.mxu0 0.0
        %1660 = vmatpush2.xpose.msra.mxu0 0.0
        %1661 = vmatprep.subr.mxu0 0.0
        %1662 = vmatpush2.xpose.msra.mxu0 0.0
        %1663 = vmatprep.subr.mxu0 0.0
        %1664 = vmatpush2.xpose.msra.mxu0 0.0
        %1665 = vmatprep.subr.mxu0 0.0
        %1666 = vmatpush2.xpose.msra.mxu0 0.0
        %1667 = vmatprep.subr.mxu0 0.0
        %1668 = vmatpush2.xpose.msra.mxu0 0.0
        %1669 = vmatprep.subr.mxu0 0.0
        %1670 = vmatpush2.xpose.msra.mxu0 0.0
        %1671 = vmatprep.subr.mxu0 0.0
        %1672 = vmatpush2.xpose.msra.mxu0 0.0
        %1673 = vmatprep.subr.mxu0 0.0
        %1674 = vmatpush2.xpose.msra.mxu0 0.0
        %1675 = vmatprep.subr.mxu0 0.0
        %1676 = vmatpush2.xpose.msra.mxu0 0.0
        %1677 = vmatprep.subr.mxu0 0.0
        %1678 = vmatpush2.xpose.msra.mxu0 0.0
        %1679 = vmatprep.subr.mxu0 0.0
        %1680 = vmatpush2.xpose.msra.mxu0 0.0
        %1681 = vmatprep.subr.mxu0 0.0
        %1682 = vmatpush2.xpose.msra.mxu0 0.0
        %1683 = vmatprep.mubr.f32.mxu0 0.0
        %1684 = vmatmul.mubr.f32.gmra.mxu0 %v1613
        %v1685 = vpop.f32.mrf.mxu0
        %v1686 = vadd.f32 %v1606, %v1685
        %v1687 = vpop.f32.mrf.mxu0
        %1688 = vdwg.mxu0
        %v1689 = vadd.f32 %v1686, %v683
        %v1690 = vmul.f32 %v1689, 0.35355338
        %v1691 = vsel %vm869, %v1690, -inf
        %1692 = vmax.xlane.f32.xlu0 %v1691
        %v1693 = vpop.xlane.xlu0 %1692
        %v1694 = vsub.f32 %v1690, %v1693
        %v1695 = vmul.f32 %v1694, 1.442695
        %v1696 = vpow.pop %v1695
        %v1697 = vsel %vm869, %v1696, 0.0
        %1698 = vadd.xlane.f32.xlu0 %v1697
        %v1699 = vpop.xlane.xlu0 %1698
        %v1700 = vrcp.pop %v1699
        %1701 = vrot.lane.b32.xlu0 %v657, 104
        %v1702 = vpop.permute.xlu0 %1701
        %1703 = vrot.lane.b32.xlu0 %v662, 104
        %v1704 = vpop.permute.xlu0 %1703
        %v1708 = vsel %vm869, %v1696, 0
        %1710 = vmatprep.subr.mxu0 0.0
        %1711 = vmatpush1.msra.mxu0 0.0
        %1712 = vmatprep.subr.mxu0 0.0
        %1713 = vmatpush1.msra.mxu0 0.0
        %1714 = vmatprep.subr.mxu0 0.0
        %1715 = vmatpush1.msra.mxu0 0.0
        %1716 = vmatprep.subr.mxu0 0.0
        %1717 = vmatpush1.msra.mxu0 0.0
        %1718 = vmatprep.subr.mxu0 0.0
        %1719 = vmatpush1.msra.mxu0 0.0
        %1720 = vmatprep.subr.mxu0 0.0
        %1721 = vmatpush1.msra.mxu0 0.0
        %1722 = vmatprep.subr.mxu0 0.0
        %1723 = vmatpush1.msra.mxu0 0.0
        %1724 = vmatprep.subr.mxu0 0.0
        %1725 = vmatpush1.msra.mxu0 0.0
        %1726 = vmatprep.subr.mxu0 0.0
        %1727 = vmatpush1.msra.mxu0 0.0
        %1728 = vmatprep.subr.mxu0 0.0
        %1729 = vmatpush1.msra.mxu0 0.0
        %1730 = vmatprep.subr.mxu0 0.0
        %1731 = vmatpush1.msra.mxu0 0.0
        %1732 = vmatprep.subr.mxu0 0.0
        %1733 = vmatpush1.msra.mxu0 0.0
        %1734 = vmatprep.subr.mxu0 0.0
        %1735 = vmatpush1.msra.mxu0 0.0
        %1736 = vmatprep.subr.mxu0 0.0
        %1737 = vmatpush1.msra.mxu0 0.0
        %1738 = vmatprep.subr.mxu0 0.0
        %1739 = vmatpush1.msra.mxu0 %v1704
        %1740 = vmatprep.subr.mxu0 0.0
        %1741 = vmatpush1.msra.mxu0 %v1702
        %1742 = vmatprep.subr.mxu0 0.0
        %1743 = vmatpush2.msra.mxu0 0.0
        %1744 = vmatprep.subr.mxu0 0.0
        %1745 = vmatpush2.msra.mxu0 0.0
        %1746 = vmatprep.subr.mxu0 0.0
        %1747 = vmatpush2.msra.mxu0 0.0
        %1748 = vmatprep.subr.mxu0 0.0
        %1749 = vmatpush2.msra.mxu0 0.0
        %1750 = vmatprep.subr.mxu0 0.0
        %1751 = vmatpush2.msra.mxu0 0.0
        %1752 = vmatprep.subr.mxu0 0.0
        %1753 = vmatpush2.msra.mxu0 0.0
        %1754 = vmatprep.subr.mxu0 0.0
        %1755 = vmatpush2.msra.mxu0 0.0
        %1756 = vmatprep.subr.mxu0 0.0
        %1757 = vmatpush2.msra.mxu0 0.0
        %1758 = vmatprep.subr.mxu0 0.0
        %1759 = vmatpush2.msra.mxu0 0.0
        %1760 = vmatprep.subr.mxu0 0.0
        %1761 = vmatpush2.msra.mxu0 0.0
        %1762 = vmatprep.subr.mxu0 0.0
        %1763 = vmatpush2.msra.mxu0 0.0
        %1764 = vmatprep.subr.mxu0 0.0
        %1765 = vmatpush2.msra.mxu0 0.0
        %1766 = vmatprep.subr.mxu0 0.0
        %1767 = vmatpush2.msra.mxu0 0.0
        %1768 = vmatprep.subr.mxu0 0.0
        %1769 = vmatpush2.msra.mxu0 0.0
        %1770 = vmatprep.subr.mxu0 0.0
        %1771 = vmatpush2.msra.mxu0 0.0
        %1772 = vmatprep.subr.mxu0 0.0
        %1773 = vmatpush2.msra.mxu0 0.0
        %1774 = vmatprep.mubr.f32.mxu0 0.0
        %1775 = vmatmul.mubr.f32.gmra.mxu0 %v1708
        %v1776 = vpop.f32.mrf.mxu0
        %v1777 = vadd.f32 0.0, %v1776
        %v1778 = vpop.f32.mrf.mxu0
        %1779 = vdwg.mxu0
        %v1780 = vmul.f32 %v1777, %v1700
        %1782 = vrot.lane.b32.xlu0 %v1230, 8
        %v1783 = vpop.permute.xlu0 %1782
        %1786 = vrot.lane.b32.xlu0 %v1505, 16
        %v1787 = vpop.permute.xlu0 %1786
        %1790 = vrot.lane.b32.xlu0 %v1780, 24
        %v1791 = vpop.permute.xlu0 %1790
        %v1793 = vsel %vm684, %v953, %v1783
        %v1794 = vsel %vm869, %v1793, %v1787
        %v1795 = vsel %vm782, %v1794, %v1791
        %v1796 = vld [vmem:[#allocation11] sm:$0xff]
        %v1797 = vld [vmem:[#allocation11 + $0x8] sm:$0xff]
        %v1798 = vld [vmem:[#allocation11 + $0x10] sm:$0xff]
        %v1799 = vld [vmem:[#allocation11 + $0x18] sm:$0xff]
        %v1801 = vsel %vm430, %v1795, 0
        %1803 = vmatprep.subr.mxu0 0.0
        %1804 = vmatpush1.msra.mxu0 0.0
        %1805 = vmatprep.subr.mxu0 0.0
        %1806 = vmatpush1.msra.mxu0 0.0
        %1807 = vmatprep.subr.mxu0 0.0
        %1808 = vmatpush1.msra.mxu0 0.0
        %1809 = vmatprep.subr.mxu0 0.0
        %1810 = vmatpush1.msra.mxu0 0.0
        %1811 = vmatprep.subr.mxu0 0.0
        %1812 = vmatpush1.msra.mxu0 0.0
        %1813 = vmatprep.subr.mxu0 0.0
        %1814 = vmatpush1.msra.mxu0 0.0
        %1815 = vmatprep.subr.mxu0 0.0
        %1816 = vmatpush1.msra.mxu0 0.0
        %1817 = vmatprep.subr.mxu0 0.0
        %1818 = vmatpush1.msra.mxu0 0.0
        %1819 = vmatprep.subr.mxu0 0.0
        %1820 = vmatpush1.msra.mxu0 0.0
        %1821 = vmatprep.subr.mxu0 0.0
        %1822 = vmatpush1.msra.mxu0 0.0
        %1823 = vmatprep.subr.mxu0 0.0
        %1824 = vmatpush1.msra.mxu0 0.0
        %1825 = vmatprep.subr.mxu0 0.0
        %1826 = vmatpush1.msra.mxu0 0.0
        %1827 = vmatprep.subr.mxu0 0.0
        %1828 = vmatpush1.msra.mxu0 %v1799
        %1829 = vmatprep.subr.mxu0 0.0
        %1830 = vmatpush1.msra.mxu0 %v1798
        %1831 = vmatprep.subr.mxu0 0.0
        %1832 = vmatpush1.msra.mxu0 %v1797
        %1833 = vmatprep.subr.mxu0 0.0
        %1834 = vmatpush1.msra.mxu0 %v1796
        %1835 = vmatprep.subr.mxu0 0.0
        %1836 = vmatpush2.msra.mxu0 0.0
        %1837 = vmatprep.subr.mxu0 0.0
        %1838 = vmatpush2.msra.mxu0 0.0
        %1839 = vmatprep.subr.mxu0 0.0
        %1840 = vmatpush2.msra.mxu0 0.0
        %1841 = vmatprep.subr.mxu0 0.0
        %1842 = vmatpush2.msra.mxu0 0.0
        %1843 = vmatprep.subr.mxu0 0.0
        %1844 = vmatpush2.msra.mxu0 0.0
        %1845 = vmatprep.subr.mxu0 0.0
        %1846 = vmatpush2.msra.mxu0 0.0
        %1847 = vmatprep.subr.mxu0 0.0
        %1848 = vmatpush2.msra.mxu0 0.0
        %1849 = vmatprep.subr.mxu0 0.0
        %1850 = vmatpush2.msra.mxu0 0.0
        %1851 = vmatprep.subr.mxu0 0.0
        %1852 = vmatpush2.msra.mxu0 0.0
        %1853 = vmatprep.subr.mxu0 0.0
        %1854 = vmatpush2.msra.mxu0 0.0
        %1855 = vmatprep.subr.mxu0 0.0
        %1856 = vmatpush2.msra.mxu0 0.0
        %1857 = vmatprep.subr.mxu0 0.0
        %1858 = vmatpush2.msra.mxu0 0.0
        %1859 = vmatprep.subr.mxu0 0.0
        %1860 = vmatpush2.msra.mxu0 0.0
        %1861 = vmatprep.subr.mxu0 0.0
        %1862 = vmatpush2.msra.mxu0 0.0
        %1863 = vmatprep.subr.mxu0 0.0
        %1864 = vmatpush2.msra.mxu0 0.0
        %1865 = vmatprep.subr.mxu0 0.0
        %1866 = vmatpush2.msra.mxu0 0.0
        %1867 = vmatprep.mubr.f32.mxu0 0.0
        %1868 = vmatmul.mubr.f32.gmra.mxu0 %v1801
        %v1869 = vpop.f32.mrf.mxu0
        %v1870 = vadd.f32 0.0, %v1869
        %v1871 = vpop.f32.mrf.mxu0
        %1872 = vdwg.mxu0
        %1873 = vst.msk [vmem:[%s423] sm:$0xff] %vm430, %v1870
        %s1874 = sand.u32 %s231, 1
        %s1875 = scalar_lea.sflag [#allocation4], %s1874
        %s1876 = sand.u32 %s231, 1
        %s1877 = smul.addr %s1876, 8
        %s1878 = scalar_lea.vmem [#allocation13], %s1877
        // Predicated region
        $region81: #{tpu_custom_call.1} parent=55 // pred_check
          %p1879 = pneg %p241
        $region82: #{tpu_custom_call.1} parent=55 // pred_check_branch
          %1881 = sbr.rel (%p1879) target = $region84
        $region83: #{tpu_custom_call.1} parent=55 // pred_region
          %s1883 = ssub.s32 128, 128
          %1884 = vsyncadd %s1875, %s1883
          %s1885 = smul.addr %s29, 128
          %s1886 = scalar_lea.hbm %s9, %s1885
          %s1888 = sshll.u32 %s1878, 4
          %s1889 = int_to_ptr.vmem [resolvable:$true] %s1888
          %1891 = dma.vmem_to_hbm [thread:$0]  %s1889, 128, %s1886, %s1875
        $region84: #{tpu_custom_call.1} parent=55 // pred_fallthru
          _
      $region56: #{tpu_custom_call.1} parent=5 // pred_fallthru
        _
      %p1892 = scmp.le.s32.totalorder 2, %s24
      // Predicated region
      $region85: #{tpu_custom_call.1} parent=5 // pred_check
        %p1893 = pneg %p1892
      $region86: #{tpu_custom_call.1} parent=5 // pred_check_branch
        %1895 = sbr.rel (%p1893) target = $region88
      $region87: #{tpu_custom_call.1} parent=5 // pred_region
        %s1896 = ssub.s32 %s24, 2
        // Predicated region
        $region89: #{tpu_custom_call.1} parent=87 // pred_check
          %p1897 = pneg %p247
        $region90: #{tpu_custom_call.1} parent=87 // pred_check_branch
          %1899 = sbr.rel (%p1897) target = $region92
        $region91: #{tpu_custom_call.1} parent=87 // pred_region
          %s1900 = sand.u32 %s232, 1
          %s1901 = scalar_lea.sflag [#allocation4], %s1900
          %s1902 = sand.u32 %s232, 1
          %s1903 = smul.addr %s1902, 8
          %s1904 = scalar_lea.vmem [#allocation13], %s1903
          %1905 = dma.done %s1901, 128
        $region92: #{tpu_custom_call.1} parent=87 // pred_fallthru
          _
      $region88: #{tpu_custom_call.1} parent=5 // pred_fallthru
        _
    $region6: #{tpu_custom_call.1} parent=1 // loop_footer
      %s28 = sadd.s32 1, %s24
    $region7: #{tpu_custom_call.1} parent=1 // loop_footer_branch
      %23 = sbr.rel target = $region3
    $region8: #{tpu_custom_call.1} parent=1 // loop_exit
      _
    %1906 = vsyncpa [#allocation3], 1
    %s1907 = scalar_lea.sflag [#allocation3], 1
    %1908 = vsyncpa %s1907, 1
    %1909 = vsyncpa [#allocation6], 1
    %1910 = vsyncpa [#allocation9], 1
    %1911 = vsyncpa [#allocation12], 1
    %1912 = vsyncpa [#allocation4], 1
    %s1913 = scalar_lea.sflag [#allocation4], 1
    %1914 = vsyncpa %s1913, 1

// kernel: tpu_custom_call.1
$region0: #{tpu_custom_call.1}
  #allocation0 [shape = 'u32[]', space=smem, size = 0x4, offset = 0x4, fixed_abs, tag = 'smem constant byte address 0x4 - core index']
  #allocation1 [shape = 'u32[144,128]{1,0:T(1,128)}', space=vmem, size = 0x12000, scoped, tag = 'internal scratch']
  %s0 = inlined_call_operand.hbm [shape: f32[2,16,32], index: 0, kind: input, shape index: {}]
  %s1 = inlined_call_operand.hbm [shape: f32[16,32], index: 1, kind: input, shape index: {}]
  %s2 = inlined_call_operand.hbm [shape: f32[32,32], index: 2, kind: input, shape index: {}]
  %s3 = inlined_call_operand.hbm [shape: f32[32,32], index: 3, kind: input, shape index: {}]
  %s4 = inlined_call_operand.hbm [shape: f32[32,32], index: 4, kind: input, shape index: {}]
  %s5 = inlined_call_operand.hbm [shape: f32[32,32], index: 5, kind: input, shape index: {}]
  %s6 = inlined_call_operand.vmem [shape: f32[1,32], index: 6, kind: input, shape index: {}]
  %s7 = inlined_call_operand.vmem [shape: f32[1,32], index: 7, kind: input, shape index: {}]
  %s8 = inlined_call_operand.vmem [shape: f32[8,16], index: 8, kind: input, shape index: {}]
  %s9 = inlined_call_operand.hbm [shape: f32[2,8,32], index: 9, kind: output, shape index: {}]
  %s10 = sld [smem:[#allocation0]]
  $region93: #{tpu_custom_call.1} parent=0
    _
  %s12 = ssub.s32 1, %s10
  %s13 = scalar_select 0, %s12, %s10
  $region1: #{tpu_custom_call.1} parent=0
    #allocation2 [shape = 'u8[16384]{0}', space=vmem, size = 0x4000, scoped, tag = 'input window, operand 0']
    #allocation3 [shape = 's32[2]{0}', space=sflag, size = 0x8, scoped, tag = 'scoped memory for tpu_custom_call.1']
    #allocation4 [shape = 's32[2]{0}', space=sflag, size = 0x8, scoped, tag = 'scoped memory for tpu_custom_call.1']
    #allocation5 [shape = 'u8[8192]{0}', space=vmem, size = 0x2000, scoped, tag = 'input window, operand 1, single buffered']
    #allocation6 [shape = 's32[1]{0}', space=sflag, size = 0x4, scoped, tag = 'scoped memory for tpu_custom_call.1']
    #allocation7 [shape = 'u8[16384]{0}', space=vmem, size = 0x4000, scoped, tag = 'input window, operand 2, single buffered']
    #allocation8 [shape = 'u8[16384]{0}', space=vmem, size = 0x4000, scoped, tag = 'input window, operand 3, single buffered']
    #allocation9 [shape = 's32[1]{0}', space=sflag, size = 0x4, scoped, tag = 'scoped memory for tpu_custom_call.1']
    #allocation10 [shape = 'u8[16384]{0}', space=vmem, size = 0x4000, scoped, tag = 'input window, operand 4, single buffered']
    #allocation11 [shape = 'u8[16384]{0}', space=vmem, size = 0x4000, scoped, tag = 'input window, operand 5, single buffered']
    #allocation12 [shape = 's32[1]{0}', space=sflag, size = 0x4, scoped, tag = 'scoped memory for tpu_custom_call.1']
    #allocation13 [shape = 'u8[8192]{0}', space=vmem, size = 0x2000, scoped, tag = 'output window, operand 0']
    %14 = vsyncpa [#allocation3], 0
    %s15 = scalar_lea.sflag [#allocation3], 1
    %16 = vsyncpa %s15, 0
    %17 = vsyncpa [#allocation6], 0
    %18 = vsyncpa [#allocation9], 0
    %19 = vsyncpa [#allocation12], 0
    %20 = vsyncpa [#allocation4], 0
    %s21 = scalar_lea.sflag [#allocation4], 1
    %22 = vsyncpa %s21, 0
    loop: start=0, step=1, limit=4
    $region2: #{tpu_custom_call.1} parent=1 // loop_pre_header
      _
    $region3: #{tpu_custom_call.1} parent=1 // loop_header
      %s24 = sphi 0, %s28
      %p25 = scmp.ge.s32.totalorder %s24, 4
      %s34 = sphi 0, %s36
      %s37 = sphi 0, %s34
      %s38 = sphi 0, %s37
      %s54 = sphi 0, %s38
      %s58 = sphi 0, %s58
      %s60 = sphi 0, %s58
      %s61 = sphi 0, %s60
      %s75 = sphi 0, %s61
      %s79 = sphi 0, %s79
      %s81 = sphi 0, %s79
      %s82 = sphi 0, %s81
      %s96 = sphi 0, %s82
      %s100 = sphi 0, %s100
      %s102 = sphi 0, %s100
      %s103 = sphi 0, %s102
      %s117 = sphi 0, %s103
      %s121 = sphi 0, %s121
      %s123 = sphi 0, %s121
      %s124 = sphi 0, %s123
      %s138 = sphi 0, %s124
      %s142 = sphi 0, %s142
      %s144 = sphi 0, %s142
      %s145 = sphi 0, %s144
      %s159 = sphi 0, %s145
      %s163 = sphi 0, %s163
      %s165 = sphi 0, %s163
      %s166 = sphi 0, %s165
      %s180 = sphi 0, %s166
      %s184 = sphi 0, %s184
      %s186 = sphi 0, %s184
      %s187 = sphi 0, %s186
      %s201 = sphi 0, %s187
      %s205 = sphi 0, %s205
      %s207 = sphi 0, %s205
      %s208 = sphi 0, %s207
      %s222 = sphi 0, %s208
      %s228 = sphi 0, %s230
      %s231 = sphi 0, %s228
      %s232 = sphi 0, %s231
      %s248 = sphi 0, %s232
    $region4: #{tpu_custom_call.1} parent=1 // loop_header_branch
      %27 = sbr.rel (%p25) target = $region8
    $region5: #{tpu_custom_call.1} parent=1 // loop_body
      %s29 = ssub.s32 %s24, 1
      %s30 = ssub.s32 %s24, 2
      %s31 = sadd.s32 %s24, 1
      %s32 = ssub.s32 %s24, %s31
      %p33 = scmp.eq.s32.totalorder %s32, 0
      %s35 = sadd.s32 %s34, 1
      %s36 = scalar_select %p33, %s34, %s35
      %p39 = pneg %p33
      %p40 = scmp.eq.s32.totalorder %s24, 1
      %p41 = por %p39, %p40
      %p42 = scmp.ne.s32.totalorder %s34, %s37
      %p43 = scmp.eq.s32.totalorder %s24, 0
      %p44 = por %p42, %p43
      %p45 = scmp.ne.s32.totalorder %s34, %s37
      %p46 = scmp.eq.s32.totalorder %s29, 1
      %p47 = por %p45, %p46
      %p48 = scmp.ne.s32.totalorder %s37, %s38
      %p49 = scmp.eq.s32.totalorder %s29, 0
      %p50 = por %p48, %p49
      %p51 = scmp.ne.s32.totalorder %s37, %s38
      %p52 = scmp.eq.s32.totalorder %s30, 1
      %p53 = por %p51, %p52
      %p55 = scmp.ne.s32.totalorder %s38, %s54
      %p56 = scmp.eq.s32.totalorder %s30, 0
      %p57 = por %p55, %p56
      %s59 = sadd.s32 %s58, 1
      %p62 = scmp.eq.s32.totalorder %s24, 1
      %p63 = scmp.ne.s32.totalorder %s58, %s60
      %p64 = scmp.eq.s32.totalorder %s24, 0
      %p65 = por %p63, %p64
      %p66 = scmp.ne.s32.totalorder %s58, %s60
      %p67 = scmp.eq.s32.totalorder %s29, 1
      %p68 = por %p66, %p67
      %p69 = scmp.ne.s32.totalorder %s60, %s61
      %p70 = scmp.eq.s32.totalorder %s29, 0
      %p71 = por %p69, %p70
      %p72 = scmp.ne.s32.totalorder %s60, %s61
      %p73 = scmp.eq.s32.totalorder %s30, 1
      %p74 = por %p72, %p73
      %p76 = scmp.ne.s32.totalorder %s61, %s75
      %p77 = scmp.eq.s32.totalorder %s30, 0
      %p78 = por %p76, %p77
      %s80 = sadd.s32 %s79, 1
      %p83 = scmp.eq.s32.totalorder %s24, 1
      %p84 = scmp.ne.s32.totalorder %s79, %s81
      %p85 = scmp.eq.s32.totalorder %s24, 0
      %p86 = por %p84, %p85
      %p87 = scmp.ne.s32.totalorder %s79, %s81
      %p88 = scmp.eq.s32.totalorder %s29, 1
      %p89 = por %p87, %p88
      %p90 = scmp.ne.s32.totalorder %s81, %s82
      %p91 = scmp.eq.s32.totalorder %s29, 0
      %p92 = por %p90, %p91
      %p93 = scmp.ne.s32.totalorder %s81, %s82
      %p94 = scmp.eq.s32.totalorder %s30, 1
      %p95 = por %p93, %p94
      %p97 = scmp.ne.s32.totalorder %s82, %s96
      %p98 = scmp.eq.s32.totalorder %s30, 0
      %p99 = por %p97, %p98
      %s101 = sadd.s32 %s100, 1
      %p104 = scmp.eq.s32.totalorder %s24, 1
      %p105 = scmp.ne.s32.totalorder %s100, %s102
      %p106 = scmp.eq.s32.totalorder %s24, 0
      %p107 = por %p105, %p106
      %p108 = scmp.ne.s32.totalorder %s100, %s102
      %p109 = scmp.eq.s32.totalorder %s29, 1
      %p110 = por %p108, %p109
      %p111 = scmp.ne.s32.totalorder %s102, %s103
      %p112 = scmp.eq.s32.totalorder %s29, 0
      %p113 = por %p111, %p112
      %p114 = scmp.ne.s32.totalorder %s102, %s103
      %p115 = scmp.eq.s32.totalorder %s30, 1
      %p116 = por %p114, %p115
      %p118 = scmp.ne.s32.totalorder %s103, %s117
      %p119 = scmp.eq.s32.totalorder %s30, 0
      %p120 = por %p118, %p119
      %s122 = sadd.s32 %s121, 1
      %p125 = scmp.eq.s32.totalorder %s24, 1
      %p126 = scmp.ne.s32.totalorder %s121, %s123
      %p127 = scmp.eq.s32.totalorder %s24, 0
      %p128 = por %p126, %p127
      %p129 = scmp.ne.s32.totalorder %s121, %s123
      %p130 = scmp.eq.s32.totalorder %s29, 1
      %p131 = por %p129, %p130
      %p132 = scmp.ne.s32.totalorder %s123, %s124
      %p133 = scmp.eq.s32.totalorder %s29, 0
      %p134 = por %p132, %p133
      %p135 = scmp.ne.s32.totalorder %s123, %s124
      %p136 = scmp.eq.s32.totalorder %s30, 1
      %p137 = por %p135, %p136
      %p139 = scmp.ne.s32.totalorder %s124, %s138
      %p140 = scmp.eq.s32.totalorder %s30, 0
      %p141 = por %p139, %p140
      %s143 = sadd.s32 %s142, 1
      %p146 = scmp.eq.s32.totalorder %s24, 1
      %p147 = scmp.ne.s32.totalorder %s142, %s144
      %p148 = scmp.eq.s32.totalorder %s24, 0
      %p149 = por %p147, %p148
      %p150 = scmp.ne.s32.totalorder %s142, %s144
      %p151 = scmp.eq.s32.totalorder %s29, 1
      %p152 = por %p150, %p151
      %p153 = scmp.ne.s32.totalorder %s144, %s145
      %p154 = scmp.eq.s32.totalorder %s29, 0
      %p155 = por %p153, %p154
      %p156 = scmp.ne.s32.totalorder %s144, %s145
      %p157 = scmp.eq.s32.totalorder %s30, 1
      %p158 = por %p156, %p157
      %p160 = scmp.ne.s32.totalorder %s145, %s159
      %p161 = scmp.eq.s32.totalorder %s30, 0
      %p162 = por %p160, %p161
      %s164 = sadd.s32 %s163, 1
      %p167 = scmp.eq.s32.totalorder %s24, 1
      %p168 = scmp.ne.s32.totalorder %s163, %s165
      %p169 = scmp.eq.s32.totalorder %s24, 0
      %p170 = por %p168, %p169
      %p171 = scmp.ne.s32.totalorder %s163, %s165
      %p172 = scmp.eq.s32.totalorder %s29, 1
      %p173 = por %p171, %p172
      %p174 = scmp.ne.s32.totalorder %s165, %s166
      %p175 = scmp.eq.s32.totalorder %s29, 0
      %p176 = por %p174, %p175
      %p177 = scmp.ne.s32.totalorder %s165, %s166
      %p178 = scmp.eq.s32.totalorder %s30, 1
      %p179 = por %p177, %p178
      %p181 = scmp.ne.s32.totalorder %s166, %s180
      %p182 = scmp.eq.s32.totalorder %s30, 0
      %p183 = por %p181, %p182
      %s185 = sadd.s32 %s184, 1
      %p188 = scmp.eq.s32.totalorder %s24, 1
      %p189 = scmp.ne.s32.totalorder %s184, %s186
      %p190 = scmp.eq.s32.totalorder %s24, 0
      %p191 = por %p189, %p190
      %p192 = scmp.ne.s32.totalorder %s184, %s186
      %p193 = scmp.eq.s32.totalorder %s29, 1
      %p194 = por %p192, %p193
      %p195 = scmp.ne.s32.totalorder %s186, %s187
      %p196 = scmp.eq.s32.totalorder %s29, 0
      %p197 = por %p195, %p196
      %p198 = scmp.ne.s32.totalorder %s186, %s187
      %p199 = scmp.eq.s32.totalorder %s30, 1
      %p200 = por %p198, %p199
      %p202 = scmp.ne.s32.totalorder %s187, %s201
      %p203 = scmp.eq.s32.totalorder %s30, 0
      %p204 = por %p202, %p203
      %s206 = sadd.s32 %s205, 1
      %p209 = scmp.eq.s32.totalorder %s24, 1
      %p210 = scmp.ne.s32.totalorder %s205, %s207
      %p211 = scmp.eq.s32.totalorder %s24, 0
      %p212 = por %p210, %p211
      %p213 = scmp.ne.s32.totalorder %s205, %s207
      %p214 = scmp.eq.s32.totalorder %s29, 1
      %p215 = por %p213, %p214
      %p216 = scmp.ne.s32.totalorder %s207, %s208
      %p217 = scmp.eq.s32.totalorder %s29, 0
      %p218 = por %p216, %p217
      %p219 = scmp.ne.s32.totalorder %s207, %s208
      %p220 = scmp.eq.s32.totalorder %s30, 1
      %p221 = por %p219, %p220
      %p223 = scmp.ne.s32.totalorder %s208, %s222
      %p224 = scmp.eq.s32.totalorder %s30, 0
      %p225 = por %p223, %p224
      %s226 = ssub.s32 %s24, %s31
      %p227 = scmp.eq.s32.totalorder %s226, 0
      %s229 = sadd.s32 %s228, 1
      %s230 = scalar_select %p227, %s228, %s229
      %p233 = pneg %p227
      %p234 = scmp.eq.s32.totalorder %s24, 1
      %p235 = por %p233, %p234
      %p236 = scmp.ne.s32.totalorder %s228, %s231
      %p237 = scmp.eq.s32.totalorder %s24, 0
      %p238 = por %p236, %p237
      %p239 = scmp.ne.s32.totalorder %s228, %s231
      %p240 = scmp.eq.s32.totalorder %s29, 1
      %p241 = por %p239, %p240
      %p242 = scmp.ne.s32.totalorder %s231, %s232
      %p243 = scmp.eq.s32.totalorder %s29, 0
      %p244 = por %p242, %p243
      %p245 = scmp.ne.s32.totalorder %s231, %s232
      %p246 = scmp.eq.s32.totalorder %s30, 1
      %p247 = por %p245, %p246
      %p249 = scmp.ne.s32.totalorder %s232, %s248
      %p250 = scmp.eq.s32.totalorder %s30, 0
      %p251 = por %p249, %p250
      %p252 = scmp.le.s32.totalorder 1, %s24
      %p253 = scmp.lt.s32.totalorder %s24, 3
      %p254 = pnand %p252, %p253
      %p255 = pneg %p254
      // Predicated region
      $region9: #{tpu_custom_call.1} parent=5 // pred_check
        _
      $region10: #{tpu_custom_call.1} parent=5 // pred_check_branch
        %257 = sbr.rel (%p254) target = $region12
      $region11: #{tpu_custom_call.1} parent=5 // pred_region
        %s258 = ssub.s32 %s24, 1
        // Predicated region
        $region13: #{tpu_custom_call.1} parent=11 // pred_check
          %p259 = pneg %p71
        $region14: #{tpu_custom_call.1} parent=11 // pred_check_branch
          %261 = sbr.rel (%p259) target = $region16
        $region15: #{tpu_custom_call.1} parent=11 // pred_region
          %s263 = ssub.s32 256, 256
          %264 = vsyncadd [#allocation6], %s263
          %s265 = sshll.u32 [#allocation5], 4
          %s266 = int_to_ptr.vmem [resolvable:$true] %s265
          %271 = dma.hbm_to_vmem [thread:$0]  %s1, 256, %s266, [#allocation6], 128, 128, 8
        $region16: #{tpu_custom_call.1} parent=11 // pred_fallthru
          _
        // Predicated region
        $region17: #{tpu_custom_call.1} parent=11 // pred_check
          %p272 = pneg %p92
        $region18: #{tpu_custom_call.1} parent=11 // pred_check_branch
          %274 = sbr.rel (%p272) target = $region20
        $region19: #{tpu_custom_call.1} parent=11 // pred_region
          %s276 = ssub.s32 512, 512
          %277 = vsyncadd [#allocation6], %s276
          %s278 = sshll.u32 [#allocation7], 4
          %s279 = int_to_ptr.vmem [resolvable:$true] %s278
          %284 = dma.hbm_to_vmem [thread:$0]  %s2, 512, %s279, [#allocation6], 128, 128, 8
        $region20: #{tpu_custom_call.1} parent=11 // pred_fallthru
          _
        // Predicated region
        $region21: #{tpu_custom_call.1} parent=11 // pred_check
          %p285 = pneg %p113
        $region22: #{tpu_custom_call.1} parent=11 // pred_check_branch
          %287 = sbr.rel (%p285) target = $region24
        $region23: #{tpu_custom_call.1} parent=11 // pred_region
          %s289 = ssub.s32 512, 512
          %290 = vsyncadd [#allocation9], %s289
          %s291 = sshll.u32 [#allocation8], 4
          %s292 = int_to_ptr.vmem [resolvable:$true] %s291
          %297 = dma.hbm_to_vmem [thread:$0]  %s3, 512, %s292, [#allocation9], 128, 128, 8
        $region24: #{tpu_custom_call.1} parent=11 // pred_fallthru
          _
        // Predicated region
        $region25: #{tpu_custom_call.1} parent=11 // pred_check
          %p298 = pneg %p134
        $region26: #{tpu_custom_call.1} parent=11 // pred_check_branch
          %300 = sbr.rel (%p298) target = $region28
        $region27: #{tpu_custom_call.1} parent=11 // pred_region
          %s302 = ssub.s32 512, 512
          %303 = vsyncadd [#allocation9], %s302
          %s304 = sshll.u32 [#allocation10], 4
          %s305 = int_to_ptr.vmem [resolvable:$true] %s304
          %310 = dma.hbm_to_vmem [thread:$0]  %s4, 512, %s305, [#allocation9], 128, 128, 8
        $region28: #{tpu_custom_call.1} parent=11 // pred_fallthru
          _
        // Predicated region
        $region29: #{tpu_custom_call.1} parent=11 // pred_check
          %p311 = pneg %p155
        $region30: #{tpu_custom_call.1} parent=11 // pred_check_branch
          %313 = sbr.rel (%p311) target = $region32
        $region31: #{tpu_custom_call.1} parent=11 // pred_region
          %s315 = ssub.s32 512, 512
          %316 = vsyncadd [#allocation12], %s315
          %s317 = sshll.u32 [#allocation11], 4
          %s318 = int_to_ptr.vmem [resolvable:$true] %s317
          %323 = dma.hbm_to_vmem [thread:$0]  %s5, 512, %s318, [#allocation12], 128, 128, 8
        $region32: #{tpu_custom_call.1} parent=11 // pred_fallthru
          _
        // Predicated region
        $region33: #{tpu_custom_call.1} parent=11 // pred_check
          %p324 = pneg %p176
        $region34: #{tpu_custom_call.1} parent=11 // pred_check_branch
          %326 = sbr.rel (%p324) target = $region36
        $region35: #{tpu_custom_call.1} parent=11 // pred_region
          _
        $region36: #{tpu_custom_call.1} parent=11 // pred_fallthru
          _
        // Predicated region
        $region37: #{tpu_custom_call.1} parent=11 // pred_check
          %p327 = pneg %p197
        $region38: #{tpu_custom_call.1} parent=11 // pred_check_branch
          %329 = sbr.rel (%p327) target = $region40
        $region39: #{tpu_custom_call.1} parent=11 // pred_region
          _
        $region40: #{tpu_custom_call.1} parent=11 // pred_fallthru
          _
        // Predicated region
        $region41: #{tpu_custom_call.1} parent=11 // pred_check
          %p330 = pneg %p218
        $region42: #{tpu_custom_call.1} parent=11 // pred_check_branch
          %332 = sbr.rel (%p330) target = $region44
        $region43: #{tpu_custom_call.1} parent=11 // pred_region
          _
        $region44: #{tpu_custom_call.1} parent=11 // pred_fallthru
          _
      $region12: #{tpu_custom_call.1} parent=5 // pred_fallthru
        _
      %p333 = scmp.lt.s32.totalorder %s24, 2
      // Predicated region
      $region45: #{tpu_custom_call.1} parent=5 // pred_check
        %p334 = pneg %p333
      $region46: #{tpu_custom_call.1} parent=5 // pred_check_branch
        %336 = sbr.rel (%p334) target = $region48
      $region47: #{tpu_custom_call.1} parent=5 // pred_region
        // Predicated region
        $region49: #{tpu_custom_call.1} parent=47 // pred_check
          %p337 = pneg %p44
        $region50: #{tpu_custom_call.1} parent=47 // pred_check_branch
          %339 = sbr.rel (%p337) target = $region52
        $region51: #{tpu_custom_call.1} parent=47 // pred_region
          %s340 = sand.u32 %s34, 1
          %s341 = scalar_lea.sflag [#allocation3], %s340
          %s342 = sand.u32 %s34, 1
          %s343 = smul.addr %s342, 16
          %s344 = scalar_lea.vmem [#allocation2], %s343
          %s346 = ssub.s32 256, 256
          %347 = vsyncadd %s341, %s346
          %s348 = smul.addr %s24, 2
          %s349 = smul.addr %s348, 128
          %s350 = scalar_lea.hbm %s0, %s349
          %s351 = sshll.u32 %s344, 4
          %s352 = int_to_ptr.vmem [resolvable:$true] %s351
          %357 = dma.hbm_to_vmem [thread:$0]  %s350, 256, %s352, %s341, 128, 128, 8
        $region52: #{tpu_custom_call.1} parent=47 // pred_fallthru
          _
      $region48: #{tpu_custom_call.1} parent=5 // pred_fallthru
        _
      %p358 = scmp.le.s32.totalorder 1, %s24
      %p359 = scmp.lt.s32.totalorder %s24, 3
      %p360 = pnand %p358, %p359
      %p361 = pneg %p360
      // Predicated region
      $region53: #{tpu_custom_call.1} parent=5 // pred_check
        _
      $region54: #{tpu_custom_call.1} parent=5 // pred_check_branch
        %363 = sbr.rel (%p360) target = $region56
      $region55: #{tpu_custom_call.1} parent=5 // pred_region
        %s364 = ssub.s32 %s24, 1
        %s365 = sand.u32 %s37, 1
        %s366 = scalar_lea.sflag [#allocation3], %s365
        %s367 = sand.u32 %s37, 1
        %s368 = smul.addr %s367, 16
        %s369 = scalar_lea.vmem [#allocation2], %s368
        // Predicated region
        $region57: #{tpu_custom_call.1} parent=55 // pred_check
          %p370 = pneg %p50
        $region58: #{tpu_custom_call.1} parent=55 // pred_check_branch
          %372 = sbr.rel (%p370) target = $region60
        $region59: #{tpu_custom_call.1} parent=55 // pred_region
          %373 = dma.done %s366, 256
        $region60: #{tpu_custom_call.1} parent=55 // pred_fallthru
          _
        // Predicated region
        $region61: #{tpu_custom_call.1} parent=55 // pred_check
          %p374 = pneg %p71
        $region62: #{tpu_custom_call.1} parent=55 // pred_check_branch
          %376 = sbr.rel (%p374) target = $region64
        $region63: #{tpu_custom_call.1} parent=55 // pred_region
          %377 = dma.done [#allocation6], 256
        $region64: #{tpu_custom_call.1} parent=55 // pred_fallthru
          _
        // Predicated region
        $region65: #{tpu_custom_call.1} parent=55 // pred_check
          %p378 = pneg %p92
        $region66: #{tpu_custom_call.1} parent=55 // pred_check_branch
          %380 = sbr.rel (%p378) target = $region68
        $region67: #{tpu_custom_call.1} parent=55 // pred_region
          %381 = dma.done [#allocation6], 512
        $region68: #{tpu_custom_call.1} parent=55 // pred_fallthru
          _
        // Predicated region
        $region69: #{tpu_custom_call.1} parent=55 // pred_check
          %p382 = pneg %p113
        $region70: #{tpu_custom_call.1} parent=55 // pred_check_branch
          %384 = sbr.rel (%p382) target = $region72
        $region71: #{tpu_custom_call.1} parent=55 // pred_region
          %385 = dma.done [#allocation9], 512
        $region72: #{tpu_custom_call.1} parent=55 // pred_fallthru
          _
        // Predicated region
        $region73: #{tpu_custom_call.1} parent=55 // pred_check
          %p386 = pneg %p134
        $region74: #{tpu_custom_call.1} parent=55 // pred_check_branch
          %388 = sbr.rel (%p386) target = $region76
        $region75: #{tpu_custom_call.1} parent=55 // pred_region
          %389 = dma.done [#allocation9], 512
        $region76: #{tpu_custom_call.1} parent=55 // pred_fallthru
          _
        // Predicated region
        $region77: #{tpu_custom_call.1} parent=55 // pred_check
          %p390 = pneg %p155
        $region78: #{tpu_custom_call.1} parent=55 // pred_check_branch
          %392 = sbr.rel (%p390) target = $region80
        $region79: #{tpu_custom_call.1} parent=55 // pred_region
          %393 = dma.done [#allocation12], 512
        $region80: #{tpu_custom_call.1} parent=55 // pred_fallthru
          _
        %s394 = sand.u32 %s37, 1
        %s395 = scalar_lea.sflag [#allocation3], %s394
        %s396 = sand.u32 %s37, 1
        %s397 = smul.addr %s396, 16
        %s398 = scalar_lea.vmem [#allocation2], %s397
        %p399 = pneg %p50
        %p400 = pneg %p47
        %p401 = pneg %p71
        %p402 = pneg %p68
        %p403 = pneg %p92
        %p404 = pneg %p89
        %p405 = pneg %p113
        %p406 = pneg %p110
        %p407 = pneg %p134
        %p408 = pneg %p131
        %p409 = pneg %p155
        %p410 = pneg %p152
        %p411 = pneg %p176
        %p412 = pneg %p173
        %p413 = pneg %p197
        %p414 = pneg %p194
        %p415 = pneg %p218
        %p416 = pneg %p215
        %p417 = pneg %p244
        %p418 = pneg %p241
        %s419 = sand.u32 %s231, 1
        %s420 = scalar_lea.sflag [#allocation4], %s419
        %s421 = sand.u32 %s231, 1
        %s422 = smul.addr %s421, 8
        %s423 = scalar_lea.vmem [#allocation13], %s422
        %v424 = vld [vmem:[%s369] sm:$0xff]
        %v425 = vld [vmem:[%s369 + $0x8] sm:$0xff]
        %v426 = vld [vmem:[#allocation7] sm:$0xff]
        %v427 = vld [vmem:[#allocation7 + $0x8] sm:$0xff]
        %v428 = vld [vmem:[#allocation7 + $0x10] sm:$0xff]
        %v429 = vld [vmem:[#allocation7 + $0x18] sm:$0xff]
        %vm430 = vcmask 261120
        %v432 = vsel %vm430, %v425, 0
        %434 = vmatprep.subr.mxu0 0.0
        %435 = vmatpush1.msra.mxu0 0.0
        %436 = vmatprep.subr.mxu0 0.0
        %437 = vmatpush1.msra.mxu0 0.0
        %438 = vmatprep.subr.mxu0 0.0
        %439 = vmatpush1.msra.mxu0 0.0
        %440 = vmatprep.subr.mxu0 0.0
        %441 = vmatpush1.msra.mxu0 0.0
        %442 = vmatprep.subr.mxu0 0.0
        %443 = vmatpush1.msra.mxu0 0.0
        %444 = vmatprep.subr.mxu0 0.0
        %445 = vmatpush1.msra.mxu0 0.0
        %446 = vmatprep.subr.mxu0 0.0
        %447 = vmatpush1.msra.mxu0 0.0
        %448 = vmatprep.subr.mxu0 0.0
        %449 = vmatpush1.msra.mxu0 0.0
        %450 = vmatprep.subr.mxu0 0.0
        %451 = vmatpush1.msra.mxu0 0.0
        %452 = vmatprep.subr.mxu0 0.0
        %453 = vmatpush1.msra.mxu0 0.0
        %454 = vmatprep.subr.mxu0 0.0
        %455 = vmatpush1.msra.mxu0 0.0
        %456 = vmatprep.subr.mxu0 0.0
        %457 = vmatpush1.msra.mxu0 0.0
        %458 = vmatprep.subr.mxu0 0.0
        %459 = vmatpush1.msra.mxu0 %v429
        %460 = vmatprep.subr.mxu0 0.0
        %461 = vmatpush1.msra.mxu0 %v428
        %462 = vmatprep.subr.mxu0 0.0
        %463 = vmatpush1.msra.mxu0 %v427
        %464 = vmatprep.subr.mxu0 0.0
        %465 = vmatpush1.msra.mxu0 %v426
        %466 = vmatprep.subr.mxu0 0.0
        %467 = vmatpush2.msra.mxu0 0.0
        %468 = vmatprep.subr.mxu0 0.0
        %469 = vmatpush2.msra.mxu0 0.0
        %470 = vmatprep.subr.mxu0 0.0
        %471 = vmatpush2.msra.mxu0 0.0
        %472 = vmatprep.subr.mxu0 0.0
        %473 = vmatpush2.msra.mxu0 0.0
        %474 = vmatprep.subr.mxu0 0.0
        %475 = vmatpush2.msra.mxu0 0.0
        %476 = vmatprep.subr.mxu0 0.0
        %477 = vmatpush2.msra.mxu0 0.0
        %478 = vmatprep.subr.mxu0 0.0
        %479 = vmatpush2.msra.mxu0 0.0
        %480 = vmatprep.subr.mxu0 0.0
        %481 = vmatpush2.msra.mxu0 0.0
        %482 = vmatprep.subr.mxu0 0.0
        %483 = vmatpush2.msra.mxu0 0.0
        %484 = vmatprep.subr.mxu0 0.0
        %485 = vmatpush2.msra.mxu0 0.0
        %486 = vmatprep.subr.mxu0 0.0
        %487 = vmatpush2.msra.mxu0 0.0
        %488 = vmatprep.subr.mxu0 0.0
        %489 = vmatpush2.msra.mxu0 0.0
        %490 = vmatprep.subr.mxu0 0.0
        %491 = vmatpush2.msra.mxu0 0.0
        %492 = vmatprep.subr.mxu0 0.0
        %493 = vmatpush2.msra.mxu0 0.0
        %494 = vmatprep.subr.mxu0 0.0
        %495 = vmatpush2.msra.mxu0 0.0
        %496 = vmatprep.subr.mxu0 0.0
        %497 = vmatpush2.msra.mxu0 0.0
        %498 = vmatprep.mubr.f32.mxu0 0.0
        %499 = vmatmul.mubr.f32.gmra.mxu0 %v432
        %v500 = vpop.f32.mrf.mxu0
        %v501 = vadd.f32 0.0, %v500
        %v502 = vpop.f32.mrf.mxu0
        %503 = vdwg.mxu0
        %v504 = vld [vmem:[#allocation8] sm:$0xff]
        %v505 = vld [vmem:[#allocation8 + $0x8] sm:$0xff]
        %v506 = vld [vmem:[#allocation8 + $0x10] sm:$0xff]
        %v507 = vld [vmem:[#allocation8 + $0x18] sm:$0xff]
        %v509 = vsel %vm430, %v424, 0
        %511 = vmatprep.subr.mxu0 0.0
        %512 = vmatpush1.msra.mxu0 0.0
        %513 = vmatprep.subr.mxu0 0.0
        %514 = vmatpush1.msra.mxu0 0.0
        %515 = vmatprep.subr.mxu0 0.0
        %516 = vmatpush1.msra.mxu0 0.0
        %517 = vmatprep.subr.mxu0 0.0
        %518 = vmatpush1.msra.mxu0 0.0
        %519 = vmatprep.subr.mxu0 0.0
        %520 = vmatpush1.msra.mxu0 0.0
        %521 = vmatprep.subr.mxu0 0.0
        %522 = vmatpush1.msra.mxu0 0.0
        %523 = vmatprep.subr.mxu0 0.0
        %524 = vmatpush1.msra.mxu0 0.0
        %525 = vmatprep.subr.mxu0 0.0
        %526 = vmatpush1.msra.mxu0 0.0
        %527 = vmatprep.subr.mxu0 0.0
        %528 = vmatpush1.msra.mxu0 0.0
        %529 = vmatprep.subr.mxu0 0.0
        %530 = vmatpush1.msra.mxu0 0.0
        %531 = vmatprep.subr.mxu0 0.0
        %532 = vmatpush1.msra.mxu0 0.0
        %533 = vmatprep.subr.mxu0 0.0
        %534 = vmatpush1.msra.mxu0 0.0
        %535 = vmatprep.subr.mxu0 0.0
        %536 = vmatpush1.msra.mxu0 %v507
        %537 = vmatprep.subr.mxu0 0.0
        %538 = vmatpush1.msra.mxu0 %v506
        %539 = vmatprep.subr.mxu0 0.0
        %540 = vmatpush1.msra.mxu0 %v505
        %541 = vmatprep.subr.mxu0 0.0
        %542 = vmatpush1.msra.mxu0 %v504
        %543 = vmatprep.subr.mxu0 0.0
        %544 = vmatpush2.msra.mxu0 0.0
        %545 = vmatprep.subr.mxu0 0.0
        %546 = vmatpush2.msra.mxu0 0.0
        %547 = vmatprep.subr.mxu0 0.0
        %548 = vmatpush2.msra.mxu0 0.0
        %549 = vmatprep.subr.mxu0 0.0
        %550 = vmatpush2.msra.mxu0 0.0
        %551 = vmatprep.subr.mxu0 0.0
        %552 = vmatpush2.msra.mxu0 0.0
        %553 = vmatprep.subr.mxu0 0.0
        %554 = vmatpush2.msra.mxu0 0.0
        %555 = vmatprep.subr.mxu0 0.0
        %556 = vmatpush2.msra.mxu0 0.0
        %557 = vmatprep.subr.mxu0 0.0
        %558 = vmatpush2.msra.mxu0 0.0
        %559 = vmatprep.subr.mxu0 0.0
        %560 = vmatpush2.msra.mxu0 0.0
        %561 = vmatprep.subr.mxu0 0.0
        %562 = vmatpush2.msra.mxu0 0.0
        %563 = vmatprep.subr.mxu0 0.0
        %564 = vmatpush2.msra.mxu0 0.0
        %565 = vmatprep.subr.mxu0 0.0
        %566 = vmatpush2.msra.mxu0 0.0
        %567 = vmatprep.subr.mxu0 0.0
        %568 = vmatpush2.msra.mxu0 0.0
        %569 = vmatprep.subr.mxu0 0.0
        %570 = vmatpush2.msra.mxu0 0.0
        %571 = vmatprep.subr.mxu0 0.0
        %572 = vmatpush2.msra.mxu0 0.0
        %573 = vmatprep.subr.mxu0 0.0
        %574 = vmatpush2.msra.mxu0 0.0
        %575 = vmatprep.mubr.f32.mxu0 0.0
        %576 = vmatmul.mubr.f32.gmra.mxu0 %v509
        %v577 = vpop.f32.mrf.mxu0
        %v578 = vadd.f32 0.0, %v577
        %v579 = vpop.f32.mrf.mxu0
        %580 = vmatprep.mubr.f32.mxu0 0.0
        %581 = vmatmul.mubr.f32.gmra.mxu0 %v432
        %v582 = vpop.f32.mrf.mxu0
        %v583 = vadd.f32 0.0, %v582
        %v584 = vpop.f32.mrf.mxu0
        %585 = vdwg.mxu0
        %v586 = vld [vmem:[#allocation10] sm:$0xff]
        %v587 = vld [vmem:[#allocation10 + $0x8] sm:$0xff]
        %v588 = vld [vmem:[#allocation10 + $0x10] sm:$0xff]
        %v589 = vld [vmem:[#allocation10 + $0x18] sm:$0xff]
        %590 = vmatprep.subr.mxu0 0.0
        %591 = vmatpush1.msra.mxu0 0.0
        %592 = vmatprep.subr.mxu0 0.0
        %593 = vmatpush1.msra.mxu0 0.0
        %594 = vmatprep.subr.mxu0 0.0
        %595 = vmatpush1.msra.mxu0 0.0
        %596 = vmatprep.subr.mxu0 0.0
        %597 = vmatpush1.msra.mxu0 0.0
        %598 = vmatprep.subr.mxu0 0.0
        %599 = vmatpush1.msra.mxu0 0.0
        %600 = vmatprep.subr.mxu0 0.0
        %601 = vmatpush1.msra.mxu0 0.0
        %602 = vmatprep.subr.mxu0 0.0
        %603 = vmatpush1.msra.mxu0 0.0
        %604 = vmatprep.subr.mxu0 0.0
        %605 = vmatpush1.msra.mxu0 0.0
        %606 = vmatprep.subr.mxu0 0.0
        %607 = vmatpush1.msra.mxu0 0.0
        %608 = vmatprep.subr.mxu0 0.0
        %609 = vmatpush1.msra.mxu0 0.0
        %610 = vmatprep.subr.mxu0 0.0
        %611 = vmatpush1.msra.mxu0 0.0
        %612 = vmatprep.subr.mxu0 0.0
        %613 = vmatpush1.msra.mxu0 0.0
        %614 = vmatprep.subr.mxu0 0.0
        %615 = vmatpush1.msra.mxu0 %v589
        %616 = vmatprep.subr.mxu0 0.0
        %617 = vmatpush1.msra.mxu0 %v588
        %618 = vmatprep.subr.mxu0 0.0
        %619 = vmatpush1.msra.mxu0 %v587
        %620 = vmatprep.subr.mxu0 0.0
        %621 = vmatpush1.msra.mxu0 %v586
        %622 = vmatprep.subr.mxu0 0.0
        %623 = vmatpush2.msra.mxu0 0.0
        %624 = vmatprep.subr.mxu0 0.0
        %625 = vmatpush2.msra.mxu0 0.0
        %626 = vmatprep.subr.mxu0 0.0
        %627 = vmatpush2.msra.mxu0 0.0
        %628 = vmatprep.subr.mxu0 0.0
        %629 = vmatpush2.msra.mxu0 0.0
        %630 = vmatprep.subr.mxu0 0.0
        %631 = vmatpush2.msra.mxu0 0.0
        %632 = vmatprep.subr.mxu0 0.0
        %633 = vmatpush2.msra.mxu0 0.0
        %634 = vmatprep.subr.mxu0 0.0
        %635 = vmatpush2.msra.mxu0 0.0
        %636 = vmatprep.subr.mxu0 0.0
        %637 = vmatpush2.msra.mxu0 0.0
        %638 = vmatprep.subr.mxu0 0.0
        %639 = vmatpush2.msra.mxu0 0.0
        %640 = vmatprep.subr.mxu0 0.0
        %641 = vmatpush2.msra.mxu0 0.0
        %642 = vmatprep.subr.mxu0 0.0
        %643 = vmatpush2.msra.mxu0 0.0
        %644 = vmatprep.subr.mxu0 0.0
        %645 = vmatpush2.msra.mxu0 0.0
        %646 = vmatprep.subr.mxu0 0.0
        %647 = vmatpush2.msra.mxu0 0.0
        %648 = vmatprep.subr.mxu0 0.0
        %649 = vmatpush2.msra.mxu0 0.0
        %650 = vmatprep.subr.mxu0 0.0
        %651 = vmatpush2.msra.mxu0 0.0
        %652 = vmatprep.subr.mxu0 0.0
        %653 = vmatpush2.msra.mxu0 0.0
        %654 = vmatprep.mubr.f32.mxu0 0.0
        %655 = vmatmul.mubr.f32.gmra.mxu0 %v509
        %v656 = vpop.f32.mrf.mxu0
        %v657 = vadd.f32 0.0, %v656
        %v658 = vpop.f32.mrf.mxu0
        %659 = vmatprep.mubr.f32.mxu0 0.0
        %660 = vmatmul.mubr.f32.gmra.mxu0 %v432
        %v661 = vpop.f32.mrf.mxu0
        %v662 = vadd.f32 0.0, %v661
        %v663 = vpop.f32.mrf.mxu0
        %664 = vdwg.mxu0
        %v665 = vld [vmem:[#allocation5] sm:$0xff]
        %v666 = vld [vmem:[#allocation5 + $0x8] sm:$0xff]
        %v667 = vld [vmem:[%s6] sm:$0x1]
        %v669 = vlaneseq
        %v670 = vshrl.u32 %v669, 7
        %v671 = vsub.s32 0, %v670
        %v672 = vrot.slane %v667, %v671
        %v674 = vadd.f32 %v501, %v672
        %v675 = vld [vmem:[%s7] sm:$0x1]
        %v677 = vlaneseq
        %v678 = vshrl.u32 %v677, 7
        %v679 = vsub.s32 0, %v678
        %v680 = vrot.slane %v675, %v679
        %v682 = vadd.f32 %v501, %v680
        %v683 = vld [vmem:[%s8] sm:$0xff]
        %vm684 = vcmask 64512
        %v686 = vsel %vm684, %v682, 0
        %v689 = vsel %vm684, %v665, 0
        %v692 = vsel %vm684, %v666, 0
        %694 = vmatprep.subr.mxu0 0.0
        %695 = vmatpush1.xpose.msra.mxu0 0.0
        %696 = vmatprep.subr.mxu0 0.0
        %697 = vmatpush1.xpose.msra.mxu0 0.0
        %698 = vmatprep.subr.mxu0 0.0
        %699 = vmatpush1.xpose.msra.mxu0 0.0
        %700 = vmatprep.subr.mxu0 0.0
        %701 = vmatpush1.xpose.msra.mxu0 0.0
        %702 = vmatprep.subr.mxu0 0.0
        %703 = vmatpush1.xpose.msra.mxu0 0.0
        %704 = vmatprep.subr.mxu0 0.0
        %705 = vmatpush1.xpose.msra.mxu0 0.0
        %706 = vmatprep.subr.mxu0 0.0
        %707 = vmatpush1.xpose.msra.mxu0 0.0
        %708 = vmatprep.subr.mxu0 0.0
        %709 = vmatpush1.xpose.msra.mxu0 0.0
        %710 = vmatprep.subr.mxu0 0.0
        %711 = vmatpush1.xpose.msra.mxu0 0.0
        %712 = vmatprep.subr.mxu0 0.0
        %713 = vmatpush1.xpose.msra.mxu0 0.0
        %714 = vmatprep.subr.mxu0 0.0
        %715 = vmatpush1.xpose.msra.mxu0 0.0
        %716 = vmatprep.subr.mxu0 0.0
        %717 = vmatpush1.xpose.msra.mxu0 0.0
        %718 = vmatprep.subr.mxu0 0.0
        %719 = vmatpush1.xpose.msra.mxu0 0.0
        %720 = vmatprep.subr.mxu0 0.0
        %721 = vmatpush1.xpose.msra.mxu0 0.0
        %722 = vmatprep.subr.mxu0 0.0
        %723 = vmatpush1.xpose.msra.mxu0 %v692
        %724 = vmatprep.subr.mxu0 0.0
        %725 = vmatpush1.xpose.msra.mxu0 %v689
        %726 = vmatprep.subr.mxu0 0.0
        %727 = vmatpush2.xpose.msra.mxu0 0.0
        %728 = vmatprep.subr.mxu0 0.0
        %729 = vmatpush2.xpose.msra.mxu0 0.0
        %730 = vmatprep.subr.mxu0 0.0
        %731 = vmatpush2.xpose.msra.mxu0 0.0
        %732 = vmatprep.subr.mxu0 0.0
        %733 = vmatpush2.xpose.msra.mxu0 0.0
        %734 = vmatprep.subr.mxu0 0.0
        %735 = vmatpush2.xpose.msra.mxu0 0.0
        %736 = vmatprep.subr.mxu0 0.0
        %737 = vmatpush2.xpose.msra.mxu0 0.0
        %738 = vmatprep.subr.mxu0 0.0
        %739 = vmatpush2.xpose.msra.mxu0 0.0
        %740 = vmatprep.subr.mxu0 0.0
        %741 = vmatpush2.xpose.msra.mxu0 0.0
        %742 = vmatprep.subr.mxu0 0.0
        %743 = vmatpush2.xpose.msra.mxu0 0.0
        %744 = vmatprep.subr.mxu0 0.0
        %745 = vmatpush2.xpose.msra.mxu0 0.0
        %746 = vmatprep.subr.mxu0 0.0
        %747 = vmatpush2.xpose.msra.mxu0 0.0
        %748 = vmatprep.subr.mxu0 0.0
        %749 = vmatpush2.xpose.msra.mxu0 0.0
        %750 = vmatprep.subr.mxu0 0.0
        %751 = vmatpush2.xpose.msra.mxu0 0.0
        %752 = vmatprep.subr.mxu0 0.0
        %753 = vmatpush2.xpose.msra.mxu0 0.0
        %754 = vmatprep.subr.mxu0 0.0
        %755 = vmatpush2.xpose.msra.mxu0 0.0
        %756 = vmatprep.subr.mxu0 0.0
        %757 = vmatpush2.xpose.msra.mxu0 0.0
        %758 = vmatprep.mubr.f32.mxu0 0.0
        %759 = vmatmul.mubr.f32.gmra.mxu0 %v686
        %v760 = vpop.f32.mrf.mxu0
        %v761 = vadd.f32 0.0, %v760
        %v762 = vpop.f32.mrf.mxu0
        %763 = vdwg.mxu0
        %v765 = vrot.slane %v761, 1
        %vm767 = vcmask 1046528
        %v768 = vsel %vm767, %v765, 0.0
        %769 = vrot.lane.b32.xlu0 %v761, 1
        %v770 = vpop.permute.xlu0 %769
        %773 = vrot.lane.b32.xlu0 %v768, 18
        %v774 = vpop.permute.xlu0 %773
        %vm776 = vcmask 7168
        %v777 = vsel %vm776, 0.0, %v770
        %vm778 = vcmask 138240
        %v779 = vsel %vm778, %v777, 0.0
        %vm780 = vcmask 146432
        %v781 = vsel %vm780, %v779, %v774
        %vm782 = vcmask 195584
        %v783 = vsel %vm782, %v781, 0.0
        %v784 = vlaneseq
        %v785 = vshrl.u32 %v784, 7
        %v786 = vsub.s32 8, %v785
        %788 = vrot.lane.b32.xlu0 %v783, 127
        %v789 = vpop.permute.xlu0 %788
        %v791 = vand.u32 %v786, 1
        %vm792 = vcmp.ne.s32.totalorder %v791, 0
        %v793 = vsel %vm792, %v789, %v783
        %795 = vrot.lane.b32.xlu0 %v793, 126
        %v796 = vpop.permute.xlu0 %795
        %v798 = vand.u32 %v786, 2
        %vm799 = vcmp.ne.s32.totalorder %v798, 0
        %v800 = vsel %vm799, %v796, %v793
        %802 = vrot.lane.b32.xlu0 %v800, 124
        %v803 = vpop.permute.xlu0 %802
        %v805 = vand.u32 %v786, 4
        %vm806 = vcmp.ne.s32.totalorder %v805, 0
        %v807 = vsel %vm806, %v803, %v800
        %809 = vrot.lane.b32.xlu0 %v807, 120
        %v810 = vpop.permute.xlu0 %809
        %v812 = vand.u32 %v786, 8
        %vm813 = vcmp.ne.s32.totalorder %v812, 0
        %v814 = vsel %vm813, %v810, %v807
        %v816 = vsel %vm684, %v674, 0
        %v819 = vsel %vm684, %v578, 0
        %v822 = vsel %vm684, %v583, 0
        %824 = vmatprep.subr.mxu0 0.0
        %825 = vmatpush1.xpose.msra.mxu0 0.0
        %826 = vmatprep.subr.mxu0 0.0
        %827 = vmatpush1.xpose.msra.mxu0 0.0
        %828 = vmatprep.subr.mxu0 0.0
        %829 = vmatpush1.xpose.msra.mxu0 0.0
        %830 = vmatprep.subr.mxu0 0.0
        %831 = vmatpush1.xpose.msra.mxu0 0.0
        %832 = vmatprep.subr.mxu0 0.0
        %833 = vmatpush1.xpose.msra.mxu0 0.0
        %834 = vmatprep.subr.mxu0 0.0
        %835 = vmatpush1.xpose.msra.mxu0 0.0
        %836 = vmatprep.subr.mxu0 0.0
        %837 = vmatpush1.xpose.msra.mxu0 0.0
        %838 = vmatprep.subr.mxu0 0.0
        %839 = vmatpush1.xpose.msra.mxu0 0.0
        %840 = vmatprep.subr.mxu0 0.0
        %841 = vmatpush1.xpose.msra.mxu0 0.0
        %842 = vmatprep.subr.mxu0 0.0
        %843 = vmatpush1.xpose.msra.mxu0 0.0
        %844 = vmatprep.subr.mxu0 0.0
        %845 = vmatpush1.xpose.msra.mxu0 0.0
        %846 = vmatprep.subr.mxu0 0.0
        %847 = vmatpush1.xpose.msra.mxu0 0.0
        %848 = vmatprep.subr.mxu0 0.0
        %849 = vmatpush1.xpose.msra.mxu0 0.0
        %850 = vmatprep.subr.mxu0 0.0
        %851 = vmatpush1.xpose.msra.mxu0 0.0
        %852 = vmatprep.subr.mxu0 0.0
        %853 = vmatpush1.xpose.msra.mxu0 %v822
        %854 = vmatprep.subr.mxu0 0.0
        %855 = vmatpush1.xpose.msra.mxu0 %v819
        %856 = vmatprep.subr.mxu0 0.0
        %857 = vmatpush2.xpose.msra.mxu0 0.0
        %858 = vmatprep.subr.mxu0 0.0
        %859 = vmatpush2.xpose.msra.mxu0 0.0
        %860 = vmatprep.subr.mxu0 0.0
        %861 = vmatpush2.xpose.msra.mxu0 0.0
        %862 = vmatprep.subr.mxu0 0.0
        %863 = vmatpush2.xpose.msra.mxu0 0.0
        %864 = vmatprep.subr.mxu0 0.0
        %865 = vmatpush2.xpose.msra.mxu0 0.0
        %866 = vmatprep.subr.mxu0 0.0
        %867 = vmatpush2.xpose.msra.mxu0 0.0
        %868 = vmatprep.subr.mxu0 0.0
        %869 = vmatpush2.xpose.msra.mxu0 0.0
        %870 = vmatprep.subr.mxu0 0.0
        %871 = vmatpush2.xpose.msra.mxu0 0.0
        %872 = vmatprep.subr.mxu0 0.0
        %873 = vmatpush2.xpose.msra.mxu0 0.0
        %874 = vmatprep.subr.mxu0 0.0
        %875 = vmatpush2.xpose.msra.mxu0 0.0
        %876 = vmatprep.subr.mxu0 0.0
        %877 = vmatpush2.xpose.msra.mxu0 0.0
        %878 = vmatprep.subr.mxu0 0.0
        %879 = vmatpush2.xpose.msra.mxu0 0.0
        %880 = vmatprep.subr.mxu0 0.0
        %881 = vmatpush2.xpose.msra.mxu0 0.0
        %882 = vmatprep.subr.mxu0 0.0
        %883 = vmatpush2.xpose.msra.mxu0 0.0
        %884 = vmatprep.subr.mxu0 0.0
        %885 = vmatpush2.xpose.msra.mxu0 0.0
        %886 = vmatprep.subr.mxu0 0.0
        %887 = vmatpush2.xpose.msra.mxu0 0.0
        %888 = vmatprep.mubr.f32.mxu0 0.0
        %889 = vmatmul.mubr.f32.gmra.mxu0 %v816
        %v890 = vpop.f32.mrf.mxu0
        %v891 = vadd.f32 %v814, %v890
        %v892 = vpop.f32.mrf.mxu0
        %893 = vdwg.mxu0
        %v894 = vadd.f32 %v891, %v683
        %v895 = vmul.f32 %v894, 0.35355338
        %vm896 = vcmask 130048
        %v897 = vsel %vm896, %v895, -inf
        %898 = vmax.xlane.f32.xlu0 %v897
        %v899 = vpop.xlane.xlu0 %898
        %v900 = vsub.f32 %v895, %v899
        %v901 = vmul.f32 %v900, 1.442695
        %v902 = vpow.pop %v901
        %v903 = vsel %vm896, %v902, 0.0
        %904 = vadd.xlane.f32.xlu0 %v903
        %v905 = vpop.xlane.xlu0 %904
        %v906 = vrcp.pop %v905
        %v908 = vsel %vm896, %v902, 0
        %910 = vmatprep.subr.mxu0 0.0
        %911 = vmatpush1.msra.mxu0 0.0
        %912 = vmatprep.subr.mxu0 0.0
        %913 = vmatpush1.msra.mxu0 0.0
        %914 = vmatprep.subr.mxu0 0.0
        %915 = vmatpush1.msra.mxu0 0.0
        %916 = vmatprep.subr.mxu0 0.0
        %917 = vmatpush1.msra.mxu0 0.0
        %918 = vmatprep.subr.mxu0 0.0
        %919 = vmatpush1.msra.mxu0 0.0
        %920 = vmatprep.subr.mxu0 0.0
        %921 = vmatpush1.msra.mxu0 0.0
        %922 = vmatprep.subr.mxu0 0.0
        %923 = vmatpush1.msra.mxu0 0.0
        %924 = vmatprep.subr.mxu0 0.0
        %925 = vmatpush1.msra.mxu0 0.0
        %926 = vmatprep.subr.mxu0 0.0
        %927 = vmatpush1.msra.mxu0 0.0
        %928 = vmatprep.subr.mxu0 0.0
        %929 = vmatpush1.msra.mxu0 0.0
        %930 = vmatprep.subr.mxu0 0.0
        %931 = vmatpush1.msra.mxu0 0.0
        %932 = vmatprep.subr.mxu0 0.0
        %933 = vmatpush1.msra.mxu0 0.0
        %934 = vmatprep.subr.mxu0 0.0
        %935 = vmatpush1.msra.mxu0 0.0
        %936 = vmatprep.subr.mxu0 0.0
        %937 = vmatpush1.msra.mxu0 0.0
        %938 = vmatprep.subr.mxu0 0.0
        %939 = vmatpush1.msra.mxu0 %v662
        %940 = vmatprep.subr.mxu0 0.0
        %941 = vmatpush1.msra.mxu0 %v657
        %942 = vmatprep.subr.mxu0 0.0
        %943 = vmatpush2.msra.mxu0 0.0
        %944 = vmatprep.subr.mxu0 0.0
        %945 = vmatpush2.msra.mxu0 0.0
        %946 = vmatprep.subr.mxu0 0.0
        %947 = vmatpush2.msra.mxu0 0.0
        %948 = vmatprep.subr.mxu0 0.0
        %949 = vmatpush2.msra.mxu0 0.0
        %950 = vmatprep.subr.mxu0 0.0
        %951 = vmatpush2.msra.mxu0 0.0
        %952 = vmatprep.subr.mxu0 0.0
        %953 = vmatpush2.msra.mxu0 0.0
        %954 = vmatprep.subr.mxu0 0.0
        %955 = vmatpush2.msra.mxu0 0.0
        %956 = vmatprep.subr.mxu0 0.0
        %957 = vmatpush2.msra.mxu0 0.0
        %958 = vmatprep.subr.mxu0 0.0
        %959 = vmatpush2.msra.mxu0 0.0
        %960 = vmatprep.subr.mxu0 0.0
        %961 = vmatpush2.msra.mxu0 0.0
        %962 = vmatprep.subr.mxu0 0.0
        %963 = vmatpush2.msra.mxu0 0.0
        %964 = vmatprep.subr.mxu0 0.0
        %965 = vmatpush2.msra.mxu0 0.0
        %966 = vmatprep.subr.mxu0 0.0
        %967 = vmatpush2.msra.mxu0 0.0
        %968 = vmatprep.subr.mxu0 0.0
        %969 = vmatpush2.msra.mxu0 0.0
        %970 = vmatprep.subr.mxu0 0.0
        %971 = vmatpush2.msra.mxu0 0.0
        %972 = vmatprep.subr.mxu0 0.0
        %973 = vmatpush2.msra.mxu0 0.0
        %974 = vmatprep.mubr.f32.mxu0 0.0
        %975 = vmatmul.mubr.f32.gmra.mxu0 %v908
        %v976 = vpop.f32.mrf.mxu0
        %v977 = vadd.f32 0.0, %v976
        %v978 = vpop.f32.mrf.mxu0
        %979 = vdwg.mxu0
        %v980 = vmul.f32 %v977, %v906
        %981 = vrot.lane.b32.xlu0 %v682, 120
        %v982 = vpop.permute.xlu0 %981
        %983 = vrot.lane.b32.xlu0 %v665, 120
        %v984 = vpop.permute.xlu0 %983
        %985 = vrot.lane.b32.xlu0 %v666, 120
        %v986 = vpop.permute.xlu0 %985
        %v987 = vsel %vm684, %v982, 0
        %v989 = vsel %vm684, %v984, 0
        %v991 = vsel %vm684, %v986, 0
        %993 = vmatprep.subr.mxu0 0.0
        %994 = vmatpush1.xpose.msra.mxu0 0.0
        %995 = vmatprep.subr.mxu0 0.0
        %996 = vmatpush1.xpose.msra.mxu0 0.0
        %997 = vmatprep.subr.mxu0 0.0
        %998 = vmatpush1.xpose.msra.mxu0 0.0
        %999 = vmatprep.subr.mxu0 0.0
        %1000 = vmatpush1.xpose.msra.mxu0 0.0
        %1001 = vmatprep.subr.mxu0 0.0
        %1002 = vmatpush1.xpose.msra.mxu0 0.0
        %1003 = vmatprep.subr.mxu0 0.0
        %1004 = vmatpush1.xpose.msra.mxu0 0.0
        %1005 = vmatprep.subr.mxu0 0.0
        %1006 = vmatpush1.xpose.msra.mxu0 0.0
        %1007 = vmatprep.subr.mxu0 0.0
        %1008 = vmatpush1.xpose.msra.mxu0 0.0
        %1009 = vmatprep.subr.mxu0 0.0
        %1010 = vmatpush1.xpose.msra.mxu0 0.0
        %1011 = vmatprep.subr.mxu0 0.0
        %1012 = vmatpush1.xpose.msra.mxu0 0.0
        %1013 = vmatprep.subr.mxu0 0.0
        %1014 = vmatpush1.xpose.msra.mxu0 0.0
        %1015 = vmatprep.subr.mxu0 0.0
        %1016 = vmatpush1.xpose.msra.mxu0 0.0
        %1017 = vmatprep.subr.mxu0 0.0
        %1018 = vmatpush1.xpose.msra.mxu0 0.0
        %1019 = vmatprep.subr.mxu0 0.0
        %1020 = vmatpush1.xpose.msra.mxu0 0.0
        %1021 = vmatprep.subr.mxu0 0.0
        %1022 = vmatpush1.xpose.msra.mxu0 %v991
        %1023 = vmatprep.subr.mxu0 0.0
        %1024 = vmatpush1.xpose.msra.mxu0 %v989
        %1025 = vmatprep.subr.mxu0 0.0
        %1026 = vmatpush2.xpose.msra.mxu0 0.0
        %1027 = vmatprep.subr.mxu0 0.0
        %1028 = vmatpush2.xpose.msra.mxu0 0.0
        %1029 = vmatprep.subr.mxu0 0.0
        %1030 = vmatpush2.xpose.msra.mxu0 0.0
        %1031 = vmatprep.subr.mxu0 0.0
        %1032 = vmatpush2.xpose.msra.mxu0 0.0
        %1033 = vmatprep.subr.mxu0 0.0
        %1034 = vmatpush2.xpose.msra.mxu0 0.0
        %1035 = vmatprep.subr.mxu0 0.0
        %1036 = vmatpush2.xpose.msra.mxu0 0.0
        %1037 = vmatprep.subr.mxu0 0.0
        %1038 = vmatpush2.xpose.msra.mxu0 0.0
        %1039 = vmatprep.subr.mxu0 0.0
        %1040 = vmatpush2.xpose.msra.mxu0 0.0
        %1041 = vmatprep.subr.mxu0 0.0
        %1042 = vmatpush2.xpose.msra.mxu0 0.0
        %1043 = vmatprep.subr.mxu0 0.0
        %1044 = vmatpush2.xpose.msra.mxu0 0.0
        %1045 = vmatprep.subr.mxu0 0.0
        %1046 = vmatpush2.xpose.msra.mxu0 0.0
        %1047 = vmatprep.subr.mxu0 0.0
        %1048 = vmatpush2.xpose.msra.mxu0 0.0
        %1049 = vmatprep.subr.mxu0 0.0
        %1050 = vmatpush2.xpose.msra.mxu0 0.0
        %1051 = vmatprep.subr.mxu0 0.0
        %1052 = vmatpush2.xpose.msra.mxu0 0.0
        %1053 = vmatprep.subr.mxu0 0.0
        %1054 = vmatpush2.xpose.msra.mxu0 0.0
        %1055 = vmatprep.subr.mxu0 0.0
        %1056 = vmatpush2.xpose.msra.mxu0 0.0
        %1057 = vmatprep.mubr.f32.mxu0 0.0
        %1058 = vmatmul.mubr.f32.gmra.mxu0 %v987
        %v1059 = vpop.f32.mrf.mxu0
        %v1060 = vadd.f32 0.0, %v1059
        %v1061 = vpop.f32.mrf.mxu0
        %1062 = vdwg.mxu0
        %v1064 = vrot.slane %v1060, 1
        %v1066 = vsel %vm767, %v1064, 0.0
        %1067 = vrot.lane.b32.xlu0 %v1060, 1
        %v1068 = vpop.permute.xlu0 %1067
        %1071 = vrot.lane.b32.xlu0 %v1066, 18
        %v1072 = vpop.permute.xlu0 %1071
        %v1074 = vsel %vm776, 0.0, %v1068
        %v1075 = vsel %vm778, %v1074, 0.0
        %v1076 = vsel %vm780, %v1075, %v1072
        %v1077 = vsel %vm782, %v1076, 0.0
        %1079 = vrot.lane.b32.xlu0 %v1077, 127
        %v1080 = vpop.permute.xlu0 %1079
        %v1082 = vsel %vm792, %v1080, %v1077
        %1084 = vrot.lane.b32.xlu0 %v1082, 126
        %v1085 = vpop.permute.xlu0 %1084
        %v1087 = vsel %vm799, %v1085, %v1082
        %1089 = vrot.lane.b32.xlu0 %v1087, 124
        %v1090 = vpop.permute.xlu0 %1089
        %v1092 = vsel %vm806, %v1090, %v1087
        %1094 = vrot.lane.b32.xlu0 %v1092, 120
        %v1095 = vpop.permute.xlu0 %1094
        %v1097 = vsel %vm813, %v1095, %v1092
        %1098 = vrot.lane.b32.xlu0 %v674, 120
        %v1099 = vpop.permute.xlu0 %1098
        %1100 = vrot.lane.b32.xlu0 %v578, 120
        %v1101 = vpop.permute.xlu0 %1100
        %1102 = vrot.lane.b32.xlu0 %v583, 120
        %v1103 = vpop.permute.xlu0 %1102
        %v1104 = vsel %vm684, %v1099, 0
        %v1106 = vsel %vm684, %v1101, 0
        %v1108 = vsel %vm684, %v1103, 0
        %1110 = vmatprep.subr.mxu0 0.0
        %1111 = vmatpush1.xpose.msra.mxu0 0.0
        %1112 = vmatprep.subr.mxu0 0.0
        %1113 = vmatpush1.xpose.msra.mxu0 0.0
        %1114 = vmatprep.subr.mxu0 0.0
        %1115 = vmatpush1.xpose.msra.mxu0 0.0
        %1116 = vmatprep.subr.mxu0 0.0
        %1117 = vmatpush1.xpose.msra.mxu0 0.0
        %1118 = vmatprep.subr.mxu0 0.0
        %1119 = vmatpush1.xpose.msra.mxu0 0.0
        %1120 = vmatprep.subr.mxu0 0.0
        %1121 = vmatpush1.xpose.msra.mxu0 0.0
        %1122 = vmatprep.subr.mxu0 0.0
        %1123 = vmatpush1.xpose.msra.mxu0 0.0
        %1124 = vmatprep.subr.mxu0 0.0
        %1125 = vmatpush1.xpose.msra.mxu0 0.0
        %1126 = vmatprep.subr.mxu0 0.0
        %1127 = vmatpush1.xpose.msra.mxu0 0.0
        %1128 = vmatprep.subr.mxu0 0.0
        %1129 = vmatpush1.xpose.msra.mxu0 0.0
        %1130 = vmatprep.subr.mxu0 0.0
        %1131 = vmatpush1.xpose.msra.mxu0 0.0
        %1132 = vmatprep.subr.mxu0 0.0
        %1133 = vmatpush1.xpose.msra.mxu0 0.0
        %1134 = vmatprep.subr.mxu0 0.0
        %1135 = vmatpush1.xpose.msra.mxu0 0.0
        %1136 = vmatprep.subr.mxu0 0.0
        %1137 = vmatpush1.xpose.msra.mxu0 0.0
        %1138 = vmatprep.subr.mxu0 0.0
        %1139 = vmatpush1.xpose.msra.mxu0 %v1108
        %1140 = vmatprep.subr.mxu0 0.0
        %1141 = vmatpush1.xpose.msra.mxu0 %v1106
        %1142 = vmatprep.subr.mxu0 0.0
        %1143 = vmatpush2.xpose.msra.mxu0 0.0
        %1144 = vmatprep.subr.mxu0 0.0
        %1145 = vmatpush2.xpose.msra.mxu0 0.0
        %1146 = vmatprep.subr.mxu0 0.0
        %1147 = vmatpush2.xpose.msra.mxu0 0.0
        %1148 = vmatprep.subr.mxu0 0.0
        %1149 = vmatpush2.xpose.msra.mxu0 0.0
        %1150 = vmatprep.subr.mxu0 0.0
        %1151 = vmatpush2.xpose.msra.mxu0 0.0
        %1152 = vmatprep.subr.mxu0 0.0
        %1153 = vmatpush2.xpose.msra.mxu0 0.0
        %1154 = vmatprep.subr.mxu0 0.0
        %1155 = vmatpush2.xpose.msra.mxu0 0.0
        %1156 = vmatprep.subr.mxu0 0.0
        %1157 = vmatpush2.xpose.msra.mxu0 0.0
        %1158 = vmatprep.subr.mxu0 0.0
        %1159 = vmatpush2.xpose.msra.mxu0 0.0
        %1160 = vmatprep.subr.mxu0 0.0
        %1161 = vmatpush2.xpose.msra.mxu0 0.0
        %1162 = vmatprep.subr.mxu0 0.0
        %1163 = vmatpush2.xpose.msra.mxu0 0.0
        %1164 = vmatprep.subr.mxu0 0.0
        %1165 = vmatpush2.xpose.msra.mxu0 0.0
        %1166 = vmatprep.subr.mxu0 0.0
        %1167 = vmatpush2.xpose.msra.mxu0 0.0
        %1168 = vmatprep.subr.mxu0 0.0
        %1169 = vmatpush2.xpose.msra.mxu0 0.0
        %1170 = vmatprep.subr.mxu0 0.0
        %1171 = vmatpush2.xpose.msra.mxu0 0.0
        %1172 = vmatprep.subr.mxu0 0.0
        %1173 = vmatpush2.xpose.msra.mxu0 0.0
        %1174 = vmatprep.mubr.f32.mxu0 0.0
        %1175 = vmatmul.mubr.f32.gmra.mxu0 %v1104
        %v1176 = vpop.f32.mrf.mxu0
        %v1177 = vadd.f32 %v1097, %v1176
        %v1178 = vpop.f32.mrf.mxu0
        %1179 = vdwg.mxu0
        %v1180 = vadd.f32 %v1177, %v683
        %v1181 = vmul.f32 %v1180, 0.35355338
        %v1182 = vsel %vm896, %v1181, -inf
        %1183 = vmax.xlane.f32.xlu0 %v1182
        %v1184 = vpop.xlane.xlu0 %1183
        %v1185 = vsub.f32 %v1181, %v1184
        %v1186 = vmul.f32 %v1185, 1.442695
        %v1187 = vpow.pop %v1186
        %v1188 = vsel %vm896, %v1187, 0.0
        %1189 = vadd.xlane.f32.xlu0 %v1188
        %v1190 = vpop.xlane.xlu0 %1189
        %v1191 = vrcp.pop %v1190
        %1194 = vrot.lane.b32.xlu0 %v657, 120
        %v1195 = vpop.permute.xlu0 %1194
        %1196 = vrot.lane.b32.xlu0 %v662, 120
        %v1197 = vpop.permute.xlu0 %1196
        %v1201 = vsel %vm896, %v1187, 0
        %1203 = vmatprep.subr.mxu0 0.0
        %1204 = vmatpush1.msra.mxu0 0.0
        %1205 = vmatprep.subr.mxu0 0.0
        %1206 = vmatpush1.msra.mxu0 0.0
        %1207 = vmatprep.subr.mxu0 0.0
        %1208 = vmatpush1.msra.mxu0 0.0
        %1209 = vmatprep.subr.mxu0 0.0
        %1210 = vmatpush1.msra.mxu0 0.0
        %1211 = vmatprep.subr.mxu0 0.0
        %1212 = vmatpush1.msra.mxu0 0.0
        %1213 = vmatprep.subr.mxu0 0.0
        %1214 = vmatpush1.msra.mxu0 0.0
        %1215 = vmatprep.subr.mxu0 0.0
        %1216 = vmatpush1.msra.mxu0 0.0
        %1217 = vmatprep.subr.mxu0 0.0
        %1218 = vmatpush1.msra.mxu0 0.0
        %1219 = vmatprep.subr.mxu0 0.0
        %1220 = vmatpush1.msra.mxu0 0.0
        %1221 = vmatprep.subr.mxu0 0.0
        %1222 = vmatpush1.msra.mxu0 0.0
        %1223 = vmatprep.subr.mxu0 0.0
        %1224 = vmatpush1.msra.mxu0 0.0
        %1225 = vmatprep.subr.mxu0 0.0
        %1226 = vmatpush1.msra.mxu0 0.0
        %1227 = vmatprep.subr.mxu0 0.0
        %1228 = vmatpush1.msra.mxu0 0.0
        %1229 = vmatprep.subr.mxu0 0.0
        %1230 = vmatpush1.msra.mxu0 0.0
        %1231 = vmatprep.subr.mxu0 0.0
        %1232 = vmatpush1.msra.mxu0 %v1197
        %1233 = vmatprep.subr.mxu0 0.0
        %1234 = vmatpush1.msra.mxu0 %v1195
        %1235 = vmatprep.subr.mxu0 0.0
        %1236 = vmatpush2.msra.mxu0 0.0
        %1237 = vmatprep.subr.mxu0 0.0
        %1238 = vmatpush2.msra.mxu0 0.0
        %1239 = vmatprep.subr.mxu0 0.0
        %1240 = vmatpush2.msra.mxu0 0.0
        %1241 = vmatprep.subr.mxu0 0.0
        %1242 = vmatpush2.msra.mxu0 0.0
        %1243 = vmatprep.subr.mxu0 0.0
        %1244 = vmatpush2.msra.mxu0 0.0
        %1245 = vmatprep.subr.mxu0 0.0
        %1246 = vmatpush2.msra.mxu0 0.0
        %1247 = vmatprep.subr.mxu0 0.0
        %1248 = vmatpush2.msra.mxu0 0.0
        %1249 = vmatprep.subr.mxu0 0.0
        %1250 = vmatpush2.msra.mxu0 0.0
        %1251 = vmatprep.subr.mxu0 0.0
        %1252 = vmatpush2.msra.mxu0 0.0
        %1253 = vmatprep.subr.mxu0 0.0
        %1254 = vmatpush2.msra.mxu0 0.0
        %1255 = vmatprep.subr.mxu0 0.0
        %1256 = vmatpush2.msra.mxu0 0.0
        %1257 = vmatprep.subr.mxu0 0.0
        %1258 = vmatpush2.msra.mxu0 0.0
        %1259 = vmatprep.subr.mxu0 0.0
        %1260 = vmatpush2.msra.mxu0 0.0
        %1261 = vmatprep.subr.mxu0 0.0
        %1262 = vmatpush2.msra.mxu0 0.0
        %1263 = vmatprep.subr.mxu0 0.0
        %1264 = vmatpush2.msra.mxu0 0.0
        %1265 = vmatprep.subr.mxu0 0.0
        %1266 = vmatpush2.msra.mxu0 0.0
        %1267 = vmatprep.mubr.f32.mxu0 0.0
        %1268 = vmatmul.mubr.f32.gmra.mxu0 %v1201
        %v1269 = vpop.f32.mrf.mxu0
        %v1270 = vadd.f32 0.0, %v1269
        %v1271 = vpop.f32.mrf.mxu0
        %1272 = vdwg.mxu0
        %v1273 = vmul.f32 %v1270, %v1191
        %1274 = vrot.lane.b32.xlu0 %v682, 112
        %v1275 = vpop.permute.xlu0 %1274
        %1276 = vrot.lane.b32.xlu0 %v665, 112
        %v1277 = vpop.permute.xlu0 %1276
        %1278 = vrot.lane.b32.xlu0 %v666, 112
        %v1279 = vpop.permute.xlu0 %1278
        %v1280 = vsel %vm684, %v1275, 0
        %v1282 = vsel %vm684, %v1277, 0
        %v1284 = vsel %vm684, %v1279, 0
        %1286 = vmatprep.subr.mxu0 0.0
        %1287 = vmatpush1.xpose.msra.mxu0 0.0
        %1288 = vmatprep.subr.mxu0 0.0
        %1289 = vmatpush1.xpose.msra.mxu0 0.0
        %1290 = vmatprep.subr.mxu0 0.0
        %1291 = vmatpush1.xpose.msra.mxu0 0.0
        %1292 = vmatprep.subr.mxu0 0.0
        %1293 = vmatpush1.xpose.msra.mxu0 0.0
        %1294 = vmatprep.subr.mxu0 0.0
        %1295 = vmatpush1.xpose.msra.mxu0 0.0
        %1296 = vmatprep.subr.mxu0 0.0
        %1297 = vmatpush1.xpose.msra.mxu0 0.0
        %1298 = vmatprep.subr.mxu0 0.0
        %1299 = vmatpush1.xpose.msra.mxu0 0.0
        %1300 = vmatprep.subr.mxu0 0.0
        %1301 = vmatpush1.xpose.msra.mxu0 0.0
        %1302 = vmatprep.subr.mxu0 0.0
        %1303 = vmatpush1.xpose.msra.mxu0 0.0
        %1304 = vmatprep.subr.mxu0 0.0
        %1305 = vmatpush1.xpose.msra.mxu0 0.0
        %1306 = vmatprep.subr.mxu0 0.0
        %1307 = vmatpush1.xpose.msra.mxu0 0.0
        %1308 = vmatprep.subr.mxu0 0.0
        %1309 = vmatpush1.xpose.msra.mxu0 0.0
        %1310 = vmatprep.subr.mxu0 0.0
        %1311 = vmatpush1.xpose.msra.mxu0 0.0
        %1312 = vmatprep.subr.mxu0 0.0
        %1313 = vmatpush1.xpose.msra.mxu0 0.0
        %1314 = vmatprep.subr.mxu0 0.0
        %1315 = vmatpush1.xpose.msra.mxu0 %v1284
        %1316 = vmatprep.subr.mxu0 0.0
        %1317 = vmatpush1.xpose.msra.mxu0 %v1282
        %1318 = vmatprep.subr.mxu0 0.0
        %1319 = vmatpush2.xpose.msra.mxu0 0.0
        %1320 = vmatprep.subr.mxu0 0.0
        %1321 = vmatpush2.xpose.msra.mxu0 0.0
        %1322 = vmatprep.subr.mxu0 0.0
        %1323 = vmatpush2.xpose.msra.mxu0 0.0
        %1324 = vmatprep.subr.mxu0 0.0
        %1325 = vmatpush2.xpose.msra.mxu0 0.0
        %1326 = vmatprep.subr.mxu0 0.0
        %1327 = vmatpush2.xpose.msra.mxu0 0.0
        %1328 = vmatprep.subr.mxu0 0.0
        %1329 = vmatpush2.xpose.msra.mxu0 0.0
        %1330 = vmatprep.subr.mxu0 0.0
        %1331 = vmatpush2.xpose.msra.mxu0 0.0
        %1332 = vmatprep.subr.mxu0 0.0
        %1333 = vmatpush2.xpose.msra.mxu0 0.0
        %1334 = vmatprep.subr.mxu0 0.0
        %1335 = vmatpush2.xpose.msra.mxu0 0.0
        %1336 = vmatprep.subr.mxu0 0.0
        %1337 = vmatpush2.xpose.msra.mxu0 0.0
        %1338 = vmatprep.subr.mxu0 0.0
        %1339 = vmatpush2.xpose.msra.mxu0 0.0
        %1340 = vmatprep.subr.mxu0 0.0
        %1341 = vmatpush2.xpose.msra.mxu0 0.0
        %1342 = vmatprep.subr.mxu0 0.0
        %1343 = vmatpush2.xpose.msra.mxu0 0.0
        %1344 = vmatprep.subr.mxu0 0.0
        %1345 = vmatpush2.xpose.msra.mxu0 0.0
        %1346 = vmatprep.subr.mxu0 0.0
        %1347 = vmatpush2.xpose.msra.mxu0 0.0
        %1348 = vmatprep.subr.mxu0 0.0
        %1349 = vmatpush2.xpose.msra.mxu0 0.0
        %1350 = vmatprep.mubr.f32.mxu0 0.0
        %1351 = vmatmul.mubr.f32.gmra.mxu0 %v1280
        %v1352 = vpop.f32.mrf.mxu0
        %v1353 = vadd.f32 0.0, %v1352
        %v1354 = vpop.f32.mrf.mxu0
        %1355 = vdwg.mxu0
        %v1357 = vrot.slane %v1353, 1
        %v1359 = vsel %vm767, %v1357, 0.0
        %1360 = vrot.lane.b32.xlu0 %v1353, 1
        %v1361 = vpop.permute.xlu0 %1360
        %1364 = vrot.lane.b32.xlu0 %v1359, 18
        %v1365 = vpop.permute.xlu0 %1364
        %v1367 = vsel %vm776, 0.0, %v1361
        %v1368 = vsel %vm778, %v1367, 0.0
        %v1369 = vsel %vm780, %v1368, %v1365
        %v1370 = vsel %vm782, %v1369, 0.0
        %1372 = vrot.lane.b32.xlu0 %v1370, 127
        %v1373 = vpop.permute.xlu0 %1372
        %v1375 = vsel %vm792, %v1373, %v1370
        %1377 = vrot.lane.b32.xlu0 %v1375, 126
        %v1378 = vpop.permute.xlu0 %1377
        %v1380 = vsel %vm799, %v1378, %v1375
        %1382 = vrot.lane.b32.xlu0 %v1380, 124
        %v1383 = vpop.permute.xlu0 %1382
        %v1385 = vsel %vm806, %v1383, %v1380
        %1387 = vrot.lane.b32.xlu0 %v1385, 120
        %v1388 = vpop.permute.xlu0 %1387
        %v1390 = vsel %vm813, %v1388, %v1385
        %1391 = vrot.lane.b32.xlu0 %v674, 112
        %v1392 = vpop.permute.xlu0 %1391
        %1393 = vrot.lane.b32.xlu0 %v578, 112
        %v1394 = vpop.permute.xlu0 %1393
        %1395 = vrot.lane.b32.xlu0 %v583, 112
        %v1396 = vpop.permute.xlu0 %1395
        %v1397 = vsel %vm684, %v1392, 0
        %v1399 = vsel %vm684, %v1394, 0
        %v1401 = vsel %vm684, %v1396, 0
        %1403 = vmatprep.subr.mxu0 0.0
        %1404 = vmatpush1.xpose.msra.mxu0 0.0
        %1405 = vmatprep.subr.mxu0 0.0
        %1406 = vmatpush1.xpose.msra.mxu0 0.0
        %1407 = vmatprep.subr.mxu0 0.0
        %1408 = vmatpush1.xpose.msra.mxu0 0.0
        %1409 = vmatprep.subr.mxu0 0.0
        %1410 = vmatpush1.xpose.msra.mxu0 0.0
        %1411 = vmatprep.subr.mxu0 0.0
        %1412 = vmatpush1.xpose.msra.mxu0 0.0
        %1413 = vmatprep.subr.mxu0 0.0
        %1414 = vmatpush1.xpose.msra.mxu0 0.0
        %1415 = vmatprep.subr.mxu0 0.0
        %1416 = vmatpush1.xpose.msra.mxu0 0.0
        %1417 = vmatprep.subr.mxu0 0.0
        %1418 = vmatpush1.xpose.msra.mxu0 0.0
        %1419 = vmatprep.subr.mxu0 0.0
        %1420 = vmatpush1.xpose.msra.mxu0 0.0
        %1421 = vmatprep.subr.mxu0 0.0
        %1422 = vmatpush1.xpose.msra.mxu0 0.0
        %1423 = vmatprep.subr.mxu0 0.0
        %1424 = vmatpush1.xpose.msra.mxu0 0.0
        %1425 = vmatprep.subr.mxu0 0.0
        %1426 = vmatpush1.xpose.msra.mxu0 0.0
        %1427 = vmatprep.subr.mxu0 0.0
        %1428 = vmatpush1.xpose.msra.mxu0 0.0
        %1429 = vmatprep.subr.mxu0 0.0
        %1430 = vmatpush1.xpose.msra.mxu0 0.0
        %1431 = vmatprep.subr.mxu0 0.0
        %1432 = vmatpush1.xpose.msra.mxu0 %v1401
        %1433 = vmatprep.subr.mxu0 0.0
        %1434 = vmatpush1.xpose.msra.mxu0 %v1399
        %1435 = vmatprep.subr.mxu0 0.0
        %1436 = vmatpush2.xpose.msra.mxu0 0.0
        %1437 = vmatprep.subr.mxu0 0.0
        %1438 = vmatpush2.xpose.msra.mxu0 0.0
        %1439 = vmatprep.subr.mxu0 0.0
        %1440 = vmatpush2.xpose.msra.mxu0 0.0
        %1441 = vmatprep.subr.mxu0 0.0
        %1442 = vmatpush2.xpose.msra.mxu0 0.0
        %1443 = vmatprep.subr.mxu0 0.0
        %1444 = vmatpush2.xpose.msra.mxu0 0.0
        %1445 = vmatprep.subr.mxu0 0.0
        %1446 = vmatpush2.xpose.msra.mxu0 0.0
        %1447 = vmatprep.subr.mxu0 0.0
        %1448 = vmatpush2.xpose.msra.mxu0 0.0
        %1449 = vmatprep.subr.mxu0 0.0
        %1450 = vmatpush2.xpose.msra.mxu0 0.0
        %1451 = vmatprep.subr.mxu0 0.0
        %1452 = vmatpush2.xpose.msra.mxu0 0.0
        %1453 = vmatprep.subr.mxu0 0.0
        %1454 = vmatpush2.xpose.msra.mxu0 0.0
        %1455 = vmatprep.subr.mxu0 0.0
        %1456 = vmatpush2.xpose.msra.mxu0 0.0
        %1457 = vmatprep.subr.mxu0 0.0
        %1458 = vmatpush2.xpose.msra.mxu0 0.0
        %1459 = vmatprep.subr.mxu0 0.0
        %1460 = vmatpush2.xpose.msra.mxu0 0.0
        %1461 = vmatprep.subr.mxu0 0.0
        %1462 = vmatpush2.xpose.msra.mxu0 0.0
        %1463 = vmatprep.subr.mxu0 0.0
        %1464 = vmatpush2.xpose.msra.mxu0 0.0
        %1465 = vmatprep.subr.mxu0 0.0
        %1466 = vmatpush2.xpose.msra.mxu0 0.0
        %1467 = vmatprep.mubr.f32.mxu0 0.0
        %1468 = vmatmul.mubr.f32.gmra.mxu0 %v1397
        %v1469 = vpop.f32.mrf.mxu0
        %v1470 = vadd.f32 %v1390, %v1469
        %v1471 = vpop.f32.mrf.mxu0
        %1472 = vdwg.mxu0
        %v1473 = vadd.f32 %v1470, %v683
        %v1474 = vmul.f32 %v1473, 0.35355338
        %v1475 = vsel %vm896, %v1474, -inf
        %1476 = vmax.xlane.f32.xlu0 %v1475
        %v1477 = vpop.xlane.xlu0 %1476
        %v1478 = vsub.f32 %v1474, %v1477
        %v1479 = vmul.f32 %v1478, 1.442695
        %v1480 = vpow.pop %v1479
        %v1481 = vsel %vm896, %v1480, 0.0
        %1482 = vadd.xlane.f32.xlu0 %v1481
        %v1483 = vpop.xlane.xlu0 %1482
        %v1484 = vrcp.pop %v1483
        %1485 = vrot.lane.b32.xlu0 %v657, 112
        %v1486 = vpop.permute.xlu0 %1485
        %1487 = vrot.lane.b32.xlu0 %v662, 112
        %v1488 = vpop.permute.xlu0 %1487
        %v1492 = vsel %vm896, %v1480, 0
        %1494 = vmatprep.subr.mxu0 0.0
        %1495 = vmatpush1.msra.mxu0 0.0
        %1496 = vmatprep.subr.mxu0 0.0
        %1497 = vmatpush1.msra.mxu0 0.0
        %1498 = vmatprep.subr.mxu0 0.0
        %1499 = vmatpush1.msra.mxu0 0.0
        %1500 = vmatprep.subr.mxu0 0.0
        %1501 = vmatpush1.msra.mxu0 0.0
        %1502 = vmatprep.subr.mxu0 0.0
        %1503 = vmatpush1.msra.mxu0 0.0
        %1504 = vmatprep.subr.mxu0 0.0
        %1505 = vmatpush1.msra.mxu0 0.0
        %1506 = vmatprep.subr.mxu0 0.0
        %1507 = vmatpush1.msra.mxu0 0.0
        %1508 = vmatprep.subr.mxu0 0.0
        %1509 = vmatpush1.msra.mxu0 0.0
        %1510 = vmatprep.subr.mxu0 0.0
        %1511 = vmatpush1.msra.mxu0 0.0
        %1512 = vmatprep.subr.mxu0 0.0
        %1513 = vmatpush1.msra.mxu0 0.0
        %1514 = vmatprep.subr.mxu0 0.0
        %1515 = vmatpush1.msra.mxu0 0.0
        %1516 = vmatprep.subr.mxu0 0.0
        %1517 = vmatpush1.msra.mxu0 0.0
        %1518 = vmatprep.subr.mxu0 0.0
        %1519 = vmatpush1.msra.mxu0 0.0
        %1520 = vmatprep.subr.mxu0 0.0
        %1521 = vmatpush1.msra.mxu0 0.0
        %1522 = vmatprep.subr.mxu0 0.0
        %1523 = vmatpush1.msra.mxu0 %v1488
        %1524 = vmatprep.subr.mxu0 0.0
        %1525 = vmatpush1.msra.mxu0 %v1486
        %1526 = vmatprep.subr.mxu0 0.0
        %1527 = vmatpush2.msra.mxu0 0.0
        %1528 = vmatprep.subr.mxu0 0.0
        %1529 = vmatpush2.msra.mxu0 0.0
        %1530 = vmatprep.subr.mxu0 0.0
        %1531 = vmatpush2.msra.mxu0 0.0
        %1532 = vmatprep.subr.mxu0 0.0
        %1533 = vmatpush2.msra.mxu0 0.0
        %1534 = vmatprep.subr.mxu0 0.0
        %1535 = vmatpush2.msra.mxu0 0.0
        %1536 = vmatprep.subr.mxu0 0.0
        %1537 = vmatpush2.msra.mxu0 0.0
        %1538 = vmatprep.subr.mxu0 0.0
        %1539 = vmatpush2.msra.mxu0 0.0
        %1540 = vmatprep.subr.mxu0 0.0
        %1541 = vmatpush2.msra.mxu0 0.0
        %1542 = vmatprep.subr.mxu0 0.0
        %1543 = vmatpush2.msra.mxu0 0.0
        %1544 = vmatprep.subr.mxu0 0.0
        %1545 = vmatpush2.msra.mxu0 0.0
        %1546 = vmatprep.subr.mxu0 0.0
        %1547 = vmatpush2.msra.mxu0 0.0
        %1548 = vmatprep.subr.mxu0 0.0
        %1549 = vmatpush2.msra.mxu0 0.0
        %1550 = vmatprep.subr.mxu0 0.0
        %1551 = vmatpush2.msra.mxu0 0.0
        %1552 = vmatprep.subr.mxu0 0.0
        %1553 = vmatpush2.msra.mxu0 0.0
        %1554 = vmatprep.subr.mxu0 0.0
        %1555 = vmatpush2.msra.mxu0 0.0
        %1556 = vmatprep.subr.mxu0 0.0
        %1557 = vmatpush2.msra.mxu0 0.0
        %1558 = vmatprep.mubr.f32.mxu0 0.0
        %1559 = vmatmul.mubr.f32.gmra.mxu0 %v1492
        %v1560 = vpop.f32.mrf.mxu0
        %v1561 = vadd.f32 0.0, %v1560
        %v1562 = vpop.f32.mrf.mxu0
        %1563 = vdwg.mxu0
        %v1564 = vmul.f32 %v1561, %v1484
        %1565 = vrot.lane.b32.xlu0 %v682, 104
        %v1566 = vpop.permute.xlu0 %1565
        %1567 = vrot.lane.b32.xlu0 %v665, 104
        %v1568 = vpop.permute.xlu0 %1567
        %1569 = vrot.lane.b32.xlu0 %v666, 104
        %v1570 = vpop.permute.xlu0 %1569
        %v1571 = vsel %vm684, %v1566, 0
        %v1573 = vsel %vm684, %v1568, 0
        %v1575 = vsel %vm684, %v1570, 0
        %1577 = vmatprep.subr.mxu0 0.0
        %1578 = vmatpush1.xpose.msra.mxu0 0.0
        %1579 = vmatprep.subr.mxu0 0.0
        %1580 = vmatpush1.xpose.msra.mxu0 0.0
        %1581 = vmatprep.subr.mxu0 0.0
        %1582 = vmatpush1.xpose.msra.mxu0 0.0
        %1583 = vmatprep.subr.mxu0 0.0
        %1584 = vmatpush1.xpose.msra.mxu0 0.0
        %1585 = vmatprep.subr.mxu0 0.0
        %1586 = vmatpush1.xpose.msra.mxu0 0.0
        %1587 = vmatprep.subr.mxu0 0.0
        %1588 = vmatpush1.xpose.msra.mxu0 0.0
        %1589 = vmatprep.subr.mxu0 0.0
        %1590 = vmatpush1.xpose.msra.mxu0 0.0
        %1591 = vmatprep.subr.mxu0 0.0
        %1592 = vmatpush1.xpose.msra.mxu0 0.0
        %1593 = vmatprep.subr.mxu0 0.0
        %1594 = vmatpush1.xpose.msra.mxu0 0.0
        %1595 = vmatprep.subr.mxu0 0.0
        %1596 = vmatpush1.xpose.msra.mxu0 0.0
        %1597 = vmatprep.subr.mxu0 0.0
        %1598 = vmatpush1.xpose.msra.mxu0 0.0
        %1599 = vmatprep.subr.mxu0 0.0
        %1600 = vmatpush1.xpose.msra.mxu0 0.0
        %1601 = vmatprep.subr.mxu0 0.0
        %1602 = vmatpush1.xpose.msra.mxu0 0.0
        %1603 = vmatprep.subr.mxu0 0.0
        %1604 = vmatpush1.xpose.msra.mxu0 0.0
        %1605 = vmatprep.subr.mxu0 0.0
        %1606 = vmatpush1.xpose.msra.mxu0 %v1575
        %1607 = vmatprep.subr.mxu0 0.0
        %1608 = vmatpush1.xpose.msra.mxu0 %v1573
        %1609 = vmatprep.subr.mxu0 0.0
        %1610 = vmatpush2.xpose.msra.mxu0 0.0
        %1611 = vmatprep.subr.mxu0 0.0
        %1612 = vmatpush2.xpose.msra.mxu0 0.0
        %1613 = vmatprep.subr.mxu0 0.0
        %1614 = vmatpush2.xpose.msra.mxu0 0.0
        %1615 = vmatprep.subr.mxu0 0.0
        %1616 = vmatpush2.xpose.msra.mxu0 0.0
        %1617 = vmatprep.subr.mxu0 0.0
        %1618 = vmatpush2.xpose.msra.mxu0 0.0
        %1619 = vmatprep.subr.mxu0 0.0
        %1620 = vmatpush2.xpose.msra.mxu0 0.0
        %1621 = vmatprep.subr.mxu0 0.0
        %1622 = vmatpush2.xpose.msra.mxu0 0.0
        %1623 = vmatprep.subr.mxu0 0.0
        %1624 = vmatpush2.xpose.msra.mxu0 0.0
        %1625 = vmatprep.subr.mxu0 0.0
        %1626 = vmatpush2.xpose.msra.mxu0 0.0
        %1627 = vmatprep.subr.mxu0 0.0
        %1628 = vmatpush2.xpose.msra.mxu0 0.0
        %1629 = vmatprep.subr.mxu0 0.0
        %1630 = vmatpush2.xpose.msra.mxu0 0.0
        %1631 = vmatprep.subr.mxu0 0.0
        %1632 = vmatpush2.xpose.msra.mxu0 0.0
        %1633 = vmatprep.subr.mxu0 0.0
        %1634 = vmatpush2.xpose.msra.mxu0 0.0
        %1635 = vmatprep.subr.mxu0 0.0
        %1636 = vmatpush2.xpose.msra.mxu0 0.0
        %1637 = vmatprep.subr.mxu0 0.0
        %1638 = vmatpush2.xpose.msra.mxu0 0.0
        %1639 = vmatprep.subr.mxu0 0.0
        %1640 = vmatpush2.xpose.msra.mxu0 0.0
        %1641 = vmatprep.mubr.f32.mxu0 0.0
        %1642 = vmatmul.mubr.f32.gmra.mxu0 %v1571
        %v1643 = vpop.f32.mrf.mxu0
        %v1644 = vadd.f32 0.0, %v1643
        %v1645 = vpop.f32.mrf.mxu0
        %1646 = vdwg.mxu0
        %v1648 = vrot.slane %v1644, 1
        %v1650 = vsel %vm767, %v1648, 0.0
        %1651 = vrot.lane.b32.xlu0 %v1644, 1
        %v1652 = vpop.permute.xlu0 %1651
        %1655 = vrot.lane.b32.xlu0 %v1650, 18
        %v1656 = vpop.permute.xlu0 %1655
        %v1658 = vsel %vm776, 0.0, %v1652
        %v1659 = vsel %vm778, %v1658, 0.0
        %v1660 = vsel %vm780, %v1659, %v1656
        %v1661 = vsel %vm782, %v1660, 0.0
        %1663 = vrot.lane.b32.xlu0 %v1661, 127
        %v1664 = vpop.permute.xlu0 %1663
        %v1666 = vsel %vm792, %v1664, %v1661
        %1668 = vrot.lane.b32.xlu0 %v1666, 126
        %v1669 = vpop.permute.xlu0 %1668
        %v1671 = vsel %vm799, %v1669, %v1666
        %1673 = vrot.lane.b32.xlu0 %v1671, 124
        %v1674 = vpop.permute.xlu0 %1673
        %v1676 = vsel %vm806, %v1674, %v1671
        %1678 = vrot.lane.b32.xlu0 %v1676, 120
        %v1679 = vpop.permute.xlu0 %1678
        %v1681 = vsel %vm813, %v1679, %v1676
        %1682 = vrot.lane.b32.xlu0 %v674, 104
        %v1683 = vpop.permute.xlu0 %1682
        %1684 = vrot.lane.b32.xlu0 %v578, 104
        %v1685 = vpop.permute.xlu0 %1684
        %1686 = vrot.lane.b32.xlu0 %v583, 104
        %v1687 = vpop.permute.xlu0 %1686
        %v1688 = vsel %vm684, %v1683, 0
        %v1690 = vsel %vm684, %v1685, 0
        %v1692 = vsel %vm684, %v1687, 0
        %1694 = vmatprep.subr.mxu0 0.0
        %1695 = vmatpush1.xpose.msra.mxu0 0.0
        %1696 = vmatprep.subr.mxu0 0.0
        %1697 = vmatpush1.xpose.msra.mxu0 0.0
        %1698 = vmatprep.subr.mxu0 0.0
        %1699 = vmatpush1.xpose.msra.mxu0 0.0
        %1700 = vmatprep.subr.mxu0 0.0
        %1701 = vmatpush1.xpose.msra.mxu0 0.0
        %1702 = vmatprep.subr.mxu0 0.0
        %1703 = vmatpush1.xpose.msra.mxu0 0.0
        %1704 = vmatprep.subr.mxu0 0.0
        %1705 = vmatpush1.xpose.msra.mxu0 0.0
        %1706 = vmatprep.subr.mxu0 0.0
        %1707 = vmatpush1.xpose.msra.mxu0 0.0
        %1708 = vmatprep.subr.mxu0 0.0
        %1709 = vmatpush1.xpose.msra.mxu0 0.0
        %1710 = vmatprep.subr.mxu0 0.0
        %1711 = vmatpush1.xpose.msra.mxu0 0.0
        %1712 = vmatprep.subr.mxu0 0.0
        %1713 = vmatpush1.xpose.msra.mxu0 0.0
        %1714 = vmatprep.subr.mxu0 0.0
        %1715 = vmatpush1.xpose.msra.mxu0 0.0
        %1716 = vmatprep.subr.mxu0 0.0
        %1717 = vmatpush1.xpose.msra.mxu0 0.0
        %1718 = vmatprep.subr.mxu0 0.0
        %1719 = vmatpush1.xpose.msra.mxu0 0.0
        %1720 = vmatprep.subr.mxu0 0.0
        %1721 = vmatpush1.xpose.msra.mxu0 0.0
        %1722 = vmatprep.subr.mxu0 0.0
        %1723 = vmatpush1.xpose.msra.mxu0 %v1692
        %1724 = vmatprep.subr.mxu0 0.0
        %1725 = vmatpush1.xpose.msra.mxu0 %v1690
        %1726 = vmatprep.subr.mxu0 0.0
        %1727 = vmatpush2.xpose.msra.mxu0 0.0
        %1728 = vmatprep.subr.mxu0 0.0
        %1729 = vmatpush2.xpose.msra.mxu0 0.0
        %1730 = vmatprep.subr.mxu0 0.0
        %1731 = vmatpush2.xpose.msra.mxu0 0.0
        %1732 = vmatprep.subr.mxu0 0.0
        %1733 = vmatpush2.xpose.msra.mxu0 0.0
        %1734 = vmatprep.subr.mxu0 0.0
        %1735 = vmatpush2.xpose.msra.mxu0 0.0
        %1736 = vmatprep.subr.mxu0 0.0
        %1737 = vmatpush2.xpose.msra.mxu0 0.0
        %1738 = vmatprep.subr.mxu0 0.0
        %1739 = vmatpush2.xpose.msra.mxu0 0.0
        %1740 = vmatprep.subr.mxu0 0.0
        %1741 = vmatpush2.xpose.msra.mxu0 0.0
        %1742 = vmatprep.subr.mxu0 0.0
        %1743 = vmatpush2.xpose.msra.mxu0 0.0
        %1744 = vmatprep.subr.mxu0 0.0
        %1745 = vmatpush2.xpose.msra.mxu0 0.0
        %1746 = vmatprep.subr.mxu0 0.0
        %1747 = vmatpush2.xpose.msra.mxu0 0.0
        %1748 = vmatprep.subr.mxu0 0.0
        %1749 = vmatpush2.xpose.msra.mxu0 0.0
        %1750 = vmatprep.subr.mxu0 0.0
        %1751 = vmatpush2.xpose.msra.mxu0 0.0
        %1752 = vmatprep.subr.mxu0 0.0
        %1753 = vmatpush2.xpose.msra.mxu0 0.0
        %1754 = vmatprep.subr.mxu0 0.0
        %1755 = vmatpush2.xpose.msra.mxu0 0.0
        %1756 = vmatprep.subr.mxu0 0.0
        %1757 = vmatpush2.xpose.msra.mxu0 0.0
        %1758 = vmatprep.mubr.f32.mxu0 0.0
        %1759 = vmatmul.mubr.f32.gmra.mxu0 %v1688
        %v1760 = vpop.f32.mrf.mxu0
        %v1761 = vadd.f32 %v1681, %v1760
        %v1762 = vpop.f32.mrf.mxu0
        %1763 = vdwg.mxu0
        %v1764 = vadd.f32 %v1761, %v683
        %v1765 = vmul.f32 %v1764, 0.35355338
        %v1766 = vsel %vm896, %v1765, -inf
        %1767 = vmax.xlane.f32.xlu0 %v1766
        %v1768 = vpop.xlane.xlu0 %1767
        %v1769 = vsub.f32 %v1765, %v1768
        %v1770 = vmul.f32 %v1769, 1.442695
        %v1771 = vpow.pop %v1770
        %v1772 = vsel %vm896, %v1771, 0.0
        %1773 = vadd.xlane.f32.xlu0 %v1772
        %v1774 = vpop.xlane.xlu0 %1773
        %v1775 = vrcp.pop %v1774
        %1776 = vrot.lane.b32.xlu0 %v657, 104
        %v1777 = vpop.permute.xlu0 %1776
        %1778 = vrot.lane.b32.xlu0 %v662, 104
        %v1779 = vpop.permute.xlu0 %1778
        %v1783 = vsel %vm896, %v1771, 0
        %1785 = vmatprep.subr.mxu0 0.0
        %1786 = vmatpush1.msra.mxu0 0.0
        %1787 = vmatprep.subr.mxu0 0.0
        %1788 = vmatpush1.msra.mxu0 0.0
        %1789 = vmatprep.subr.mxu0 0.0
        %1790 = vmatpush1.msra.mxu0 0.0
        %1791 = vmatprep.subr.mxu0 0.0
        %1792 = vmatpush1.msra.mxu0 0.0
        %1793 = vmatprep.subr.mxu0 0.0
        %1794 = vmatpush1.msra.mxu0 0.0
        %1795 = vmatprep.subr.mxu0 0.0
        %1796 = vmatpush1.msra.mxu0 0.0
        %1797 = vmatprep.subr.mxu0 0.0
        %1798 = vmatpush1.msra.mxu0 0.0
        %1799 = vmatprep.subr.mxu0 0.0
        %1800 = vmatpush1.msra.mxu0 0.0
        %1801 = vmatprep.subr.mxu0 0.0
        %1802 = vmatpush1.msra.mxu0 0.0
        %1803 = vmatprep.subr.mxu0 0.0
        %1804 = vmatpush1.msra.mxu0 0.0
        %1805 = vmatprep.subr.mxu0 0.0
        %1806 = vmatpush1.msra.mxu0 0.0
        %1807 = vmatprep.subr.mxu0 0.0
        %1808 = vmatpush1.msra.mxu0 0.0
        %1809 = vmatprep.subr.mxu0 0.0
        %1810 = vmatpush1.msra.mxu0 0.0
        %1811 = vmatprep.subr.mxu0 0.0
        %1812 = vmatpush1.msra.mxu0 0.0
        %1813 = vmatprep.subr.mxu0 0.0
        %1814 = vmatpush1.msra.mxu0 %v1779
        %1815 = vmatprep.subr.mxu0 0.0
        %1816 = vmatpush1.msra.mxu0 %v1777
        %1817 = vmatprep.subr.mxu0 0.0
        %1818 = vmatpush2.msra.mxu0 0.0
        %1819 = vmatprep.subr.mxu0 0.0
        %1820 = vmatpush2.msra.mxu0 0.0
        %1821 = vmatprep.subr.mxu0 0.0
        %1822 = vmatpush2.msra.mxu0 0.0
        %1823 = vmatprep.subr.mxu0 0.0
        %1824 = vmatpush2.msra.mxu0 0.0
        %1825 = vmatprep.subr.mxu0 0.0
        %1826 = vmatpush2.msra.mxu0 0.0
        %1827 = vmatprep.subr.mxu0 0.0
        %1828 = vmatpush2.msra.mxu0 0.0
        %1829 = vmatprep.subr.mxu0 0.0
        %1830 = vmatpush2.msra.mxu0 0.0
        %1831 = vmatprep.subr.mxu0 0.0
        %1832 = vmatpush2.msra.mxu0 0.0
        %1833 = vmatprep.subr.mxu0 0.0
        %1834 = vmatpush2.msra.mxu0 0.0
        %1835 = vmatprep.subr.mxu0 0.0
        %1836 = vmatpush2.msra.mxu0 0.0
        %1837 = vmatprep.subr.mxu0 0.0
        %1838 = vmatpush2.msra.mxu0 0.0
        %1839 = vmatprep.subr.mxu0 0.0
        %1840 = vmatpush2.msra.mxu0 0.0
        %1841 = vmatprep.subr.mxu0 0.0
        %1842 = vmatpush2.msra.mxu0 0.0
        %1843 = vmatprep.subr.mxu0 0.0
        %1844 = vmatpush2.msra.mxu0 0.0
        %1845 = vmatprep.subr.mxu0 0.0
        %1846 = vmatpush2.msra.mxu0 0.0
        %1847 = vmatprep.subr.mxu0 0.0
        %1848 = vmatpush2.msra.mxu0 0.0
        %1849 = vmatprep.mubr.f32.mxu0 0.0
        %1850 = vmatmul.mubr.f32.gmra.mxu0 %v1783
        %v1851 = vpop.f32.mrf.mxu0
        %v1852 = vadd.f32 0.0, %v1851
        %v1853 = vpop.f32.mrf.mxu0
        %1854 = vdwg.mxu0
        %v1855 = vmul.f32 %v1852, %v1775
        %1857 = vrot.lane.b32.xlu0 %v1273, 8
        %v1858 = vpop.permute.xlu0 %1857
        %1861 = vrot.lane.b32.xlu0 %v1564, 16
        %v1862 = vpop.permute.xlu0 %1861
        %1865 = vrot.lane.b32.xlu0 %v1855, 24
        %v1866 = vpop.permute.xlu0 %1865
        %v1868 = vsel %vm684, %v980, %v1858
        %v1869 = vsel %vm896, %v1868, %v1862
        %v1870 = vsel %vm782, %v1869, %v1866
        %v1871 = vld [vmem:[#allocation11] sm:$0xff]
        %v1872 = vld [vmem:[#allocation11 + $0x8] sm:$0xff]
        %v1873 = vld [vmem:[#allocation11 + $0x10] sm:$0xff]
        %v1874 = vld [vmem:[#allocation11 + $0x18] sm:$0xff]
        %v1876 = vsel %vm430, %v1870, 0
        %1878 = vmatprep.subr.mxu0 0.0
        %1879 = vmatpush1.msra.mxu0 0.0
        %1880 = vmatprep.subr.mxu0 0.0
        %1881 = vmatpush1.msra.mxu0 0.0
        %1882 = vmatprep.subr.mxu0 0.0
        %1883 = vmatpush1.msra.mxu0 0.0
        %1884 = vmatprep.subr.mxu0 0.0
        %1885 = vmatpush1.msra.mxu0 0.0
        %1886 = vmatprep.subr.mxu0 0.0
        %1887 = vmatpush1.msra.mxu0 0.0
        %1888 = vmatprep.subr.mxu0 0.0
        %1889 = vmatpush1.msra.mxu0 0.0
        %1890 = vmatprep.subr.mxu0 0.0
        %1891 = vmatpush1.msra.mxu0 0.0
        %1892 = vmatprep.subr.mxu0 0.0
        %1893 = vmatpush1.msra.mxu0 0.0
        %1894 = vmatprep.subr.mxu0 0.0
        %1895 = vmatpush1.msra.mxu0 0.0
        %1896 = vmatprep.subr.mxu0 0.0
        %1897 = vmatpush1.msra.mxu0 0.0
        %1898 = vmatprep.subr.mxu0 0.0
        %1899 = vmatpush1.msra.mxu0 0.0
        %1900 = vmatprep.subr.mxu0 0.0
        %1901 = vmatpush1.msra.mxu0 0.0
        %1902 = vmatprep.subr.mxu0 0.0
        %1903 = vmatpush1.msra.mxu0 %v1874
        %1904 = vmatprep.subr.mxu0 0.0
        %1905 = vmatpush1.msra.mxu0 %v1873
        %1906 = vmatprep.subr.mxu0 0.0
        %1907 = vmatpush1.msra.mxu0 %v1872
        %1908 = vmatprep.subr.mxu0 0.0
        %1909 = vmatpush1.msra.mxu0 %v1871
        %1910 = vmatprep.subr.mxu0 0.0
        %1911 = vmatpush2.msra.mxu0 0.0
        %1912 = vmatprep.subr.mxu0 0.0
        %1913 = vmatpush2.msra.mxu0 0.0
        %1914 = vmatprep.subr.mxu0 0.0
        %1915 = vmatpush2.msra.mxu0 0.0
        %1916 = vmatprep.subr.mxu0 0.0
        %1917 = vmatpush2.msra.mxu0 0.0
        %1918 = vmatprep.subr.mxu0 0.0
        %1919 = vmatpush2.msra.mxu0 0.0
        %1920 = vmatprep.subr.mxu0 0.0
        %1921 = vmatpush2.msra.mxu0 0.0
        %1922 = vmatprep.subr.mxu0 0.0
        %1923 = vmatpush2.msra.mxu0 0.0
        %1924 = vmatprep.subr.mxu0 0.0
        %1925 = vmatpush2.msra.mxu0 0.0
        %1926 = vmatprep.subr.mxu0 0.0
        %1927 = vmatpush2.msra.mxu0 0.0
        %1928 = vmatprep.subr.mxu0 0.0
        %1929 = vmatpush2.msra.mxu0 0.0
        %1930 = vmatprep.subr.mxu0 0.0
        %1931 = vmatpush2.msra.mxu0 0.0
        %1932 = vmatprep.subr.mxu0 0.0
        %1933 = vmatpush2.msra.mxu0 0.0
        %1934 = vmatprep.subr.mxu0 0.0
        %1935 = vmatpush2.msra.mxu0 0.0
        %1936 = vmatprep.subr.mxu0 0.0
        %1937 = vmatpush2.msra.mxu0 0.0
        %1938 = vmatprep.subr.mxu0 0.0
        %1939 = vmatpush2.msra.mxu0 0.0
        %1940 = vmatprep.subr.mxu0 0.0
        %1941 = vmatpush2.msra.mxu0 0.0
        %1942 = vmatprep.mubr.f32.mxu0 0.0
        %1943 = vmatmul.mubr.f32.gmra.mxu0 %v1876
        %v1944 = vpop.f32.mrf.mxu0
        %v1945 = vadd.f32 0.0, %v1944
        %v1946 = vpop.f32.mrf.mxu0
        %1947 = vdwg.mxu0
        %1948 = vst.msk [vmem:[%s423] sm:$0xff] %vm430, %v1945
        %s1949 = sand.u32 %s231, 1
        %s1950 = scalar_lea.sflag [#allocation4], %s1949
        %s1951 = sand.u32 %s231, 1
        %s1952 = smul.addr %s1951, 8
        %s1953 = scalar_lea.vmem [#allocation13], %s1952
        // Predicated region
        $region81: #{tpu_custom_call.1} parent=55 // pred_check
          %p1954 = pneg %p241
        $region82: #{tpu_custom_call.1} parent=55 // pred_check_branch
          %1956 = sbr.rel (%p1954) target = $region84
        $region83: #{tpu_custom_call.1} parent=55 // pred_region
          %s1958 = ssub.s32 128, 128
          %1959 = vsyncadd %s1950, %s1958
          %s1960 = smul.addr %s29, 128
          %s1961 = scalar_lea.hbm %s9, %s1960
          %s1963 = sshll.u32 %s1953, 4
          %s1964 = int_to_ptr.vmem [resolvable:$true] %s1963
          %1966 = dma.vmem_to_hbm [thread:$0]  %s1964, 128, %s1961, %s1950
        $region84: #{tpu_custom_call.1} parent=55 // pred_fallthru
          _
      $region56: #{tpu_custom_call.1} parent=5 // pred_fallthru
        _
      %p1967 = scmp.le.s32.totalorder 2, %s24
      // Predicated region
      $region85: #{tpu_custom_call.1} parent=5 // pred_check
        %p1968 = pneg %p1967
      $region86: #{tpu_custom_call.1} parent=5 // pred_check_branch
        %1970 = sbr.rel (%p1968) target = $region88
      $region87: #{tpu_custom_call.1} parent=5 // pred_region
        %s1971 = ssub.s32 %s24, 2
        // Predicated region
        $region89: #{tpu_custom_call.1} parent=87 // pred_check
          %p1972 = pneg %p247
        $region90: #{tpu_custom_call.1} parent=87 // pred_check_branch
          %1974 = sbr.rel (%p1972) target = $region92
        $region91: #{tpu_custom_call.1} parent=87 // pred_region
          %s1975 = sand.u32 %s232, 1
          %s1976 = scalar_lea.sflag [#allocation4], %s1975
          %s1977 = sand.u32 %s232, 1
          %s1978 = smul.addr %s1977, 8
          %s1979 = scalar_lea.vmem [#allocation13], %s1978
          %1980 = dma.done %s1976, 128
        $region92: #{tpu_custom_call.1} parent=87 // pred_fallthru
          _
      $region88: #{tpu_custom_call.1} parent=5 // pred_fallthru
        _
    $region6: #{tpu_custom_call.1} parent=1 // loop_footer
      %s28 = sadd.s32 1, %s24
    $region7: #{tpu_custom_call.1} parent=1 // loop_footer_branch
      %23 = sbr.rel target = $region3
    $region8: #{tpu_custom_call.1} parent=1 // loop_exit
      _
    %1981 = vsyncpa [#allocation3], 1
    %s1982 = scalar_lea.sflag [#allocation3], 1
    %1983 = vsyncpa %s1982, 1
    %1984 = vsyncpa [#allocation6], 1
    %1985 = vsyncpa [#allocation9], 1
    %1986 = vsyncpa [#allocation12], 1
    %1987 = vsyncpa [#allocation4], 1
    %s1988 = scalar_lea.sflag [#allocation4], 1
    %1989 = vsyncpa %s1988, 1

</llo_original>
